<compile_context>
chip_gen: v7x
topology: tpu7x:2x2x1
jax: 0.10.0
libtpu: 0.0.40
codegen_flags: <defaults>
</compile_context>

<pallas_src>
import functools

import jax
import jax.numpy as jnp
from jax.experimental import pallas as pl
from jax.experimental.pallas import tpu as pltpu


# --------------------------------------------------------------------------
# Fused kernel
# --------------------------------------------------------------------------
def _inception_aux_kernel(x_ref, w0_ref, b0_ref, w1_ref, b1_ref, wfc_ref,
                          o_ref, pool_scr, y_scr, xcol_scr,
                          *, k, s, ho_p, wo_p, kh, kw, ho, wo):
    """Grid = (n_split, n_cout_tiles); axis 0 'parallel', axis 1 'arbitrary'.

    x_ref    : (N, H, W, Cin)  f32    full input, resident across the grid
    w0_ref   : (Cin, C0)       f32    1x1 conv weight with BN scale folded
    b0_ref   : (1, C0)         f32    folded BN bias for conv0
    w1_ref   : (kh*kw*C0, TN)  bf16   conv1 weight tile (BN scale folded)
    b1_ref   : (1, TN)         f32    folded BN bias tile for conv1
    wfc_ref  : (TN, NCLS_PAD)  bf16   fc weight tile (zero-padded to 128 lanes)
    o_ref    : (1, N, NCLS_PAD) f32   per-split partial fc output (accumulator)
    pool_scr : (ho_p*wo_p*N, Cin) f32 pooled activations (position-major rows)
    y_scr    : (ho_p*wo_p*N, C0) bf16 conv0 output (position-major rows)
    xcol_scr : (ho*wo*N, kh*kw*C0) bf16  im2col matrix for conv1
    """
    n = x_ref.shape[0]
    c0 = w0_ref.shape[1]
    t = pl.program_id(1)

    # ---- Stage A (once per core): pool + conv0 + im2col, kept in VMEM -----
    @pl.when(t == 0)
    def _prep():
        # avg_pool2d(kernel=k, stride=s), floor mode, full windows.
        for i in range(ho_p):
            for j in range(wo_p):
                win = x_ref[:, i * s:i * s + k, j * s:j * s + k, :]
                p = i * wo_p + j
                pool_scr[p * n:(p + 1) * n, :] = jnp.mean(
                    win.astype(jnp.float32), axis=(1, 2))

        # conv0: 1x1 conv (Cin -> C0) with folded BN scale, + bias + ReLU.
        y = jnp.dot(pool_scr[...], w0_ref[...],
                    preferred_element_type=jnp.float32)
        y = jnp.maximum(y + b0_ref[...], 0.0)
        y_scr[...] = y.astype(y_scr.dtype)

        # im2col for the kh x kw valid conv1:
        #   xcol[(a*wo+b)*N + nn, (di*kw+dj)*C0 + c] = y[nn, a+di, b+dj, c]
        for a in range(ho):
            for b in range(wo):
                q = a * wo + b
                for di in range(kh):
                    for dj in range(kw):
                        m = di * kw + dj
                        p = (a + di) * wo_p + (b + dj)
                        xcol_scr[q * n:(q + 1) * n, m * c0:(m + 1) * c0] = (
                            y_scr[p * n:(p + 1) * n, :])

    # ---- Stage B (per Cout tile): conv1 + BN + ReLU, spatial mean, fc -----
    zt = jnp.dot(xcol_scr[...], w1_ref[...],
                 preferred_element_type=jnp.float32)          # (ho*wo*N, TN)
    zt = jnp.maximum(zt + b1_ref[...], 0.0)

    # adaptive_avg_pool2d((1,1)): mean over the ho*wo conv1 output positions.
    zm = zt[0:n, :]
    for q in range(1, ho * wo):
        zm = zm + zt[q * n:(q + 1) * n, :]
    zm = zm * (1.0 / (ho * wo))                               # (N, TN)

    # fc partial product for this Cout tile; accumulate across tiles.
    part = jnp.dot(zm.astype(wfc_ref.dtype), wfc_ref[...],
                   preferred_element_type=jnp.float32)        # (N, NCLS_PAD)

    @pl.when(t == 0)
    def _init():
        o_ref[...] = jnp.zeros_like(o_ref)

    o_ref[...] += part[None, :, :]


# --------------------------------------------------------------------------
# Wrapper
# --------------------------------------------------------------------------
@functools.partial(jax.jit, static_argnames=("num_classes",))
def inception_aux_forward(x_nhwc, params, *, num_classes):
    n, h, w, cin = x_nhwc.shape
    k_pool, s_pool = 5, 3
    ho_p = (h - k_pool) // s_pool + 1
    wo_p = (w - k_pool) // s_pool + 1
    kh = kw = 5
    ho, wo = ho_p - kh + 1, wo_p - kw + 1
    assert ho >= 1 and wo >= 1, "input too small for the 5x5 aux conv"

    c0 = params["w0"].shape[1]             # 128
    kdim = kh * kw * c0                    # 3200
    cout1 = params["w1"].shape[1]          # 768
    ncls_pad = params["wfc"].shape[1]      # 128 (lane-padded fc output)

    n_split = 2                            # 'parallel' axis (v7x megacore)
    tn = 128                               # Cout tile width (lane aligned)
    assert cout1 % (n_split * tn) == 0
    kt = cout1 // (n_split * tn)           # 'arbitrary' tiles per split

    kernel = functools.partial(
        _inception_aux_kernel, k=k_pool, s=s_pool, ho_p=ho_p, wo_p=wo_p,
        kh=kh, kw=kw, ho=ho, wo=wo)

    partials = pl.pallas_call(
        kernel,
        out_shape=jax.ShapeDtypeStruct((n_split, n, ncls_pad), jnp.float32),
        grid_spec=pltpu.PrefetchScalarGridSpec(
            num_scalar_prefetch=0,
            grid=(n_split, kt),
            in_specs=[
                pl.BlockSpec((n, h, w, cin), lambda p, t: (0, 0, 0, 0)),
                pl.BlockSpec((cin, c0), lambda p, t: (0, 0)),
                pl.BlockSpec((1, c0), lambda p, t: (0, 0)),
                pl.BlockSpec((kdim, tn), lambda p, t: (0, p * kt + t)),
                pl.BlockSpec((1, tn), lambda p, t: (0, p * kt + t)),
                pl.BlockSpec((tn, ncls_pad), lambda p, t: (p * kt + t, 0)),
            ],
            out_specs=pl.BlockSpec((1, n, ncls_pad), lambda p, t: (p, 0, 0)),
            scratch_shapes=[
                pltpu.VMEM((ho_p * wo_p * n, cin), jnp.float32),
                pltpu.VMEM((ho_p * wo_p * n, c0), jnp.bfloat16),
                pltpu.VMEM((ho * wo * n, kdim), jnp.bfloat16),
            ]),
        compiler_params=pltpu.CompilerParams(
            dimension_semantics=("parallel", "arbitrary")),
    )(x_nhwc, params["w0"], params["b0"], params["w1"], params["b1"],
      params["wfc"])

    # Sum the two core partials, add fc bias, drop the lane padding.
    return partials.sum(axis=0)[:, :num_classes] + params["bfc"]


# --------------------------------------------------------------------------
# Parameter helpers (BN fold, bf16 cast, lane padding)
# --------------------------------------------------------------------------
def fold_bn(gamma, beta, mean, var, eps=1e-3):
    scale = gamma / jnp.sqrt(var + eps)
    bias = beta - mean * scale
    return scale, bias


def build_params(w0_mat, s0, b0, w1_mat, s1, b1, wfc_mat, bfc, *, lane=128):
    """Fold BN scales into conv weights, cast big weights to bf16, and
    zero-pad the fc weight to a lane-dense (multiple of 128) output width."""
    c0 = w0_mat.shape[1]
    c1 = w1_mat.shape[1]
    ncls = wfc_mat.shape[1]
    npad = ((ncls + lane - 1) // lane) * lane
    wfc_pad = jnp.zeros((wfc_mat.shape[0], npad), jnp.float32)
    wfc_pad = wfc_pad.at[:, :ncls].set(wfc_mat)
    return dict(
        w0=(w0_mat * s0[None, :]).astype(jnp.float32),        # (Cin, 128)
        b0=b0.reshape(1, c0).astype(jnp.float32),
        w1=(w1_mat * s1[None, :]).astype(jnp.bfloat16),        # (3200, 768)
        b1=b1.reshape(1, c1).astype(jnp.float32),
        wfc=wfc_pad.astype(jnp.bfloat16),                      # (768, 128)
        bfc=bfc.astype(jnp.float32),
    )


# --------------------------------------------------------------------------
# Deterministic synthetic parameters + run
# --------------------------------------------------------------------------
if __name__ == "__main__":
    in_channels, num_classes = 8, 10
    N, H, W = 2, 17, 17  # standard aux-head spatial size: 17 -> pool -> 5

    key = jax.random.PRNGKey(0)
    ks = jax.random.split(key, 13)

    # input (PyTorch NCHW), transposed to NHWC for the kernel
    x_nchw = jax.random.normal(ks[0], (N, in_channels, H, W), jnp.float32)
    x_nhwc = jnp.transpose(x_nchw, (0, 2, 3, 1))

    # conv0: Conv2d(in_channels, 128, k=1, bias=False) + BN(128)
    w0 = jax.random.normal(ks[1], (128, in_channels, 1, 1), jnp.float32) * 0.1
    g0 = 1.0 + 0.1 * jax.random.normal(ks[2], (128,), jnp.float32)
    be0 = 0.1 * jax.random.normal(ks[3], (128,), jnp.float32)
    m0 = 0.1 * jax.random.normal(ks[4], (128,), jnp.float32)
    v0 = jnp.abs(jax.random.normal(ks[5], (128,), jnp.float32)) + 0.5
    s0, bb0 = fold_bn(g0, be0, m0, v0)
    w0_mat = jnp.transpose(w0[:, :, 0, 0], (1, 0))                    # (Cin, 128)

    # conv1: Conv2d(128, 768, k=5, bias=False, stddev=0.01) + BN(768)
    w1 = jax.random.normal(ks[6], (768, 128, 5, 5), jnp.float32) * 0.01
    g1 = 1.0 + 0.1 * jax.random.normal(ks[7], (768,), jnp.float32)
    be1 = 0.1 * jax.random.normal(ks[8], (768,), jnp.float32)
    m1 = 0.01 * jax.random.normal(ks[9], (768,), jnp.float32)
    v1 = jnp.abs(jax.random.normal(ks[10], (768,), jnp.float32)) + 0.5
    s1, bb1 = fold_bn(g1, be1, m1, v1)
    w1_mat = jnp.transpose(w1, (2, 3, 1, 0)).reshape(5 * 5 * 128, 768)

    # fc: Linear(768, num_classes, stddev=0.001)
    wfc = jax.random.normal(ks[11], (num_classes, 768), jnp.float32) * 0.001
    bfc = 0.001 * jax.random.normal(ks[12], (num_classes,), jnp.float32)
    wfc_mat = jnp.transpose(wfc, (1, 0))                               # (768, C)

    params = build_params(w0_mat, s0, bb0, w1_mat, s1, bb1, wfc_mat, bfc)

    out = inception_aux_forward(x_nhwc, params, num_classes=num_classes)
    out = jax.block_until_ready(out)
    assert out.shape == (N, num_classes) and out.dtype == jnp.float32
    print("KERNEL_OK")
</pallas_src>

<mosaic_0001>
module attributes {stable_mosaic.version = 11 : i64} {
  func.func @_inception_aux_kernel(%arg0: i32, %arg1: i32, %arg2: memref<2x17x17x8xf32, #tpu.memory_space<vmem>>, %arg3: memref<8x128xf32, #tpu.memory_space<vmem>>, %arg4: memref<1x128xf32, #tpu.memory_space<vmem>>, %arg5: memref<3200x128xbf16, #tpu.memory_space<vmem>>, %arg6: memref<1x128xf32, #tpu.memory_space<vmem>>, %arg7: memref<128x128xbf16, #tpu.memory_space<vmem>>, %arg8: memref<1x2x128xf32, #tpu.memory_space<vmem>>, %arg9: memref<50x8xf32, #tpu.memory_space<vmem>>, %arg10: memref<50x128xbf16, #tpu.memory_space<vmem>>, %arg11: memref<2x3200xbf16, #tpu.memory_space<vmem>>) attributes {dimension_semantics = [#tpu.dimension_semantics<parallel>, #tpu.dimension_semantics<arbitrary>], iteration_bounds = array<i64: 2, 3>, scalar_prefetch = 0 : i64, scratch_operands = 3 : i64, tpu.core_type = #tpu.core_type<tc>, window_params = [{pipeline_mode = #tpu.pipeline_mode<synchronous>, transform_indices = @transform_0, window_bounds = array<i64: 2, 17, 17, 8>}, {pipeline_mode = #tpu.pipeline_mode<synchronous>, transform_indices = @transform_1, window_bounds = array<i64: 8, 128>}, {pipeline_mode = #tpu.pipeline_mode<synchronous>, transform_indices = @transform_2, window_bounds = array<i64: 1, 128>}, {transform_indices = @transform_3, window_bounds = array<i64: 3200, 128>}, {transform_indices = @transform_4, window_bounds = array<i64: 1, 128>}, {transform_indices = @transform_5, window_bounds = array<i64: 128, 128>}, {transform_indices = @transform_6, window_bounds = array<i64: 1, 2, 128>}]} {
    %c0_i32 = arith.constant 0 : i32
    %0 = arith.cmpi eq, %arg1, %c0_i32 : i32
    %1 = arith.extui %0 : i1 to i32
    %c0_i32_0 = arith.constant 0 : i32
    %2 = arith.cmpi ne, %1, %c0_i32_0 : i32
    scf.if %2 {
      %c0_19 = arith.constant 0 : index
      %c0_20 = arith.constant 0 : index
      %c0_21 = arith.constant 0 : index
      %c0_22 = arith.constant 0 : index
      %23 = vector.load %arg2[%c0_19, %c0_20, %c0_21, %c0_22] : memref<2x17x17x8xf32, #tpu.memory_space<vmem>>, vector<2x5x5x8xf32>
      %cst_23 = arith.constant dense<0.000000e+00> : vector<2x8xf32>
      %24 = vector.multi_reduction <add>, %23, %cst_23 [1, 2] : vector<2x5x5x8xf32> to vector<2x8xf32>
      %cst_24 = arith.constant 2.500000e+01 : f32
      %25 = vector.broadcast %cst_24 : f32 to vector<2x8xf32>
      %26 = arith.divf %24, %25 : vector<2x8xf32>
      %c0_25 = arith.constant 0 : index
      %c0_26 = arith.constant 0 : index
      %27 = vector.load %arg9[%c0_25, %c0_26] : memref<50x8xf32, #tpu.memory_space<vmem>>, vector<2x8xf32>
      tpu.vector_store %arg9[%c0_25, %c0_26], %26 {strides = array<i32>} : memref<50x8xf32, #tpu.memory_space<vmem>>, vector<2x8xf32>,
      %c0_27 = arith.constant 0 : index
      %c0_28 = arith.constant 0 : index
      %c3 = arith.constant 3 : index
      %c0_29 = arith.constant 0 : index
      %28 = vector.load %arg2[%c0_27, %c0_28, %c3, %c0_29] : memref<2x17x17x8xf32, #tpu.memory_space<vmem>>, vector<2x5x5x8xf32>
      %cst_30 = arith.constant dense<0.000000e+00> : vector<2x8xf32>
      %29 = vector.multi_reduction <add>, %28, %cst_30 [1, 2] : vector<2x5x5x8xf32> to vector<2x8xf32>
      %cst_31 = arith.constant 2.500000e+01 : f32
      %30 = vector.broadcast %cst_31 : f32 to vector<2x8xf32>
      %31 = arith.divf %29, %30 : vector<2x8xf32>
      %c2 = arith.constant 2 : index
      %c0_32 = arith.constant 0 : index
      %32 = vector.load %arg9[%c2, %c0_32] : memref<50x8xf32, #tpu.memory_space<vmem>>, vector<2x8xf32>
      tpu.vector_store %arg9[%c2, %c0_32], %31 {strides = array<i32>} : memref<50x8xf32, #tpu.memory_space<vmem>>, vector<2x8xf32>,
      %c0_33 = arith.constant 0 : index
      %c0_34 = arith.constant 0 : index
      %c6 = arith.constant 6 : index
      %c0_35 = arith.constant 0 : index
      %33 = vector.load %arg2[%c0_33, %c0_34, %c6, %c0_35] : memref<2x17x17x8xf32, #tpu.memory_space<vmem>>, vector<2x5x5x8xf32>
      %cst_36 = arith.constant dense<0.000000e+00> : vector<2x8xf32>
      %34 = vector.multi_reduction <add>, %33, %cst_36 [1, 2] : vector<2x5x5x8xf32> to vector<2x8xf32>
      %cst_37 = arith.constant 2.500000e+01 : f32
      %35 = vector.broadcast %cst_37 : f32 to vector<2x8xf32>
      %36 = arith.divf %34, %35 : vector<2x8xf32>
      %c4 = arith.constant 4 : index
      %c0_38 = arith.constant 0 : index
      %37 = vector.load %arg9[%c4, %c0_38] : memref<50x8xf32, #tpu.memory_space<vmem>>, vector<2x8xf32>
      tpu.vector_store %arg9[%c4, %c0_38], %36 {strides = array<i32>} : memref<50x8xf32, #tpu.memory_space<vmem>>, vector<2x8xf32>,
      %c0_39 = arith.constant 0 : index
      %c0_40 = arith.constant 0 : index
      %c9 = arith.constant 9 : index
      %c0_41 = arith.constant 0 : index
      %38 = vector.load %arg2[%c0_39, %c0_40, %c9, %c0_41] : memref<2x17x17x8xf32, #tpu.memory_space<vmem>>, vector<2x5x5x8xf32>
      %cst_42 = arith.constant dense<0.000000e+00> : vector<2x8xf32>
      %39 = vector.multi_reduction <add>, %38, %cst_42 [1, 2] : vector<2x5x5x8xf32> to vector<2x8xf32>
      %cst_43 = arith.constant 2.500000e+01 : f32
      %40 = vector.broadcast %cst_43 : f32 to vector<2x8xf32>
      %41 = arith.divf %39, %40 : vector<2x8xf32>
      %c6_44 = arith.constant 6 : index
      %c0_45 = arith.constant 0 : index
      %42 = vector.load %arg9[%c6_44, %c0_45] : memref<50x8xf32, #tpu.memory_space<vmem>>, vector<2x8xf32>
      tpu.vector_store %arg9[%c6_44, %c0_45], %41 {strides = array<i32>} : memref<50x8xf32, #tpu.memory_space<vmem>>, vector<2x8xf32>,
      %c0_46 = arith.constant 0 : index
      %c0_47 = arith.constant 0 : index
      %c12 = arith.constant 12 : index
      %c0_48 = arith.constant 0 : index
      %43 = vector.load %arg2[%c0_46, %c0_47, %c12, %c0_48] : memref<2x17x17x8xf32, #tpu.memory_space<vmem>>, vector<2x5x5x8xf32>
      %cst_49 = arith.constant dense<0.000000e+00> : vector<2x8xf32>
      %44 = vector.multi_reduction <add>, %43, %cst_49 [1, 2] : vector<2x5x5x8xf32> to vector<2x8xf32>
      %cst_50 = arith.constant 2.500000e+01 : f32
      %45 = vector.broadcast %cst_50 : f32 to vector<2x8xf32>
      %46 = arith.divf %44, %45 : vector<2x8xf32>
      %c8 = arith.constant 8 : index
      %c0_51 = arith.constant 0 : index
      %47 = vector.load %arg9[%c8, %c0_51] : memref<50x8xf32, #tpu.memory_space<vmem>>, vector<2x8xf32>
      tpu.vector_store %arg9[%c8, %c0_51], %46 {strides = array<i32>} : memref<50x8xf32, #tpu.memory_space<vmem>>, vector<2x8xf32>,
      %c0_52 = arith.constant 0 : index
      %c3_53 = arith.constant 3 : index
      %c0_54 = arith.constant 0 : index
      %c0_55 = arith.constant 0 : index
      %48 = vector.load %arg2[%c0_52, %c3_53, %c0_54, %c0_55] : memref<2x17x17x8xf32, #tpu.memory_space<vmem>>, vector<2x5x5x8xf32>
      %cst_56 = arith.constant dense<0.000000e+00> : vector<2x8xf32>
      %49 = vector.multi_reduction <add>, %48, %cst_56 [1, 2] : vector<2x5x5x8xf32> to vector<2x8xf32>
      %cst_57 = arith.constant 2.500000e+01 : f32
      %50 = vector.broadcast %cst_57 : f32 to vector<2x8xf32>
      %51 = arith.divf %49, %50 : vector<2x8xf32>
      %c10 = arith.constant 10 : index
      %c0_58 = arith.constant 0 : index
      %52 = vector.load %arg9[%c10, %c0_58] : memref<50x8xf32, #tpu.memory_space<vmem>>, vector<2x8xf32>
      tpu.vector_store %arg9[%c10, %c0_58], %51 {strides = array<i32>} : memref<50x8xf32, #tpu.memory_space<vmem>>, vector<2x8xf32>,
      %c0_59 = arith.constant 0 : index
      %c3_60 = arith.constant 3 : index
      %c3_61 = arith.constant 3 : index
      %c0_62 = arith.constant 0 : index
      %53 = vector.load %arg2[%c0_59, %c3_60, %c3_61, %c0_62] : memref<2x17x17x8xf32, #tpu.memory_space<vmem>>, vector<2x5x5x8xf32>
      %cst_63 = arith.constant dense<0.000000e+00> : vector<2x8xf32>
      %54 = vector.multi_reduction <add>, %53, %cst_63 [1, 2] : vector<2x5x5x8xf32> to vector<2x8xf32>
      %cst_64 = arith.constant 2.500000e+01 : f32
      %55 = vector.broadcast %cst_64 : f32 to vector<2x8xf32>
      %56 = arith.divf %54, %55 : vector<2x8xf32>
      %c12_65 = arith.constant 12 : index
      %c0_66 = arith.constant 0 : index
      %57 = vector.load %arg9[%c12_65, %c0_66] : memref<50x8xf32, #tpu.memory_space<vmem>>, vector<2x8xf32>
      tpu.vector_store %arg9[%c12_65, %c0_66], %56 {strides = array<i32>} : memref<50x8xf32, #tpu.memory_space<vmem>>, vector<2x8xf32>,
      %c0_67 = arith.constant 0 : index
      %c3_68 = arith.constant 3 : index
      %c6_69 = arith.constant 6 : index
      %c0_70 = arith.constant 0 : index
      %58 = vector.load %arg2[%c0_67, %c3_68, %c6_69, %c0_70] : memref<2x17x17x8xf32, #tpu.memory_space<vmem>>, vector<2x5x5x8xf32>
      %cst_71 = arith.constant dense<0.000000e+00> : vector<2x8xf32>
      %59 = vector.multi_reduction <add>, %58, %cst_71 [1, 2] : vector<2x5x5x8xf32> to vector<2x8xf32>
      %cst_72 = arith.constant 2.500000e+01 : f32
      %60 = vector.broadcast %cst_72 : f32 to vector<2x8xf32>
      %61 = arith.divf %59, %60 : vector<2x8xf32>
      %c14 = arith.constant 14 : index
      %c0_73 = arith.constant 0 : index
      %62 = vector.load %arg9[%c14, %c0_73] : memref<50x8xf32, #tpu.memory_space<vmem>>, vector<2x8xf32>
      tpu.vector_store %arg9[%c14, %c0_73], %61 {strides = array<i32>} : memref<50x8xf32, #tpu.memory_space<vmem>>, vector<2x8xf32>,
      %c0_74 = arith.constant 0 : index
      %c3_75 = arith.constant 3 : index
      %c9_76 = arith.constant 9 : index
      %c0_77 = arith.constant 0 : index
      %63 = vector.load %arg2[%c0_74, %c3_75, %c9_76, %c0_77] : memref<2x17x17x8xf32, #tpu.memory_space<vmem>>, vector<2x5x5x8xf32>
      %cst_78 = arith.constant dense<0.000000e+00> : vector<2x8xf32>
      %64 = vector.multi_reduction <add>, %63, %cst_78 [1, 2] : vector<2x5x5x8xf32> to vector<2x8xf32>
      %cst_79 = arith.constant 2.500000e+01 : f32
      %65 = vector.broadcast %cst_79 : f32 to vector<2x8xf32>
      %66 = arith.divf %64, %65 : vector<2x8xf32>
      %c16 = arith.constant 16 : index
      %c0_80 = arith.constant 0 : index
      %67 = vector.load %arg9[%c16, %c0_80] : memref<50x8xf32, #tpu.memory_space<vmem>>, vector<2x8xf32>
      tpu.vector_store %arg9[%c16, %c0_80], %66 {strides = array<i32>} : memref<50x8xf32, #tpu.memory_space<vmem>>, vector<2x8xf32>,
      %c0_81 = arith.constant 0 : index
      %c3_82 = arith.constant 3 : index
      %c12_83 = arith.constant 12 : index
      %c0_84 = arith.constant 0 : index
      %68 = vector.load %arg2[%c0_81, %c3_82, %c12_83, %c0_84] : memref<2x17x17x8xf32, #tpu.memory_space<vmem>>, vector<2x5x5x8xf32>
      %cst_85 = arith.constant dense<0.000000e+00> : vector<2x8xf32>
      %69 = vector.multi_reduction <add>, %68, %cst_85 [1, 2] : vector<2x5x5x8xf32> to vector<2x8xf32>
      %cst_86 = arith.constant 2.500000e+01 : f32
      %70 = vector.broadcast %cst_86 : f32 to vector<2x8xf32>
      %71 = arith.divf %69, %70 : vector<2x8xf32>
      %c18 = arith.constant 18 : index
      %c0_87 = arith.constant 0 : index
      %72 = vector.load %arg9[%c18, %c0_87] : memref<50x8xf32, #tpu.memory_space<vmem>>, vector<2x8xf32>
      tpu.vector_store %arg9[%c18, %c0_87], %71 {strides = array<i32>} : memref<50x8xf32, #tpu.memory_space<vmem>>, vector<2x8xf32>,
      %c0_88 = arith.constant 0 : index
      %c6_89 = arith.constant 6 : index
      %c0_90 = arith.constant 0 : index
      %c0_91 = arith.constant 0 : index
      %73 = vector.load %arg2[%c0_88, %c6_89, %c0_90, %c0_91] : memref<2x17x17x8xf32, #tpu.memory_space<vmem>>, vector<2x5x5x8xf32>
      %cst_92 = arith.constant dense<0.000000e+00> : vector<2x8xf32>
      %74 = vector.multi_reduction <add>, %73, %cst_92 [1, 2] : vector<2x5x5x8xf32> to vector<2x8xf32>
      %cst_93 = arith.constant 2.500000e+01 : f32
      %75 = vector.broadcast %cst_93 : f32 to vector<2x8xf32>
      %76 = arith.divf %74, %75 : vector<2x8xf32>
      %c20 = arith.constant 20 : index
      %c0_94 = arith.constant 0 : index
      %77 = vector.load %arg9[%c20, %c0_94] : memref<50x8xf32, #tpu.memory_space<vmem>>, vector<2x8xf32>
      tpu.vector_store %arg9[%c20, %c0_94], %76 {strides = array<i32>} : memref<50x8xf32, #tpu.memory_space<vmem>>, vector<2x8xf32>,
      %c0_95 = arith.constant 0 : index
      %c6_96 = arith.constant 6 : index
      %c3_97 = arith.constant 3 : index
      %c0_98 = arith.constant 0 : index
      %78 = vector.load %arg2[%c0_95, %c6_96, %c3_97, %c0_98] : memref<2x17x17x8xf32, #tpu.memory_space<vmem>>, vector<2x5x5x8xf32>
      %cst_99 = arith.constant dense<0.000000e+00> : vector<2x8xf32>
      %79 = vector.multi_reduction <add>, %78, %cst_99 [1, 2] : vector<2x5x5x8xf32> to vector<2x8xf32>
      %cst_100 = arith.constant 2.500000e+01 : f32
      %80 = vector.broadcast %cst_100 : f32 to vector<2x8xf32>
      %81 = arith.divf %79, %80 : vector<2x8xf32>
      %c22 = arith.constant 22 : index
      %c0_101 = arith.constant 0 : index
      %82 = vector.load %arg9[%c22, %c0_101] : memref<50x8xf32, #tpu.memory_space<vmem>>, vector<2x8xf32>
      tpu.vector_store %arg9[%c22, %c0_101], %81 {strides = array<i32>} : memref<50x8xf32, #tpu.memory_space<vmem>>, vector<2x8xf32>,
      %c0_102 = arith.constant 0 : index
      %c6_103 = arith.constant 6 : index
      %c6_104 = arith.constant 6 : index
      %c0_105 = arith.constant 0 : index
      %83 = vector.load %arg2[%c0_102, %c6_103, %c6_104, %c0_105] : memref<2x17x17x8xf32, #tpu.memory_space<vmem>>, vector<2x5x5x8xf32>
      %cst_106 = arith.constant dense<0.000000e+00> : vector<2x8xf32>
      %84 = vector.multi_reduction <add>, %83, %cst_106 [1, 2] : vector<2x5x5x8xf32> to vector<2x8xf32>
      %cst_107 = arith.constant 2.500000e+01 : f32
      %85 = vector.broadcast %cst_107 : f32 to vector<2x8xf32>
      %86 = arith.divf %84, %85 : vector<2x8xf32>
      %c24 = arith.constant 24 : index
      %c0_108 = arith.constant 0 : index
      %87 = vector.load %arg9[%c24, %c0_108] : memref<50x8xf32, #tpu.memory_space<vmem>>, vector<2x8xf32>
      tpu.vector_store %arg9[%c24, %c0_108], %86 {strides = array<i32>} : memref<50x8xf32, #tpu.memory_space<vmem>>, vector<2x8xf32>,
      %c0_109 = arith.constant 0 : index
      %c6_110 = arith.constant 6 : index
      %c9_111 = arith.constant 9 : index
      %c0_112 = arith.constant 0 : index
      %88 = vector.load %arg2[%c0_109, %c6_110, %c9_111, %c0_112] : memref<2x17x17x8xf32, #tpu.memory_space<vmem>>, vector<2x5x5x8xf32>
      %cst_113 = arith.constant dense<0.000000e+00> : vector<2x8xf32>
      %89 = vector.multi_reduction <add>, %88, %cst_113 [1, 2] : vector<2x5x5x8xf32> to vector<2x8xf32>
      %cst_114 = arith.constant 2.500000e+01 : f32
      %90 = vector.broadcast %cst_114 : f32 to vector<2x8xf32>
      %91 = arith.divf %89, %90 : vector<2x8xf32>
      %c26 = arith.constant 26 : index
      %c0_115 = arith.constant 0 : index
      %92 = vector.load %arg9[%c26, %c0_115] : memref<50x8xf32, #tpu.memory_space<vmem>>, vector<2x8xf32>
      tpu.vector_store %arg9[%c26, %c0_115], %91 {strides = array<i32>} : memref<50x8xf32, #tpu.memory_space<vmem>>, vector<2x8xf32>,
      %c0_116 = arith.constant 0 : index
      %c6_117 = arith.constant 6 : index
      %c12_118 = arith.constant 12 : index
      %c0_119 = arith.constant 0 : index
      %93 = vector.load %arg2[%c0_116, %c6_117, %c12_118, %c0_119] : memref<2x17x17x8xf32, #tpu.memory_space<vmem>>, vector<2x5x5x8xf32>
      %cst_120 = arith.constant dense<0.000000e+00> : vector<2x8xf32>
      %94 = vector.multi_reduction <add>, %93, %cst_120 [1, 2] : vector<2x5x5x8xf32> to vector<2x8xf32>
      %cst_121 = arith.constant 2.500000e+01 : f32
      %95 = vector.broadcast %cst_121 : f32 to vector<2x8xf32>
      %96 = arith.divf %94, %95 : vector<2x8xf32>
      %c28 = arith.constant 28 : index
      %c0_122 = arith.constant 0 : index
      %97 = vector.load %arg9[%c28, %c0_122] : memref<50x8xf32, #tpu.memory_space<vmem>>, vector<2x8xf32>
      tpu.vector_store %arg9[%c28, %c0_122], %96 {strides = array<i32>} : memref<50x8xf32, #tpu.memory_space<vmem>>, vector<2x8xf32>,
      %c0_123 = arith.constant 0 : index
      %c9_124 = arith.constant 9 : index
      %c0_125 = arith.constant 0 : index
      %c0_126 = arith.constant 0 : index
      %98 = vector.load %arg2[%c0_123, %c9_124, %c0_125, %c0_126] : memref<2x17x17x8xf32, #tpu.memory_space<vmem>>, vector<2x5x5x8xf32>
      %cst_127 = arith.constant dense<0.000000e+00> : vector<2x8xf32>
      %99 = vector.multi_reduction <add>, %98, %cst_127 [1, 2] : vector<2x5x5x8xf32> to vector<2x8xf32>
      %cst_128 = arith.constant 2.500000e+01 : f32
      %100 = vector.broadcast %cst_128 : f32 to vector<2x8xf32>
      %101 = arith.divf %99, %100 : vector<2x8xf32>
      %c30 = arith.constant 30 : index
      %c0_129 = arith.constant 0 : index
      %102 = vector.load %arg9[%c30, %c0_129] : memref<50x8xf32, #tpu.memory_space<vmem>>, vector<2x8xf32>
      tpu.vector_store %arg9[%c30, %c0_129], %101 {strides = array<i32>} : memref<50x8xf32, #tpu.memory_space<vmem>>, vector<2x8xf32>,
      %c0_130 = arith.constant 0 : index
      %c9_131 = arith.constant 9 : index
      %c3_132 = arith.constant 3 : index
      %c0_133 = arith.constant 0 : index
      %103 = vector.load %arg2[%c0_130, %c9_131, %c3_132, %c0_133] : memref<2x17x17x8xf32, #tpu.memory_space<vmem>>, vector<2x5x5x8xf32>
      %cst_134 = arith.constant dense<0.000000e+00> : vector<2x8xf32>
      %104 = vector.multi_reduction <add>, %103, %cst_134 [1, 2] : vector<2x5x5x8xf32> to vector<2x8xf32>
      %cst_135 = arith.constant 2.500000e+01 : f32
      %105 = vector.broadcast %cst_135 : f32 to vector<2x8xf32>
      %106 = arith.divf %104, %105 : vector<2x8xf32>
      %c32 = arith.constant 32 : index
      %c0_136 = arith.constant 0 : index
      %107 = vector.load %arg9[%c32, %c0_136] : memref<50x8xf32, #tpu.memory_space<vmem>>, vector<2x8xf32>
      tpu.vector_store %arg9[%c32, %c0_136], %106 {strides = array<i32>} : memref<50x8xf32, #tpu.memory_space<vmem>>, vector<2x8xf32>,
      %c0_137 = arith.constant 0 : index
      %c9_138 = arith.constant 9 : index
      %c6_139 = arith.constant 6 : index
      %c0_140 = arith.constant 0 : index
      %108 = vector.load %arg2[%c0_137, %c9_138, %c6_139, %c0_140] : memref<2x17x17x8xf32, #tpu.memory_space<vmem>>, vector<2x5x5x8xf32>
      %cst_141 = arith.constant dense<0.000000e+00> : vector<2x8xf32>
      %109 = vector.multi_reduction <add>, %108, %cst_141 [1, 2] : vector<2x5x5x8xf32> to vector<2x8xf32>
      %cst_142 = arith.constant 2.500000e+01 : f32
      %110 = vector.broadcast %cst_142 : f32 to vector<2x8xf32>
      %111 = arith.divf %109, %110 : vector<2x8xf32>
      %c34 = arith.constant 34 : index
      %c0_143 = arith.constant 0 : index
      %112 = vector.load %arg9[%c34, %c0_143] : memref<50x8xf32, #tpu.memory_space<vmem>>, vector<2x8xf32>
      tpu.vector_store %arg9[%c34, %c0_143], %111 {strides = array<i32>} : memref<50x8xf32, #tpu.memory_space<vmem>>, vector<2x8xf32>,
      %c0_144 = arith.constant 0 : index
      %c9_145 = arith.constant 9 : index
      %c9_146 = arith.constant 9 : index
      %c0_147 = arith.constant 0 : index
      %113 = vector.load %arg2[%c0_144, %c9_145, %c9_146, %c0_147] : memref<2x17x17x8xf32, #tpu.memory_space<vmem>>, vector<2x5x5x8xf32>
      %cst_148 = arith.constant dense<0.000000e+00> : vector<2x8xf32>
      %114 = vector.multi_reduction <add>, %113, %cst_148 [1, 2] : vector<2x5x5x8xf32> to vector<2x8xf32>
      %cst_149 = arith.constant 2.500000e+01 : f32
      %115 = vector.broadcast %cst_149 : f32 to vector<2x8xf32>
      %116 = arith.divf %114, %115 : vector<2x8xf32>
      %c36 = arith.constant 36 : index
      %c0_150 = arith.constant 0 : index
      %117 = vector.load %arg9[%c36, %c0_150] : memref<50x8xf32, #tpu.memory_space<vmem>>, vector<2x8xf32>
      tpu.vector_store %arg9[%c36, %c0_150], %116 {strides = array<i32>} : memref<50x8xf32, #tpu.memory_space<vmem>>, vector<2x8xf32>,
      %c0_151 = arith.constant 0 : index
      %c9_152 = arith.constant 9 : index
      %c12_153 = arith.constant 12 : index
      %c0_154 = arith.constant 0 : index
      %118 = vector.load %arg2[%c0_151, %c9_152, %c12_153, %c0_154] : memref<2x17x17x8xf32, #tpu.memory_space<vmem>>, vector<2x5x5x8xf32>
      %cst_155 = arith.constant dense<0.000000e+00> : vector<2x8xf32>
      %119 = vector.multi_reduction <add>, %118, %cst_155 [1, 2] : vector<2x5x5x8xf32> to vector<2x8xf32>
      %cst_156 = arith.constant 2.500000e+01 : f32
      %120 = vector.broadcast %cst_156 : f32 to vector<2x8xf32>
      %121 = arith.divf %119, %120 : vector<2x8xf32>
      %c38 = arith.constant 38 : index
      %c0_157 = arith.constant 0 : index
      %122 = vector.load %arg9[%c38, %c0_157] : memref<50x8xf32, #tpu.memory_space<vmem>>, vector<2x8xf32>
      tpu.vector_store %arg9[%c38, %c0_157], %121 {strides = array<i32>} : memref<50x8xf32, #tpu.memory_space<vmem>>, vector<2x8xf32>,
      %c0_158 = arith.constant 0 : index
      %c12_159 = arith.constant 12 : index
      %c0_160 = arith.constant 0 : index
      %c0_161 = arith.constant 0 : index
      %123 = vector.load %arg2[%c0_158, %c12_159, %c0_160, %c0_161] : memref<2x17x17x8xf32, #tpu.memory_space<vmem>>, vector<2x5x5x8xf32>
      %cst_162 = arith.constant dense<0.000000e+00> : vector<2x8xf32>
      %124 = vector.multi_reduction <add>, %123, %cst_162 [1, 2] : vector<2x5x5x8xf32> to vector<2x8xf32>
      %cst_163 = arith.constant 2.500000e+01 : f32
      %125 = vector.broadcast %cst_163 : f32 to vector<2x8xf32>
      %126 = arith.divf %124, %125 : vector<2x8xf32>
      %c40 = arith.constant 40 : index
      %c0_164 = arith.constant 0 : index
      %127 = vector.load %arg9[%c40, %c0_164] : memref<50x8xf32, #tpu.memory_space<vmem>>, vector<2x8xf32>
      tpu.vector_store %arg9[%c40, %c0_164], %126 {strides = array<i32>} : memref<50x8xf32, #tpu.memory_space<vmem>>, vector<2x8xf32>,
      %c0_165 = arith.constant 0 : index
      %c12_166 = arith.constant 12 : index
      %c3_167 = arith.constant 3 : index
      %c0_168 = arith.constant 0 : index
      %128 = vector.load %arg2[%c0_165, %c12_166, %c3_167, %c0_168] : memref<2x17x17x8xf32, #tpu.memory_space<vmem>>, vector<2x5x5x8xf32>
      %cst_169 = arith.constant dense<0.000000e+00> : vector<2x8xf32>
      %129 = vector.multi_reduction <add>, %128, %cst_169 [1, 2] : vector<2x5x5x8xf32> to vector<2x8xf32>
      %cst_170 = arith.constant 2.500000e+01 : f32
      %130 = vector.broadcast %cst_170 : f32 to vector<2x8xf32>
      %131 = arith.divf %129, %130 : vector<2x8xf32>
      %c42 = arith.constant 42 : index
      %c0_171 = arith.constant 0 : index
      %132 = vector.load %arg9[%c42, %c0_171] : memref<50x8xf32, #tpu.memory_space<vmem>>, vector<2x8xf32>
      tpu.vector_store %arg9[%c42, %c0_171], %131 {strides = array<i32>} : memref<50x8xf32, #tpu.memory_space<vmem>>, vector<2x8xf32>,
      %c0_172 = arith.constant 0 : index
      %c12_173 = arith.constant 12 : index
      %c6_174 = arith.constant 6 : index
      %c0_175 = arith.constant 0 : index
      %133 = vector.load %arg2[%c0_172, %c12_173, %c6_174, %c0_175] : memref<2x17x17x8xf32, #tpu.memory_space<vmem>>, vector<2x5x5x8xf32>
      %cst_176 = arith.constant dense<0.000000e+00> : vector<2x8xf32>
      %134 = vector.multi_reduction <add>, %133, %cst_176 [1, 2] : vector<2x5x5x8xf32> to vector<2x8xf32>
      %cst_177 = arith.constant 2.500000e+01 : f32
      %135 = vector.broadcast %cst_177 : f32 to vector<2x8xf32>
      %136 = arith.divf %134, %135 : vector<2x8xf32>
      %c44 = arith.constant 44 : index
      %c0_178 = arith.constant 0 : index
      %137 = vector.load %arg9[%c44, %c0_178] : memref<50x8xf32, #tpu.memory_space<vmem>>, vector<2x8xf32>
      tpu.vector_store %arg9[%c44, %c0_178], %136 {strides = array<i32>} : memref<50x8xf32, #tpu.memory_space<vmem>>, vector<2x8xf32>,
      %c0_179 = arith.constant 0 : index
      %c12_180 = arith.constant 12 : index
      %c9_181 = arith.constant 9 : index
      %c0_182 = arith.constant 0 : index
      %138 = vector.load %arg2[%c0_179, %c12_180, %c9_181, %c0_182] : memref<2x17x17x8xf32, #tpu.memory_space<vmem>>, vector<2x5x5x8xf32>
      %cst_183 = arith.constant dense<0.000000e+00> : vector<2x8xf32>
      %139 = vector.multi_reduction <add>, %138, %cst_183 [1, 2] : vector<2x5x5x8xf32> to vector<2x8xf32>
      %cst_184 = arith.constant 2.500000e+01 : f32
      %140 = vector.broadcast %cst_184 : f32 to vector<2x8xf32>
      %141 = arith.divf %139, %140 : vector<2x8xf32>
      %c46 = arith.constant 46 : index
      %c0_185 = arith.constant 0 : index
      %142 = vector.load %arg9[%c46, %c0_185] : memref<50x8xf32, #tpu.memory_space<vmem>>, vector<2x8xf32>
      tpu.vector_store %arg9[%c46, %c0_185], %141 {strides = array<i32>} : memref<50x8xf32, #tpu.memory_space<vmem>>, vector<2x8xf32>,
      %c0_186 = arith.constant 0 : index
      %c12_187 = arith.constant 12 : index
      %c12_188 = arith.constant 12 : index
      %c0_189 = arith.constant 0 : index
      %143 = vector.load %arg2[%c0_186, %c12_187, %c12_188, %c0_189] : memref<2x17x17x8xf32, #tpu.memory_space<vmem>>, vector<2x5x5x8xf32>
      %cst_190 = arith.constant dense<0.000000e+00> : vector<2x8xf32>
      %144 = vector.multi_reduction <add>, %143, %cst_190 [1, 2] : vector<2x5x5x8xf32> to vector<2x8xf32>
      %cst_191 = arith.constant 2.500000e+01 : f32
      %145 = vector.broadcast %cst_191 : f32 to vector<2x8xf32>
      %146 = arith.divf %144, %145 : vector<2x8xf32>
      %c48 = arith.constant 48 : index
      %c0_192 = arith.constant 0 : index
      %147 = vector.load %arg9[%c48, %c0_192] : memref<50x8xf32, #tpu.memory_space<vmem>>, vector<2x8xf32>
      tpu.vector_store %arg9[%c48, %c0_192], %146 {strides = array<i32>} : memref<50x8xf32, #tpu.memory_space<vmem>>, vector<2x8xf32>,
      %c0_193 = arith.constant 0 : index
      %c0_194 = arith.constant 0 : index
      %148 = vector.load %arg9[%c0_193, %c0_194] : memref<50x8xf32, #tpu.memory_space<vmem>>, vector<50x8xf32>
      %c0_195 = arith.constant 0 : index
      %c0_196 = arith.constant 0 : index
      %149 = vector.load %arg3[%c0_195, %c0_196] : memref<8x128xf32, #tpu.memory_space<vmem>>, vector<8x128xf32>
      %cst_197 = arith.constant dense<0.000000e+00> : vector<50x128xf32>
      %150 = tpu.matmul %148, %149, %cst_197 {dimension_numbers = #tpu.dot_dimension_numbers<[1], [0], [0], [1], [0, 0, 1, 1], [], []>} : vector<50x8xf32>, vector<8x128xf32>, vector<50x128xf32> -> vector<50x128xf32>
      %c0_198 = arith.constant 0 : index
      %c0_199 = arith.constant 0 : index
      %151 = vector.load %arg4[%c0_198, %c0_199] : memref<1x128xf32, #tpu.memory_space<vmem>>, vector<1x128xf32>
      %152 = vector.broadcast %151 : vector<1x128xf32> to vector<50x128xf32>
      %153 = arith.addf %150, %152 : vector<50x128xf32>
      %cst_200 = arith.constant 0.000000e+00 : f32
      %154 = vector.broadcast %cst_200 : f32 to vector<50x128xf32>
      %155 = arith.maximumf %153, %154 : vector<50x128xf32>
      %156 = arith.truncf %155 : vector<50x128xf32> to vector<50x128xbf16>
      %c0_201 = arith.constant 0 : index
      %c0_202 = arith.constant 0 : index
      %157 = vector.load %arg10[%c0_201, %c0_202] : memref<50x128xbf16, #tpu.memory_space<vmem>>, vector<50x128xbf16>
      tpu.vector_store %arg10[%c0_201, %c0_202], %156 {strides = array<i32>} : memref<50x128xbf16, #tpu.memory_space<vmem>>, vector<50x128xbf16>,
      %c0_203 = arith.constant 0 : index
      %c0_204 = arith.constant 0 : index
      %158 = vector.load %arg10[%c0_203, %c0_204] : memref<50x128xbf16, #tpu.memory_space<vmem>>, vector<2x128xbf16>
      %c0_205 = arith.constant 0 : index
      %c0_206 = arith.constant 0 : index
      %159 = vector.load %arg11[%c0_205, %c0_206] : memref<2x3200xbf16, #tpu.memory_space<vmem>>, vector<2x128xbf16>
      tpu.vector_store %arg11[%c0_205, %c0_206], %158 {strides = array<i32>} : memref<2x3200xbf16, #tpu.memory_space<vmem>>, vector<2x128xbf16>,
      %c2_207 = arith.constant 2 : index
      %c0_208 = arith.constant 0 : index
      %160 = vector.load %arg10[%c2_207, %c0_208] : memref<50x128xbf16, #tpu.memory_space<vmem>>, vector<2x128xbf16>
      %c0_209 = arith.constant 0 : index
      %c128 = arith.constant 128 : index
      %161 = vector.load %arg11[%c0_209, %c128] : memref<2x3200xbf16, #tpu.memory_space<vmem>>, vector<2x128xbf16>
      tpu.vector_store %arg11[%c0_209, %c128], %160 {strides = array<i32>} : memref<2x3200xbf16, #tpu.memory_space<vmem>>, vector<2x128xbf16>,
      %c4_210 = arith.constant 4 : index
      %c0_211 = arith.constant 0 : index
      %162 = vector.load %arg10[%c4_210, %c0_211] : memref<50x128xbf16, #tpu.memory_space<vmem>>, vector<2x128xbf16>
      %c0_212 = arith.constant 0 : index
      %c256 = arith.constant 256 : index
      %163 = vector.load %arg11[%c0_212, %c256] : memref<2x3200xbf16, #tpu.memory_space<vmem>>, vector<2x128xbf16>
      tpu.vector_store %arg11[%c0_212, %c256], %162 {strides = array<i32>} : memref<2x3200xbf16, #tpu.memory_space<vmem>>, vector<2x128xbf16>,
      %c6_213 = arith.constant 6 : index
      %c0_214 = arith.constant 0 : index
      %164 = vector.load %arg10[%c6_213, %c0_214] : memref<50x128xbf16, #tpu.memory_space<vmem>>, vector<2x128xbf16>
      %c0_215 = arith.constant 0 : index
      %c384 = arith.constant 384 : index
      %165 = vector.load %arg11[%c0_215, %c384] : memref<2x3200xbf16, #tpu.memory_space<vmem>>, vector<2x128xbf16>
      tpu.vector_store %arg11[%c0_215, %c384], %164 {strides = array<i32>} : memref<2x3200xbf16, #tpu.memory_space<vmem>>, vector<2x128xbf16>,
      %c8_216 = arith.constant 8 : index
      %c0_217 = arith.constant 0 : index
      %166 = vector.load %arg10[%c8_216, %c0_217] : memref<50x128xbf16, #tpu.memory_space<vmem>>, vector<2x128xbf16>
      %c0_218 = arith.constant 0 : index
      %c512 = arith.constant 512 : index
      %167 = vector.load %arg11[%c0_218, %c512] : memref<2x3200xbf16, #tpu.memory_space<vmem>>, vector<2x128xbf16>
      tpu.vector_store %arg11[%c0_218, %c512], %166 {strides = array<i32>} : memref<2x3200xbf16, #tpu.memory_space<vmem>>, vector<2x128xbf16>,
      %c10_219 = arith.constant 10 : index
      %c0_220 = arith.constant 0 : index
      %168 = vector.load %arg10[%c10_219, %c0_220] : memref<50x128xbf16, #tpu.memory_space<vmem>>, vector<2x128xbf16>
      %c0_221 = arith.constant 0 : index
      %c640 = arith.constant 640 : index
      %169 = vector.load %arg11[%c0_221, %c640] : memref<2x3200xbf16, #tpu.memory_space<vmem>>, vector<2x128xbf16>
      tpu.vector_store %arg11[%c0_221, %c640], %168 {strides = array<i32>} : memref<2x3200xbf16, #tpu.memory_space<vmem>>, vector<2x128xbf16>,
      %c12_222 = arith.constant 12 : index
      %c0_223 = arith.constant 0 : index
      %170 = vector.load %arg10[%c12_222, %c0_223] : memref<50x128xbf16, #tpu.memory_space<vmem>>, vector<2x128xbf16>
      %c0_224 = arith.constant 0 : index
      %c768 = arith.constant 768 : index
      %171 = vector.load %arg11[%c0_224, %c768] : memref<2x3200xbf16, #tpu.memory_space<vmem>>, vector<2x128xbf16>
      tpu.vector_store %arg11[%c0_224, %c768], %170 {strides = array<i32>} : memref<2x3200xbf16, #tpu.memory_space<vmem>>, vector<2x128xbf16>,
      %c14_225 = arith.constant 14 : index
      %c0_226 = arith.constant 0 : index
      %172 = vector.load %arg10[%c14_225, %c0_226] : memref<50x128xbf16, #tpu.memory_space<vmem>>, vector<2x128xbf16>
      %c0_227 = arith.constant 0 : index
      %c896 = arith.constant 896 : index
      %173 = vector.load %arg11[%c0_227, %c896] : memref<2x3200xbf16, #tpu.memory_space<vmem>>, vector<2x128xbf16>
      tpu.vector_store %arg11[%c0_227, %c896], %172 {strides = array<i32>} : memref<2x3200xbf16, #tpu.memory_space<vmem>>, vector<2x128xbf16>,
      %c16_228 = arith.constant 16 : index
      %c0_229 = arith.constant 0 : index
      %174 = vector.load %arg10[%c16_228, %c0_229] : memref<50x128xbf16, #tpu.memory_space<vmem>>, vector<2x128xbf16>
      %c0_230 = arith.constant 0 : index
      %c1024 = arith.constant 1024 : index
      %175 = vector.load %arg11[%c0_230, %c1024] : memref<2x3200xbf16, #tpu.memory_space<vmem>>, vector<2x128xbf16>
      tpu.vector_store %arg11[%c0_230, %c1024], %174 {strides = array<i32>} : memref<2x3200xbf16, #tpu.memory_space<vmem>>, vector<2x128xbf16>,
      %c18_231 = arith.constant 18 : index
      %c0_232 = arith.constant 0 : index
      %176 = vector.load %arg10[%c18_231, %c0_232] : memref<50x128xbf16, #tpu.memory_space<vmem>>, vector<2x128xbf16>
      %c0_233 = arith.constant 0 : index
      %c1152 = arith.constant 1152 : index
      %177 = vector.load %arg11[%c0_233, %c1152] : memref<2x3200xbf16, #tpu.memory_space<vmem>>, vector<2x128xbf16>
      tpu.vector_store %arg11[%c0_233, %c1152], %176 {strides = array<i32>} : memref<2x3200xbf16, #tpu.memory_space<vmem>>, vector<2x128xbf16>,
      %c20_234 = arith.constant 20 : index
      %c0_235 = arith.constant 0 : index
      %178 = vector.load %arg10[%c20_234, %c0_235] : memref<50x128xbf16, #tpu.memory_space<vmem>>, vector<2x128xbf16>
      %c0_236 = arith.constant 0 : index
      %c1280 = arith.constant 1280 : index
      %179 = vector.load %arg11[%c0_236, %c1280] : memref<2x3200xbf16, #tpu.memory_space<vmem>>, vector<2x128xbf16>
      tpu.vector_store %arg11[%c0_236, %c1280], %178 {strides = array<i32>} : memref<2x3200xbf16, #tpu.memory_space<vmem>>, vector<2x128xbf16>,
      %c22_237 = arith.constant 22 : index
      %c0_238 = arith.constant 0 : index
      %180 = vector.load %arg10[%c22_237, %c0_238] : memref<50x128xbf16, #tpu.memory_space<vmem>>, vector<2x128xbf16>
      %c0_239 = arith.constant 0 : index
      %c1408 = arith.constant 1408 : index
      %181 = vector.load %arg11[%c0_239, %c1408] : memref<2x3200xbf16, #tpu.memory_space<vmem>>, vector<2x128xbf16>
      tpu.vector_store %arg11[%c0_239, %c1408], %180 {strides = array<i32>} : memref<2x3200xbf16, #tpu.memory_space<vmem>>, vector<2x128xbf16>,
      %c24_240 = arith.constant 24 : index
      %c0_241 = arith.constant 0 : index
      %182 = vector.load %arg10[%c24_240, %c0_241] : memref<50x128xbf16, #tpu.memory_space<vmem>>, vector<2x128xbf16>
      %c0_242 = arith.constant 0 : index
      %c1536 = arith.constant 1536 : index
      %183 = vector.load %arg11[%c0_242, %c1536] : memref<2x3200xbf16, #tpu.memory_space<vmem>>, vector<2x128xbf16>
      tpu.vector_store %arg11[%c0_242, %c1536], %182 {strides = array<i32>} : memref<2x3200xbf16, #tpu.memory_space<vmem>>, vector<2x128xbf16>,
      %c26_243 = arith.constant 26 : index
      %c0_244 = arith.constant 0 : index
      %184 = vector.load %arg10[%c26_243, %c0_244] : memref<50x128xbf16, #tpu.memory_space<vmem>>, vector<2x128xbf16>
      %c0_245 = arith.constant 0 : index
      %c1664 = arith.constant 1664 : index
      %185 = vector.load %arg11[%c0_245, %c1664] : memref<2x3200xbf16, #tpu.memory_space<vmem>>, vector<2x128xbf16>
      tpu.vector_store %arg11[%c0_245, %c1664], %184 {strides = array<i32>} : memref<2x3200xbf16, #tpu.memory_space<vmem>>, vector<2x128xbf16>,
      %c28_246 = arith.constant 28 : index
      %c0_247 = arith.constant 0 : index
      %186 = vector.load %arg10[%c28_246, %c0_247] : memref<50x128xbf16, #tpu.memory_space<vmem>>, vector<2x128xbf16>
      %c0_248 = arith.constant 0 : index
      %c1792 = arith.constant 1792 : index
      %187 = vector.load %arg11[%c0_248, %c1792] : memref<2x3200xbf16, #tpu.memory_space<vmem>>, vector<2x128xbf16>
      tpu.vector_store %arg11[%c0_248, %c1792], %186 {strides = array<i32>} : memref<2x3200xbf16, #tpu.memory_space<vmem>>, vector<2x128xbf16>,
      %c30_249 = arith.constant 30 : index
      %c0_250 = arith.constant 0 : index
      %188 = vector.load %arg10[%c30_249, %c0_250] : memref<50x128xbf16, #tpu.memory_space<vmem>>, vector<2x128xbf16>
      %c0_251 = arith.constant 0 : index
      %c1920 = arith.constant 1920 : index
      %189 = vector.load %arg11[%c0_251, %c1920] : memref<2x3200xbf16, #tpu.memory_space<vmem>>, vector<2x128xbf16>
      tpu.vector_store %arg11[%c0_251, %c1920], %188 {strides = array<i32>} : memref<2x3200xbf16, #tpu.memory_space<vmem>>, vector<2x128xbf16>,
      %c32_252 = arith.constant 32 : index
      %c0_253 = arith.constant 0 : index
      %190 = vector.load %arg10[%c32_252, %c0_253] : memref<50x128xbf16, #tpu.memory_space<vmem>>, vector<2x128xbf16>
      %c0_254 = arith.constant 0 : index
      %c2048 = arith.constant 2048 : index
      %191 = vector.load %arg11[%c0_254, %c2048] : memref<2x3200xbf16, #tpu.memory_space<vmem>>, vector<2x128xbf16>
      tpu.vector_store %arg11[%c0_254, %c2048], %190 {strides = array<i32>} : memref<2x3200xbf16, #tpu.memory_space<vmem>>, vector<2x128xbf16>,
      %c34_255 = arith.constant 34 : index
      %c0_256 = arith.constant 0 : index
      %192 = vector.load %arg10[%c34_255, %c0_256] : memref<50x128xbf16, #tpu.memory_space<vmem>>, vector<2x128xbf16>
      %c0_257 = arith.constant 0 : index
      %c2176 = arith.constant 2176 : index
      %193 = vector.load %arg11[%c0_257, %c2176] : memref<2x3200xbf16, #tpu.memory_space<vmem>>, vector<2x128xbf16>
      tpu.vector_store %arg11[%c0_257, %c2176], %192 {strides = array<i32>} : memref<2x3200xbf16, #tpu.memory_space<vmem>>, vector<2x128xbf16>,
      %c36_258 = arith.constant 36 : index
      %c0_259 = arith.constant 0 : index
      %194 = vector.load %arg10[%c36_258, %c0_259] : memref<50x128xbf16, #tpu.memory_space<vmem>>, vector<2x128xbf16>
      %c0_260 = arith.constant 0 : index
      %c2304 = arith.constant 2304 : index
      %195 = vector.load %arg11[%c0_260, %c2304] : memref<2x3200xbf16, #tpu.memory_space<vmem>>, vector<2x128xbf16>
      tpu.vector_store %arg11[%c0_260, %c2304], %194 {strides = array<i32>} : memref<2x3200xbf16, #tpu.memory_space<vmem>>, vector<2x128xbf16>,
      %c38_261 = arith.constant 38 : index
      %c0_262 = arith.constant 0 : index
      %196 = vector.load %arg10[%c38_261, %c0_262] : memref<50x128xbf16, #tpu.memory_space<vmem>>, vector<2x128xbf16>
      %c0_263 = arith.constant 0 : index
      %c2432 = arith.constant 2432 : index
      %197 = vector.load %arg11[%c0_263, %c2432] : memref<2x3200xbf16, #tpu.memory_space<vmem>>, vector<2x128xbf16>
      tpu.vector_store %arg11[%c0_263, %c2432], %196 {strides = array<i32>} : memref<2x3200xbf16, #tpu.memory_space<vmem>>, vector<2x128xbf16>,
      %c40_264 = arith.constant 40 : index
      %c0_265 = arith.constant 0 : index
      %198 = vector.load %arg10[%c40_264, %c0_265] : memref<50x128xbf16, #tpu.memory_space<vmem>>, vector<2x128xbf16>
      %c0_266 = arith.constant 0 : index
      %c2560 = arith.constant 2560 : index
      %199 = vector.load %arg11[%c0_266, %c2560] : memref<2x3200xbf16, #tpu.memory_space<vmem>>, vector<2x128xbf16>
      tpu.vector_store %arg11[%c0_266, %c2560], %198 {strides = array<i32>} : memref<2x3200xbf16, #tpu.memory_space<vmem>>, vector<2x128xbf16>,
      %c42_267 = arith.constant 42 : index
      %c0_268 = arith.constant 0 : index
      %200 = vector.load %arg10[%c42_267, %c0_268] : memref<50x128xbf16, #tpu.memory_space<vmem>>, vector<2x128xbf16>
      %c0_269 = arith.constant 0 : index
      %c2688 = arith.constant 2688 : index
      %201 = vector.load %arg11[%c0_269, %c2688] : memref<2x3200xbf16, #tpu.memory_space<vmem>>, vector<2x128xbf16>
      tpu.vector_store %arg11[%c0_269, %c2688], %200 {strides = array<i32>} : memref<2x3200xbf16, #tpu.memory_space<vmem>>, vector<2x128xbf16>,
      %c44_270 = arith.constant 44 : index
      %c0_271 = arith.constant 0 : index
      %202 = vector.load %arg10[%c44_270, %c0_271] : memref<50x128xbf16, #tpu.memory_space<vmem>>, vector<2x128xbf16>
      %c0_272 = arith.constant 0 : index
      %c2816 = arith.constant 2816 : index
      %203 = vector.load %arg11[%c0_272, %c2816] : memref<2x3200xbf16, #tpu.memory_space<vmem>>, vector<2x128xbf16>
      tpu.vector_store %arg11[%c0_272, %c2816], %202 {strides = array<i32>} : memref<2x3200xbf16, #tpu.memory_space<vmem>>, vector<2x128xbf16>,
      %c46_273 = arith.constant 46 : index
      %c0_274 = arith.constant 0 : index
      %204 = vector.load %arg10[%c46_273, %c0_274] : memref<50x128xbf16, #tpu.memory_space<vmem>>, vector<2x128xbf16>
      %c0_275 = arith.constant 0 : index
      %c2944 = arith.constant 2944 : index
      %205 = vector.load %arg11[%c0_275, %c2944] : memref<2x3200xbf16, #tpu.memory_space<vmem>>, vector<2x128xbf16>
      tpu.vector_store %arg11[%c0_275, %c2944], %204 {strides = array<i32>} : memref<2x3200xbf16, #tpu.memory_space<vmem>>, vector<2x128xbf16>,
      %c48_276 = arith.constant 48 : index
      %c0_277 = arith.constant 0 : index
      %206 = vector.load %arg10[%c48_276, %c0_277] : memref<50x128xbf16, #tpu.memory_space<vmem>>, vector<2x128xbf16>
      %c0_278 = arith.constant 0 : index
      %c3072 = arith.constant 3072 : index
      %207 = vector.load %arg11[%c0_278, %c3072] : memref<2x3200xbf16, #tpu.memory_space<vmem>>, vector<2x128xbf16>
      tpu.vector_store %arg11[%c0_278, %c3072], %206 {strides = array<i32>} : memref<2x3200xbf16, #tpu.memory_space<vmem>>, vector<2x128xbf16>,
    } else {
    }
    %c0 = arith.constant 0 : index
    %c0_1 = arith.constant 0 : index
    %3 = vector.load %arg11[%c0, %c0_1] : memref<2x3200xbf16, #tpu.memory_space<vmem>>, vector<2x3200xbf16>
    %c0_2 = arith.constant 0 : index
    %c0_3 = arith.constant 0 : index
    %4 = vector.load %arg5[%c0_2, %c0_3] : memref<3200x128xbf16, #tpu.memory_space<vmem>>, vector<3200x128xbf16>
    %cst = arith.constant dense<0.000000e+00> : vector<2x128xf32>
    %5 = tpu.matmul %3, %4, %cst {dimension_numbers = #tpu.dot_dimension_numbers<[1], [0], [0], [1], [0, 0, 1, 1], [], []>} : vector<2x3200xbf16>, vector<3200x128xbf16>, vector<2x128xf32> -> vector<2x128xf32>
    %c0_4 = arith.constant 0 : index
    %c0_5 = arith.constant 0 : index
    %6 = vector.load %arg6[%c0_4, %c0_5] : memref<1x128xf32, #tpu.memory_space<vmem>>, vector<1x128xf32>
    %7 = vector.broadcast %6 : vector<1x128xf32> to vector<2x128xf32>
    %8 = arith.addf %5, %7 : vector<2x128xf32>
    %cst_6 = arith.constant 0.000000e+00 : f32
    %9 = vector.broadcast %cst_6 : f32 to vector<2x128xf32>
    %10 = arith.maximumf %8, %9 : vector<2x128xf32>
    %cst_7 = arith.constant 1.000000e+00 : f32
    %11 = vector.broadcast %cst_7 : f32 to vector<2x128xf32>
    %12 = arith.mulf %10, %11 : vector<2x128xf32>
    %13 = arith.truncf %12 : vector<2x128xf32> to vector<2x128xbf16>
    %c0_8 = arith.constant 0 : index
    %c0_9 = arith.constant 0 : index
    %14 = vector.load %arg7[%c0_8, %c0_9] : memref<128x128xbf16, #tpu.memory_space<vmem>>, vector<128x128xbf16>
    %cst_10 = arith.constant dense<0.000000e+00> : vector<2x128xf32>
    %15 = tpu.matmul %13, %14, %cst_10 {dimension_numbers = #tpu.dot_dimension_numbers<[1], [0], [0], [1], [0, 0, 1, 1], [], []>} : vector<2x128xbf16>, vector<128x128xbf16>, vector<2x128xf32> -> vector<2x128xf32>
    %c0_i32_11 = arith.constant 0 : i32
    %16 = arith.cmpi eq, %arg1, %c0_i32_11 : i32
    %17 = arith.extui %16 : i1 to i32
    %c0_i32_12 = arith.constant 0 : i32
    %18 = arith.cmpi ne, %17, %c0_i32_12 : i32
    scf.if %18 {
      %cst_19 = arith.constant 0.000000e+00 : f32
      %23 = vector.broadcast %cst_19 : f32 to vector<1x2x128xf32>
      %c0_20 = arith.constant 0 : index
      %c0_21 = arith.constant 0 : index
      %c0_22 = arith.constant 0 : index
      %24 = vector.load %arg8[%c0_20, %c0_21, %c0_22] : memref<1x2x128xf32, #tpu.memory_space<vmem>>, vector<1x2x128xf32>
      tpu.vector_store %arg8[%c0_20, %c0_21, %c0_22], %23 {strides = array<i32>} : memref<1x2x128xf32, #tpu.memory_space<vmem>>, vector<1x2x128xf32>,
    } else {
    }
    %c0_13 = arith.constant 0 : index
    %c0_14 = arith.constant 0 : index
    %c0_15 = arith.constant 0 : index
    %19 = vector.load %arg8[%c0_13, %c0_14, %c0_15] : memref<1x2x128xf32, #tpu.memory_space<vmem>>, vector<1x2x128xf32>
    %20 = vector.shape_cast %15 : vector<2x128xf32> to vector<1x2x128xf32>
    %21 = arith.addf %19, %20 : vector<1x2x128xf32>
    %c0_16 = arith.constant 0 : index
    %c0_17 = arith.constant 0 : index
    %c0_18 = arith.constant 0 : index
    %22 = vector.load %arg8[%c0_16, %c0_17, %c0_18] : memref<1x2x128xf32, #tpu.memory_space<vmem>>, vector<1x2x128xf32>
    tpu.vector_store %arg8[%c0_16, %c0_17, %c0_18], %21 {strides = array<i32>} : memref<1x2x128xf32, #tpu.memory_space<vmem>>, vector<1x2x128xf32>,
    return
  }
  func.func @transform_0(%arg0: i32, %arg1: i32) -> (i32, i32, i32, i32) {
    %c0_i32 = arith.constant 0 : i32
    %c0_i32_0 = arith.constant 0 : i32
    %c0_i32_1 = arith.constant 0 : i32
    %c0_i32_2 = arith.constant 0 : i32
    %c0_i32_3 = arith.constant 0 : i32
    return %c0_i32, %c0_i32_0, %c0_i32_1, %c0_i32_2 : i32, i32, i32, i32
  }
  func.func @transform_1(%arg0: i32, %arg1: i32) -> (i32, i32) {
    %c0_i32 = arith.constant 0 : i32
    %c0_i32_0 = arith.constant 0 : i32
    %c0_i32_1 = arith.constant 0 : i32
    return %c0_i32, %c0_i32_0 : i32, i32
  }
  func.func @transform_2(%arg0: i32, %arg1: i32) -> (i32, i32) {
    %c0_i32 = arith.constant 0 : i32
    %c0_i32_0 = arith.constant 0 : i32
    %c0_i32_1 = arith.constant 0 : i32
    return %c0_i32, %c0_i32_0 : i32, i32
  }
  func.func @transform_3(%arg0: i32, %arg1: i32) -> (i32, i32) {
    %c3_i32 = arith.constant 3 : i32
    %0 = arith.muli %arg0, %c3_i32 : i32
    %1 = arith.addi %0, %arg1 : i32
    %c0_i32 = arith.constant 0 : i32
    %c0_i32_0 = arith.constant 0 : i32
    return %c0_i32, %1 : i32, i32
  }
  func.func @transform_4(%arg0: i32, %arg1: i32) -> (i32, i32) {
    %c3_i32 = arith.constant 3 : i32
    %0 = arith.muli %arg0, %c3_i32 : i32
    %1 = arith.addi %0, %arg1 : i32
    %c0_i32 = arith.constant 0 : i32
    %c0_i32_0 = arith.constant 0 : i32
    return %c0_i32, %1 : i32, i32
  }
  func.func @transform_5(%arg0: i32, %arg1: i32) -> (i32, i32) {
    %c3_i32 = arith.constant 3 : i32
    %0 = arith.muli %arg0, %c3_i32 : i32
    %1 = arith.addi %0, %arg1 : i32
    %c0_i32 = arith.constant 0 : i32
    %c0_i32_0 = arith.constant 0 : i32
    return %1, %c0_i32 : i32, i32
  }
  func.func @transform_6(%arg0: i32, %arg1: i32) -> (i32, i32, i32) {
    %c0_i32 = arith.constant 0 : i32
    %c0_i32_0 = arith.constant 0 : i32
    %c0_i32_1 = arith.constant 0 : i32
    return %arg0, %c0_i32, %c0_i32_0 : i32, i32, i32
  }
}

</mosaic_0001>

<llo_original>
// kernel: inception_aux_forward.1
$region0: #{inception_aux_forward.1}
  #allocation0 [shape = 'u32[]', space=smem, size = 0x4, offset = 0x4, fixed_abs, tag = 'smem constant byte address 0x4 - core index']
  #allocation1 [shape = 'u32[144,128]{1,0:T(1,128)}', space=vmem, size = 0x12000, scoped, tag = 'internal scratch']
  #allocation2 [shape = 'f32[50,8]{1,0:T(8,128)}', space=vmem, size = 0x7000, scoped, tag = 'scratch operand']
  #allocation3 [shape = 'bf16[50,128]{1,0:T(8,128)(2,1)}', space=vmem, size = 0x3800, scoped, tag = 'scratch operand']
  #allocation4 [shape = 'bf16[2,3200]{1,0:T(2,128)(2,1)}', space=vmem, size = 0x3200, scoped, tag = 'scratch operand']
  %s0 = inlined_call_operand.vmem [shape: f32[2,17,17,8], index: 0, kind: input, shape index: {}]
  %s1 = inlined_call_operand.hbm [shape: f32[8,128], index: 1, kind: input, shape index: {}]
  %s2 = inlined_call_operand.hbm [shape: f32[1,128], index: 2, kind: input, shape index: {}]
  %s3 = inlined_call_operand.hbm [shape: bf16[3200,768], index: 3, kind: input, shape index: {}]
  %s4 = inlined_call_operand.hbm [shape: f32[1,768], index: 4, kind: input, shape index: {}]
  %s5 = inlined_call_operand.hbm [shape: bf16[768,128], index: 5, kind: input, shape index: {}]
  %s6 = inlined_call_operand.vmem [shape: f32[2,2,128], index: 6, kind: output, shape index: {}]
  %s7 = sld [smem:[#allocation0]]
  $region85: #{inception_aux_forward.1} parent=0
    _
  %s9 = ssub.s32 1, %s7
  %s10 = scalar_select 0, %s9, %s7
  $region1: #{inception_aux_forward.1} parent=0
    #allocation5 [shape = 'u8[4096]{0}', space=vmem, size = 0x1000, scoped, tag = 'input window, operand 1, single buffered']
    #allocation6 [shape = 's32[2]{0}', space=sflag, size = 0x8, scoped, tag = 'scoped memory for inception_aux_forward.1']
    #allocation7 [shape = 'u8[512]{0}', space=vmem, size = 0x400, scoped, tag = 'input window, operand 2, single buffered']
    #allocation8 [shape = 's32[1]{0}', space=sflag, size = 0x4, scoped, tag = 'scoped memory for inception_aux_forward.1']
    #allocation9 [shape = 'u8[1638400]{0}', space=vmem, size = 0x190000, scoped, tag = 'input window, operand 3']
    #allocation10 [shape = 'u8[1024]{0}', space=vmem, size = 0x400, scoped, tag = 'input window, operand 4']
    #allocation11 [shape = 'u8[65536]{0}', space=vmem, size = 0x10000, scoped, tag = 'input window, operand 5']
    %11 = vsyncpa [#allocation6], 0
    %12 = vsyncpa [#allocation8], 0
    loop: start=0, step=1, limit=8
    $region2: #{inception_aux_forward.1} parent=1 // loop_pre_header
      _
    $region3: #{inception_aux_forward.1} parent=1 // loop_header
      %s14 = sphi 0, %s18
      %p15 = scmp.ge.s32.totalorder %s14, 8
      %s21 = sphi 0, %s33
      %s22 = sphi 0, %s29
      %s23 = sphi 0, %s21
      %s24 = sphi 0, %s22
      %s25 = sphi 0, %s23
      %s26 = sphi 0, %s24
      %s34 = sphi 0, %s34
      %s36 = sphi 0, %s34
      %s37 = sphi 0, %s36
      %s51 = sphi 0, %s37
      %s55 = sphi 0, %s55
      %s57 = sphi 0, %s55
      %s58 = sphi 0, %s57
      %s72 = sphi 0, %s58
      %s76 = sphi 0, %s76
      %s78 = sphi 0, %s76
      %s79 = sphi 0, %s78
      %s93 = sphi 0, %s79
      %s103 = sphi 0, %s105
      %s106 = sphi 0, %s103
      %s107 = sphi 0, %s106
      %s123 = sphi 0, %s107
      %s133 = sphi 0, %s135
      %s136 = sphi 0, %s133
      %s137 = sphi 0, %s136
      %s153 = sphi 0, %s137
      %s163 = sphi 0, %s165
      %s166 = sphi 0, %s163
      %s167 = sphi 0, %s166
      %s183 = sphi 0, %s167
      %s189 = sphi 0, %s191
      %s192 = sphi 0, %s189
      %s193 = sphi 0, %s192
      %s209 = sphi 0, %s193
    $region4: #{inception_aux_forward.1} parent=1 // loop_header_branch
      %17 = sbr.rel (%p15) target = $region8
    $region5: #{inception_aux_forward.1} parent=1 // loop_body
      %s19 = ssub.s32 %s14, 1
      %s20 = ssub.s32 %s14, 2
      %s27 = sadd.s32 1, %s22
      %p28 = scmp.ge.s32.totalorder %s27, 3
      %s29 = scalar_select %p28, 0, %s27
      %s30 = sadd.s32 1, %s21
      %s31 = scalar_select %p28, %s30, %s21
      %p32 = scmp.ge.s32.totalorder %s31, 2
      %s33 = scalar_select %p32, 0, %s31
      %s35 = sadd.s32 %s34, 1
      %p38 = scmp.eq.s32.totalorder %s14, 5
      %p39 = scmp.ne.s32.totalorder %s34, %s36
      %p40 = scmp.eq.s32.totalorder %s14, 0
      %p41 = por %p39, %p40
      %p42 = scmp.ne.s32.totalorder %s34, %s36
      %p43 = scmp.eq.s32.totalorder %s19, 5
      %p44 = por %p42, %p43
      %p45 = scmp.ne.s32.totalorder %s36, %s37
      %p46 = scmp.eq.s32.totalorder %s19, 0
      %p47 = por %p45, %p46
      %p48 = scmp.ne.s32.totalorder %s36, %s37
      %p49 = scmp.eq.s32.totalorder %s20, 5
      %p50 = por %p48, %p49
      %p52 = scmp.ne.s32.totalorder %s37, %s51
      %p53 = scmp.eq.s32.totalorder %s20, 0
      %p54 = por %p52, %p53
      %s56 = sadd.s32 %s55, 1
      %p59 = scmp.eq.s32.totalorder %s14, 5
      %p60 = scmp.ne.s32.totalorder %s55, %s57
      %p61 = scmp.eq.s32.totalorder %s14, 0
      %p62 = por %p60, %p61
      %p63 = scmp.ne.s32.totalorder %s55, %s57
      %p64 = scmp.eq.s32.totalorder %s19, 5
      %p65 = por %p63, %p64
      %p66 = scmp.ne.s32.totalorder %s57, %s58
      %p67 = scmp.eq.s32.totalorder %s19, 0
      %p68 = por %p66, %p67
      %p69 = scmp.ne.s32.totalorder %s57, %s58
      %p70 = scmp.eq.s32.totalorder %s20, 5
      %p71 = por %p69, %p70
      %p73 = scmp.ne.s32.totalorder %s58, %s72
      %p74 = scmp.eq.s32.totalorder %s20, 0
      %p75 = por %p73, %p74
      %s77 = sadd.s32 %s76, 1
      %p80 = scmp.eq.s32.totalorder %s14, 5
      %p81 = scmp.ne.s32.totalorder %s76, %s78
      %p82 = scmp.eq.s32.totalorder %s14, 0
      %p83 = por %p81, %p82
      %p84 = scmp.ne.s32.totalorder %s76, %s78
      %p85 = scmp.eq.s32.totalorder %s19, 5
      %p86 = por %p84, %p85
      %p87 = scmp.ne.s32.totalorder %s78, %s79
      %p88 = scmp.eq.s32.totalorder %s19, 0
      %p89 = por %p87, %p88
      %p90 = scmp.ne.s32.totalorder %s78, %s79
      %p91 = scmp.eq.s32.totalorder %s20, 5
      %p92 = por %p90, %p91
      %p94 = scmp.ne.s32.totalorder %s79, %s93
      %p95 = scmp.eq.s32.totalorder %s20, 0
      %p96 = por %p94, %p95
      %s97 = smul.u32 %s21, 3
      %s98 = sadd.s32 %s97, %s22
      %s99 = smul.u32 %s33, 3
      %s100 = sadd.s32 %s99, %s29
      %s101 = ssub.s32 %s98, %s100
      %p102 = scmp.eq.s32.totalorder %s101, 0
      %s104 = sadd.s32 %s103, 1
      %s105 = scalar_select %p102, %s103, %s104
      %p108 = pneg %p102
      %p109 = scmp.eq.s32.totalorder %s14, 5
      %p110 = por %p108, %p109
      %p111 = scmp.ne.s32.totalorder %s103, %s106
      %p112 = scmp.eq.s32.totalorder %s14, 0
      %p113 = por %p111, %p112
      %p114 = scmp.ne.s32.totalorder %s103, %s106
      %p115 = scmp.eq.s32.totalorder %s19, 5
      %p116 = por %p114, %p115
      %p117 = scmp.ne.s32.totalorder %s106, %s107
      %p118 = scmp.eq.s32.totalorder %s19, 0
      %p119 = por %p117, %p118
      %p120 = scmp.ne.s32.totalorder %s106, %s107
      %p121 = scmp.eq.s32.totalorder %s20, 5
      %p122 = por %p120, %p121
      %p124 = scmp.ne.s32.totalorder %s107, %s123
      %p125 = scmp.eq.s32.totalorder %s20, 0
      %p126 = por %p124, %p125
      %s127 = smul.u32 %s21, 3
      %s128 = sadd.s32 %s127, %s22
      %s129 = smul.u32 %s33, 3
      %s130 = sadd.s32 %s129, %s29
      %s131 = ssub.s32 %s128, %s130
      %p132 = scmp.eq.s32.totalorder %s131, 0
      %s134 = sadd.s32 %s133, 1
      %s135 = scalar_select %p132, %s133, %s134
      %p138 = pneg %p132
      %p139 = scmp.eq.s32.totalorder %s14, 5
      %p140 = por %p138, %p139
      %p141 = scmp.ne.s32.totalorder %s133, %s136
      %p142 = scmp.eq.s32.totalorder %s14, 0
      %p143 = por %p141, %p142
      %p144 = scmp.ne.s32.totalorder %s133, %s136
      %p145 = scmp.eq.s32.totalorder %s19, 5
      %p146 = por %p144, %p145
      %p147 = scmp.ne.s32.totalorder %s136, %s137
      %p148 = scmp.eq.s32.totalorder %s19, 0
      %p149 = por %p147, %p148
      %p150 = scmp.ne.s32.totalorder %s136, %s137
      %p151 = scmp.eq.s32.totalorder %s20, 5
      %p152 = por %p150, %p151
      %p154 = scmp.ne.s32.totalorder %s137, %s153
      %p155 = scmp.eq.s32.totalorder %s20, 0
      %p156 = por %p154, %p155
      %s157 = smul.u32 %s21, 3
      %s158 = sadd.s32 %s157, %s22
      %s159 = smul.u32 %s33, 3
      %s160 = sadd.s32 %s159, %s29
      %s161 = ssub.s32 %s158, %s160
      %p162 = scmp.eq.s32.totalorder %s161, 0
      %s164 = sadd.s32 %s163, 1
      %s165 = scalar_select %p162, %s163, %s164
      %p168 = pneg %p162
      %p169 = scmp.eq.s32.totalorder %s14, 5
      %p170 = por %p168, %p169
      %p171 = scmp.ne.s32.totalorder %s163, %s166
      %p172 = scmp.eq.s32.totalorder %s14, 0
      %p173 = por %p171, %p172
      %p174 = scmp.ne.s32.totalorder %s163, %s166
      %p175 = scmp.eq.s32.totalorder %s19, 5
      %p176 = por %p174, %p175
      %p177 = scmp.ne.s32.totalorder %s166, %s167
      %p178 = scmp.eq.s32.totalorder %s19, 0
      %p179 = por %p177, %p178
      %p180 = scmp.ne.s32.totalorder %s166, %s167
      %p181 = scmp.eq.s32.totalorder %s20, 5
      %p182 = por %p180, %p181
      %p184 = scmp.ne.s32.totalorder %s167, %s183
      %p185 = scmp.eq.s32.totalorder %s20, 0
      %p186 = por %p184, %p185
      %s187 = ssub.s32 %s21, %s33
      %p188 = scmp.eq.s32.totalorder %s187, 0
      %s190 = sadd.s32 %s189, 1
      %s191 = scalar_select %p188, %s189, %s190
      %p194 = pneg %p188
      %p195 = scmp.eq.s32.totalorder %s14, 5
      %p196 = por %p194, %p195
      %p197 = scmp.ne.s32.totalorder %s189, %s192
      %p198 = scmp.eq.s32.totalorder %s14, 0
      %p199 = por %p197, %p198
      %p200 = scmp.ne.s32.totalorder %s189, %s192
      %p201 = scmp.eq.s32.totalorder %s19, 5
      %p202 = por %p200, %p201
      %p203 = scmp.ne.s32.totalorder %s192, %s193
      %p204 = scmp.eq.s32.totalorder %s19, 0
      %p205 = por %p203, %p204
      %p206 = scmp.ne.s32.totalorder %s192, %s193
      %p207 = scmp.eq.s32.totalorder %s20, 5
      %p208 = por %p206, %p207
      %p210 = scmp.ne.s32.totalorder %s193, %s209
      %p211 = scmp.eq.s32.totalorder %s20, 0
      %p212 = por %p210, %p211
      %p213 = scmp.le.s32.totalorder 1, %s14
      %p214 = scmp.lt.s32.totalorder %s14, 7
      %p215 = pnand %p213, %p214
      %p216 = pneg %p215
      // Predicated region
      $region9: #{inception_aux_forward.1} parent=5 // pred_check
        _
      $region10: #{inception_aux_forward.1} parent=5 // pred_check_branch
        %218 = sbr.rel (%p215) target = $region12
      $region11: #{inception_aux_forward.1} parent=5 // pred_region
        %s219 = ssub.s32 %s14, 1
        // Predicated region
        $region13: #{inception_aux_forward.1} parent=11 // pred_check
          %p220 = pneg %p47
        $region14: #{inception_aux_forward.1} parent=11 // pred_check_branch
          %222 = sbr.rel (%p220) target = $region16
        $region15: #{inception_aux_forward.1} parent=11 // pred_region
          _
        $region16: #{inception_aux_forward.1} parent=11 // pred_fallthru
          _
        // Predicated region
        $region17: #{inception_aux_forward.1} parent=11 // pred_check
          %p223 = pneg %p68
        $region18: #{inception_aux_forward.1} parent=11 // pred_check_branch
          %225 = sbr.rel (%p223) target = $region20
        $region19: #{inception_aux_forward.1} parent=11 // pred_region
          %s227 = ssub.s32 128, 128
          %228 = vsyncadd [#allocation6], %s227
          %s230 = sshll.u32 [#allocation5], 4
          %s231 = int_to_ptr.vmem [resolvable:$true] %s230
          %233 = dma.hbm_to_vmem [thread:$0]  %s1, 128, %s231, [#allocation6]
        $region20: #{inception_aux_forward.1} parent=11 // pred_fallthru
          _
        // Predicated region
        $region21: #{inception_aux_forward.1} parent=11 // pred_check
          %p234 = pneg %p89
        $region22: #{inception_aux_forward.1} parent=11 // pred_check_branch
          %236 = sbr.rel (%p234) target = $region24
        $region23: #{inception_aux_forward.1} parent=11 // pred_region
          %s238 = ssub.s32 16, 16
          %239 = vsyncadd [#allocation8], %s238
          %s241 = sshll.u32 [#allocation7], 4
          %s242 = int_to_ptr.vmem [resolvable:$true] %s241
          %244 = dma.hbm_to_vmem [thread:$0]  %s2, 16, %s242, [#allocation8]
        $region24: #{inception_aux_forward.1} parent=11 // pred_fallthru
          _
      $region12: #{inception_aux_forward.1} parent=5 // pred_fallthru
        _
      %p245 = scmp.lt.s32.totalorder %s14, 6
      // Predicated region
      $region25: #{inception_aux_forward.1} parent=5 // pred_check
        %p246 = pneg %p245
      $region26: #{inception_aux_forward.1} parent=5 // pred_check_branch
        %248 = sbr.rel (%p246) target = $region28
      $region27: #{inception_aux_forward.1} parent=5 // pred_region
        // Predicated region
        $region29: #{inception_aux_forward.1} parent=27 // pred_check
          %p249 = pneg %p113
        $region30: #{inception_aux_forward.1} parent=27 // pred_check_branch
          %251 = sbr.rel (%p249) target = $region32
        $region31: #{inception_aux_forward.1} parent=27 // pred_region
          %s252 = sand.u32 %s14, 1
          %s253 = scalar_lea.sflag [#allocation6], %s252
          %s254 = sand.u32 %s103, 1
          %s255 = smul.addr %s254, 1600
          %s256 = scalar_lea.vmem [#allocation9], %s255
          %s257 = smul.u32 %s21, 3
          %s258 = sadd.s32 %s257, %s22
          %s260 = ssub.s32 25600, 25600
          %261 = vsyncadd %s253, %s260
          %s262 = smul.addr %s258, 64
          %s263 = scalar_lea.hbm %s3, %s262
          %s264 = sshll.u32 %s256, 4
          %s265 = int_to_ptr.vmem [resolvable:$true] %s264
          %270 = dma.hbm_to_vmem [thread:$0]  %s263, 25600, %s265, %s253, 384, 64, 4
        $region32: #{inception_aux_forward.1} parent=27 // pred_fallthru
          _
        // Predicated region
        $region33: #{inception_aux_forward.1} parent=27 // pred_check
          %p271 = pneg %p143
        $region34: #{inception_aux_forward.1} parent=27 // pred_check_branch
          %273 = sbr.rel (%p271) target = $region36
        $region35: #{inception_aux_forward.1} parent=27 // pred_region
          %s274 = sand.u32 %s14, 1
          %s275 = scalar_lea.sflag [#allocation6], %s274
          %s276 = sand.u32 %s133, 1
          %s277 = scalar_lea.vmem [#allocation10], %s276
          %s278 = smul.u32 %s21, 3
          %s279 = sadd.s32 %s278, %s22
          %s281 = ssub.s32 16, 16
          %282 = vsyncadd %s275, %s281
          %s283 = smul.addr %s279, 16
          %s284 = scalar_lea.hbm %s4, %s283
          %s286 = sshll.u32 %s277, 4
          %s287 = int_to_ptr.vmem [resolvable:$true] %s286
          %289 = dma.hbm_to_vmem [thread:$0]  %s284, 16, %s287, %s275
        $region36: #{inception_aux_forward.1} parent=27 // pred_fallthru
          _
        // Predicated region
        $region37: #{inception_aux_forward.1} parent=27 // pred_check
          %p290 = pneg %p173
        $region38: #{inception_aux_forward.1} parent=27 // pred_check_branch
          %292 = sbr.rel (%p290) target = $region40
        $region39: #{inception_aux_forward.1} parent=27 // pred_region
          %s293 = sand.u32 %s14, 1
          %s294 = scalar_lea.sflag [#allocation6], %s293
          %s295 = sand.u32 %s163, 1
          %s296 = smul.addr %s295, 64
          %s297 = scalar_lea.vmem [#allocation11], %s296
          %s298 = smul.u32 %s21, 3
          %s299 = sadd.s32 %s298, %s22
          %s300 = smul.u32 16, %s299
          %s302 = ssub.s32 1024, 1024
          %303 = vsyncadd %s294, %s302
          %s304 = smul.addr %s300, 64
          %s305 = scalar_lea.hbm %s5, %s304
          %s306 = sshll.u32 %s297, 4
          %s307 = int_to_ptr.vmem [resolvable:$true] %s306
          %312 = dma.hbm_to_vmem [thread:$0]  %s305, 1024, %s307, %s294, 64, 64, 4
        $region40: #{inception_aux_forward.1} parent=27 // pred_fallthru
          _
      $region28: #{inception_aux_forward.1} parent=5 // pred_fallthru
        _
      %p313 = scmp.le.s32.totalorder 1, %s14
      %p314 = scmp.lt.s32.totalorder %s14, 7
      %p315 = pnand %p313, %p314
      %p316 = pneg %p315
      // Predicated region
      $region41: #{inception_aux_forward.1} parent=5 // pred_check
        _
      $region42: #{inception_aux_forward.1} parent=5 // pred_check_branch
        %318 = sbr.rel (%p315) target = $region44
      $region43: #{inception_aux_forward.1} parent=5 // pred_region
        %s319 = ssub.s32 %s14, 1
        // Predicated region
        $region45: #{inception_aux_forward.1} parent=43 // pred_check
          %p320 = pneg %p68
        $region46: #{inception_aux_forward.1} parent=43 // pred_check_branch
          %322 = sbr.rel (%p320) target = $region48
        $region47: #{inception_aux_forward.1} parent=43 // pred_region
          %323 = dma.done [#allocation6], 128
        $region48: #{inception_aux_forward.1} parent=43 // pred_fallthru
          _
        // Predicated region
        $region49: #{inception_aux_forward.1} parent=43 // pred_check
          %p324 = pneg %p89
        $region50: #{inception_aux_forward.1} parent=43 // pred_check_branch
          %326 = sbr.rel (%p324) target = $region52
        $region51: #{inception_aux_forward.1} parent=43 // pred_region
          %327 = dma.done [#allocation8], 16
        $region52: #{inception_aux_forward.1} parent=43 // pred_fallthru
          _
        %s328 = sand.u32 %s19, 1
        %s329 = scalar_lea.sflag [#allocation6], %s328
        %s330 = sand.u32 %s106, 1
        %s331 = smul.addr %s330, 1600
        %s332 = scalar_lea.vmem [#allocation9], %s331
        // Predicated region
        $region53: #{inception_aux_forward.1} parent=43 // pred_check
          %p333 = pneg %p119
        $region54: #{inception_aux_forward.1} parent=43 // pred_check_branch
          %335 = sbr.rel (%p333) target = $region56
        $region55: #{inception_aux_forward.1} parent=43 // pred_region
          %336 = dma.done %s329, 25600
        $region56: #{inception_aux_forward.1} parent=43 // pred_fallthru
          _
        %s337 = sand.u32 %s19, 1
        %s338 = scalar_lea.sflag [#allocation6], %s337
        %s339 = sand.u32 %s136, 1
        %s340 = scalar_lea.vmem [#allocation10], %s339
        // Predicated region
        $region57: #{inception_aux_forward.1} parent=43 // pred_check
          %p341 = pneg %p149
        $region58: #{inception_aux_forward.1} parent=43 // pred_check_branch
          %343 = sbr.rel (%p341) target = $region60
        $region59: #{inception_aux_forward.1} parent=43 // pred_region
          %344 = dma.done %s338, 16
        $region60: #{inception_aux_forward.1} parent=43 // pred_fallthru
          _
        %s345 = sand.u32 %s19, 1
        %s346 = scalar_lea.sflag [#allocation6], %s345
        %s347 = sand.u32 %s166, 1
        %s348 = smul.addr %s347, 64
        %s349 = scalar_lea.vmem [#allocation11], %s348
        // Predicated region
        $region61: #{inception_aux_forward.1} parent=43 // pred_check
          %p350 = pneg %p179
        $region62: #{inception_aux_forward.1} parent=43 // pred_check_branch
          %352 = sbr.rel (%p350) target = $region64
        $region63: #{inception_aux_forward.1} parent=43 // pred_region
          %353 = dma.done %s346, 1024
        $region64: #{inception_aux_forward.1} parent=43 // pred_fallthru
          _
        %p354 = pneg %p47
        %p355 = pneg %p44
        %p356 = pneg %p68
        %p357 = pneg %p65
        %p358 = pneg %p89
        %p359 = pneg %p86
        %s360 = sand.u32 %s19, 1
        %s361 = scalar_lea.sflag [#allocation6], %s360
        %s362 = sand.u32 %s106, 1
        %s363 = smul.addr %s362, 1600
        %s364 = scalar_lea.vmem [#allocation9], %s363
        %p365 = pneg %p119
        %p366 = pneg %p116
        %s367 = sand.u32 %s19, 1
        %s368 = scalar_lea.sflag [#allocation6], %s367
        %s369 = sand.u32 %s136, 1
        %s370 = scalar_lea.vmem [#allocation10], %s369
        %p371 = pneg %p149
        %p372 = pneg %p146
        %s373 = sand.u32 %s19, 1
        %s374 = scalar_lea.sflag [#allocation6], %s373
        %s375 = sand.u32 %s166, 1
        %s376 = smul.addr %s375, 64
        %s377 = scalar_lea.vmem [#allocation11], %s376
        %p378 = pneg %p179
        %p379 = pneg %p176
        %p380 = pneg %p205
        %p381 = pneg %p202
        %p382 = scmp.lt.s32.totalorder %s23, 1
        %s383 = scalar_select %p382, %s23, 1
        %s384 = smul.addr %s383, 2
        %s385 = scalar_lea.vmem %s6, %s384
        %s386 = smul.u32 %s23, 3
        %s387 = sadd.s32 %s386, %s24
        %s388 = smul.u32 %s23, 3
        %s389 = sadd.s32 %s388, %s24
        %s390 = smul.u32 %s23, 3
        %s391 = sadd.s32 %s390, %s24
        %s392 = smul.u32 16, %s391
        %p393 = scmp.lt.s32.totalorder %s23, 1
        %s394 = scalar_select %p393, %s23, 1
        %s395 = smul.addr %s394, 2
        %s396 = scalar_lea.vmem %s6, %s395
        %p398 = scmp.eq.s32.totalorder %s24, 0
        // Predicated region
        $region65: #{inception_aux_forward.1} parent=43 // pred_check
          %p399 = pneg %p398
        $region66: #{inception_aux_forward.1} parent=43 // pred_check_branch
          %401 = sbr.rel (%p399) target = $region68
        $region67: #{inception_aux_forward.1} parent=43 // pred_region
          %v402 = vld [vmem:[%s0] sm:$0x1f]
          %v403 = vld [vmem:[%s0 + $0x18] sm:$0x1f]
          %v404 = vld [vmem:[%s0 + $0x30] sm:$0x1f]
          %v405 = vld [vmem:[%s0 + $0x48] sm:$0x1f]
          %v406 = vld [vmem:[%s0 + $0x60] sm:$0x1f]
          %v407 = vld [vmem:[%s0 + $0x198] sm:$0x1f]
          %v408 = vld [vmem:[%s0 + $0x1b0] sm:$0x1f]
          %v409 = vld [vmem:[%s0 + $0x1c8] sm:$0x1f]
          %v410 = vld [vmem:[%s0 + $0x1e0] sm:$0x1f]
          %v411 = vld [vmem:[%s0 + $0x1f8] sm:$0x1f]
          %vm412 = vcmask 61440
          %v413 = vsel %vm412, %v402, 0.0
          %v414 = vsel %vm412, %v403, 0.0
          %v415 = vadd.f32 %v413, %v414
          %v416 = vsel %vm412, %v404, 0.0
          %v417 = vadd.f32 %v415, %v416
          %v418 = vsel %vm412, %v405, 0.0
          %v419 = vadd.f32 %v417, %v418
          %v420 = vsel %vm412, %v406, 0.0
          %v421 = vadd.f32 %v419, %v420
          %v422 = vrot.slane %v421, 4
          %v423 = vadd.f32 %v421, %v422
          %v424 = vrot.slane %v423, 2
          %v425 = vadd.f32 %v423, %v424
          %v426 = vrot.slane %v425, 1
          %v427 = vadd.f32 %v425, %v426
          %v428 = vsel %vm412, %v407, 0.0
          %v429 = vsel %vm412, %v408, 0.0
          %v430 = vadd.f32 %v428, %v429
          %v431 = vsel %vm412, %v409, 0.0
          %v432 = vadd.f32 %v430, %v431
          %v433 = vsel %vm412, %v410, 0.0
          %v434 = vadd.f32 %v432, %v433
          %v435 = vsel %vm412, %v411, 0.0
          %v436 = vadd.f32 %v434, %v435
          %v437 = vrot.slane %v436, 4
          %v438 = vadd.f32 %v436, %v437
          %v439 = vrot.slane %v438, 2
          %v440 = vadd.f32 %v438, %v439
          %v441 = vrot.slane %v440, 1
          %v442 = vadd.f32 %v440, %v441
          %v443 = vrcp.pop 25.0
          %v444 = vmul.f32 %v427, %v443
          %v445 = vmul.f32 %v442, %v443
          %vm448 = vcmask 1041409
          %v449 = vsel %vm448, %v445, %v444
          %vm451 = vcmask 58368
          %452 = vst.msk [vmem:[#allocation2] sm:$0x3] %vm451, %v449
          %v453 = vld [vmem:[%s0 + $0x3] sm:$0x1f]
          %v454 = vld [vmem:[%s0 + $0x1b] sm:$0x1f]
          %v455 = vld [vmem:[%s0 + $0x33] sm:$0x1f]
          %v456 = vld [vmem:[%s0 + $0x4b] sm:$0x1f]
          %v457 = vld [vmem:[%s0 + $0x63] sm:$0x1f]
          %v458 = vld [vmem:[%s0 + $0x19b] sm:$0x1f]
          %v459 = vld [vmem:[%s0 + $0x1b3] sm:$0x1f]
          %v460 = vld [vmem:[%s0 + $0x1cb] sm:$0x1f]
          %v461 = vld [vmem:[%s0 + $0x1e3] sm:$0x1f]
          %v462 = vld [vmem:[%s0 + $0x1fb] sm:$0x1f]
          %v463 = vsel %vm412, %v453, 0.0
          %v464 = vsel %vm412, %v454, 0.0
          %v465 = vadd.f32 %v463, %v464
          %v466 = vsel %vm412, %v455, 0.0
          %v467 = vadd.f32 %v465, %v466
          %v468 = vsel %vm412, %v456, 0.0
          %v469 = vadd.f32 %v467, %v468
          %v470 = vsel %vm412, %v457, 0.0
          %v471 = vadd.f32 %v469, %v470
          %v472 = vrot.slane %v471, 4
          %v473 = vadd.f32 %v471, %v472
          %v474 = vrot.slane %v473, 2
          %v475 = vadd.f32 %v473, %v474
          %v476 = vrot.slane %v475, 1
          %v477 = vadd.f32 %v475, %v476
          %v478 = vsel %vm412, %v458, 0.0
          %v479 = vsel %vm412, %v459, 0.0
          %v480 = vadd.f32 %v478, %v479
          %v481 = vsel %vm412, %v460, 0.0
          %v482 = vadd.f32 %v480, %v481
          %v483 = vsel %vm412, %v461, 0.0
          %v484 = vadd.f32 %v482, %v483
          %v485 = vsel %vm412, %v462, 0.0
          %v486 = vadd.f32 %v484, %v485
          %v487 = vrot.slane %v486, 4
          %v488 = vadd.f32 %v486, %v487
          %v489 = vrot.slane %v488, 2
          %v490 = vadd.f32 %v488, %v489
          %v491 = vrot.slane %v490, 1
          %v492 = vadd.f32 %v490, %v491
          %v493 = vmul.f32 %v477, %v443
          %v494 = vmul.f32 %v492, %v443
          %v497 = vsel %vm448, %v494, %v493
          %499 = vst.msk [vmem:[#allocation2 + $0x2] sm:$0x3] %vm451, %v497
          %v500 = vld [vmem:[%s0 + $0x6] sm:$0x1f]
          %v501 = vld [vmem:[%s0 + $0x1e] sm:$0x1f]
          %v502 = vld [vmem:[%s0 + $0x36] sm:$0x1f]
          %v503 = vld [vmem:[%s0 + $0x4e] sm:$0x1f]
          %v504 = vld [vmem:[%s0 + $0x66] sm:$0x1f]
          %v505 = vld [vmem:[%s0 + $0x19e] sm:$0x1f]
          %v506 = vld [vmem:[%s0 + $0x1b6] sm:$0x1f]
          %v507 = vld [vmem:[%s0 + $0x1ce] sm:$0x1f]
          %v508 = vld [vmem:[%s0 + $0x1e6] sm:$0x1f]
          %v509 = vld [vmem:[%s0 + $0x1fe] sm:$0x1f]
          %v510 = vsel %vm412, %v500, 0.0
          %v511 = vsel %vm412, %v501, 0.0
          %v512 = vadd.f32 %v510, %v511
          %v513 = vsel %vm412, %v502, 0.0
          %v514 = vadd.f32 %v512, %v513
          %v515 = vsel %vm412, %v503, 0.0
          %v516 = vadd.f32 %v514, %v515
          %v517 = vsel %vm412, %v504, 0.0
          %v518 = vadd.f32 %v516, %v517
          %v519 = vrot.slane %v518, 4
          %v520 = vadd.f32 %v518, %v519
          %v521 = vrot.slane %v520, 2
          %v522 = vadd.f32 %v520, %v521
          %v523 = vrot.slane %v522, 1
          %v524 = vadd.f32 %v522, %v523
          %v525 = vsel %vm412, %v505, 0.0
          %v526 = vsel %vm412, %v506, 0.0
          %v527 = vadd.f32 %v525, %v526
          %v528 = vsel %vm412, %v507, 0.0
          %v529 = vadd.f32 %v527, %v528
          %v530 = vsel %vm412, %v508, 0.0
          %v531 = vadd.f32 %v529, %v530
          %v532 = vsel %vm412, %v509, 0.0
          %v533 = vadd.f32 %v531, %v532
          %v534 = vrot.slane %v533, 4
          %v535 = vadd.f32 %v533, %v534
          %v536 = vrot.slane %v535, 2
          %v537 = vadd.f32 %v535, %v536
          %v538 = vrot.slane %v537, 1
          %v539 = vadd.f32 %v537, %v538
          %v540 = vmul.f32 %v524, %v443
          %v541 = vmul.f32 %v539, %v443
          %v544 = vsel %vm448, %v541, %v540
          %546 = vst.msk [vmem:[#allocation2 + $0x4] sm:$0x3] %vm451, %v544
          %v547 = vld [vmem:[%s0 + $0x9] sm:$0x1f]
          %v548 = vld [vmem:[%s0 + $0x21] sm:$0x1f]
          %v549 = vld [vmem:[%s0 + $0x39] sm:$0x1f]
          %v550 = vld [vmem:[%s0 + $0x51] sm:$0x1f]
          %v551 = vld [vmem:[%s0 + $0x69] sm:$0x1f]
          %v552 = vld [vmem:[%s0 + $0x1a1] sm:$0x1f]
          %v553 = vld [vmem:[%s0 + $0x1b9] sm:$0x1f]
          %v554 = vld [vmem:[%s0 + $0x1d1] sm:$0x1f]
          %v555 = vld [vmem:[%s0 + $0x1e9] sm:$0x1f]
          %v556 = vld [vmem:[%s0 + $0x201] sm:$0x1f]
          %v557 = vsel %vm412, %v547, 0.0
          %v558 = vsel %vm412, %v548, 0.0
          %v559 = vadd.f32 %v557, %v558
          %v560 = vsel %vm412, %v549, 0.0
          %v561 = vadd.f32 %v559, %v560
          %v562 = vsel %vm412, %v550, 0.0
          %v563 = vadd.f32 %v561, %v562
          %v564 = vsel %vm412, %v551, 0.0
          %v565 = vadd.f32 %v563, %v564
          %v566 = vrot.slane %v565, 4
          %v567 = vadd.f32 %v565, %v566
          %v568 = vrot.slane %v567, 2
          %v569 = vadd.f32 %v567, %v568
          %v570 = vrot.slane %v569, 1
          %v571 = vadd.f32 %v569, %v570
          %v572 = vsel %vm412, %v552, 0.0
          %v573 = vsel %vm412, %v553, 0.0
          %v574 = vadd.f32 %v572, %v573
          %v575 = vsel %vm412, %v554, 0.0
          %v576 = vadd.f32 %v574, %v575
          %v577 = vsel %vm412, %v555, 0.0
          %v578 = vadd.f32 %v576, %v577
          %v579 = vsel %vm412, %v556, 0.0
          %v580 = vadd.f32 %v578, %v579
          %v581 = vrot.slane %v580, 4
          %v582 = vadd.f32 %v580, %v581
          %v583 = vrot.slane %v582, 2
          %v584 = vadd.f32 %v582, %v583
          %v585 = vrot.slane %v584, 1
          %v586 = vadd.f32 %v584, %v585
          %v587 = vmul.f32 %v571, %v443
          %v588 = vmul.f32 %v586, %v443
          %v591 = vsel %vm448, %v588, %v587
          %593 = vst.msk [vmem:[#allocation2 + $0x6] sm:$0x3] %vm451, %v591
          %v594 = vld [vmem:[%s0 + $0xc] sm:$0x1f]
          %v595 = vld [vmem:[%s0 + $0x24] sm:$0x1f]
          %v596 = vld [vmem:[%s0 + $0x3c] sm:$0x1f]
          %v597 = vld [vmem:[%s0 + $0x54] sm:$0x1f]
          %v598 = vld [vmem:[%s0 + $0x6c] sm:$0x1f]
          %v599 = vld [vmem:[%s0 + $0x1a4] sm:$0x1f]
          %v600 = vld [vmem:[%s0 + $0x1bc] sm:$0x1f]
          %v601 = vld [vmem:[%s0 + $0x1d4] sm:$0x1f]
          %v602 = vld [vmem:[%s0 + $0x1ec] sm:$0x1f]
          %v603 = vld [vmem:[%s0 + $0x204] sm:$0x1f]
          %v604 = vsel %vm412, %v594, 0.0
          %v605 = vsel %vm412, %v595, 0.0
          %v606 = vadd.f32 %v604, %v605
          %v607 = vsel %vm412, %v596, 0.0
          %v608 = vadd.f32 %v606, %v607
          %v609 = vsel %vm412, %v597, 0.0
          %v610 = vadd.f32 %v608, %v609
          %v611 = vsel %vm412, %v598, 0.0
          %v612 = vadd.f32 %v610, %v611
          %v613 = vrot.slane %v612, 4
          %v614 = vadd.f32 %v612, %v613
          %v615 = vrot.slane %v614, 2
          %v616 = vadd.f32 %v614, %v615
          %v617 = vrot.slane %v616, 1
          %v618 = vadd.f32 %v616, %v617
          %v619 = vsel %vm412, %v599, 0.0
          %v620 = vsel %vm412, %v600, 0.0
          %v621 = vadd.f32 %v619, %v620
          %v622 = vsel %vm412, %v601, 0.0
          %v623 = vadd.f32 %v621, %v622
          %v624 = vsel %vm412, %v602, 0.0
          %v625 = vadd.f32 %v623, %v624
          %v626 = vsel %vm412, %v603, 0.0
          %v627 = vadd.f32 %v625, %v626
          %v628 = vrot.slane %v627, 4
          %v629 = vadd.f32 %v627, %v628
          %v630 = vrot.slane %v629, 2
          %v631 = vadd.f32 %v629, %v630
          %v632 = vrot.slane %v631, 1
          %v633 = vadd.f32 %v631, %v632
          %v634 = vmul.f32 %v618, %v443
          %v635 = vmul.f32 %v633, %v443
          %v638 = vsel %vm448, %v635, %v634
          %640 = vst.msk [vmem:[#allocation2 + $0x8] sm:$0x3] %vm451, %v638
          %s641 = scalar_lea.vmem %s0, 72
          %v642 = vld [vmem:[%s641] sm:$0x1f]
          %v643 = vld [vmem:[%s641 + $0x18] sm:$0x1f]
          %v644 = vld [vmem:[%s641 + $0x30] sm:$0x1f]
          %v645 = vld [vmem:[%s641 + $0x48] sm:$0x1f]
          %v646 = vld [vmem:[%s641 + $0x60] sm:$0x1f]
          %v647 = vld [vmem:[%s641 + $0x198] sm:$0x1f]
          %v648 = vld [vmem:[%s641 + $0x1b0] sm:$0x1f]
          %v649 = vld [vmem:[%s641 + $0x1c8] sm:$0x1f]
          %v650 = vld [vmem:[%s641 + $0x1e0] sm:$0x1f]
          %v651 = vld [vmem:[%s641 + $0x1f8] sm:$0x1f]
          %v652 = vsel %vm412, %v642, 0.0
          %v653 = vsel %vm412, %v643, 0.0
          %v654 = vadd.f32 %v652, %v653
          %v655 = vsel %vm412, %v644, 0.0
          %v656 = vadd.f32 %v654, %v655
          %v657 = vsel %vm412, %v645, 0.0
          %v658 = vadd.f32 %v656, %v657
          %v659 = vsel %vm412, %v646, 0.0
          %v660 = vadd.f32 %v658, %v659
          %v661 = vrot.slane %v660, 4
          %v662 = vadd.f32 %v660, %v661
          %v663 = vrot.slane %v662, 2
          %v664 = vadd.f32 %v662, %v663
          %v665 = vrot.slane %v664, 1
          %v666 = vadd.f32 %v664, %v665
          %v667 = vsel %vm412, %v647, 0.0
          %v668 = vsel %vm412, %v648, 0.0
          %v669 = vadd.f32 %v667, %v668
          %v670 = vsel %vm412, %v649, 0.0
          %v671 = vadd.f32 %v669, %v670
          %v672 = vsel %vm412, %v650, 0.0
          %v673 = vadd.f32 %v671, %v672
          %v674 = vsel %vm412, %v651, 0.0
          %v675 = vadd.f32 %v673, %v674
          %v676 = vrot.slane %v675, 4
          %v677 = vadd.f32 %v675, %v676
          %v678 = vrot.slane %v677, 2
          %v679 = vadd.f32 %v677, %v678
          %v680 = vrot.slane %v679, 1
          %v681 = vadd.f32 %v679, %v680
          %v682 = vmul.f32 %v666, %v443
          %v683 = vmul.f32 %v681, %v443
          %v686 = vsel %vm448, %v683, %v682
          %688 = vst.msk [vmem:[#allocation2 + $0xa] sm:$0x3] %vm451, %v686
          %v689 = vld [vmem:[%s641 + $0x3] sm:$0x1f]
          %v690 = vld [vmem:[%s641 + $0x1b] sm:$0x1f]
          %v691 = vld [vmem:[%s641 + $0x33] sm:$0x1f]
          %v692 = vld [vmem:[%s641 + $0x4b] sm:$0x1f]
          %v693 = vld [vmem:[%s641 + $0x63] sm:$0x1f]
          %v694 = vld [vmem:[%s641 + $0x19b] sm:$0x1f]
          %v695 = vld [vmem:[%s641 + $0x1b3] sm:$0x1f]
          %v696 = vld [vmem:[%s641 + $0x1cb] sm:$0x1f]
          %v697 = vld [vmem:[%s641 + $0x1e3] sm:$0x1f]
          %v698 = vld [vmem:[%s641 + $0x1fb] sm:$0x1f]
          %v699 = vsel %vm412, %v689, 0.0
          %v700 = vsel %vm412, %v690, 0.0
          %v701 = vadd.f32 %v699, %v700
          %v702 = vsel %vm412, %v691, 0.0
          %v703 = vadd.f32 %v701, %v702
          %v704 = vsel %vm412, %v692, 0.0
          %v705 = vadd.f32 %v703, %v704
          %v706 = vsel %vm412, %v693, 0.0
          %v707 = vadd.f32 %v705, %v706
          %v708 = vrot.slane %v707, 4
          %v709 = vadd.f32 %v707, %v708
          %v710 = vrot.slane %v709, 2
          %v711 = vadd.f32 %v709, %v710
          %v712 = vrot.slane %v711, 1
          %v713 = vadd.f32 %v711, %v712
          %v714 = vsel %vm412, %v694, 0.0
          %v715 = vsel %vm412, %v695, 0.0
          %v716 = vadd.f32 %v714, %v715
          %v717 = vsel %vm412, %v696, 0.0
          %v718 = vadd.f32 %v716, %v717
          %v719 = vsel %vm412, %v697, 0.0
          %v720 = vadd.f32 %v718, %v719
          %v721 = vsel %vm412, %v698, 0.0
          %v722 = vadd.f32 %v720, %v721
          %v723 = vrot.slane %v722, 4
          %v724 = vadd.f32 %v722, %v723
          %v725 = vrot.slane %v724, 2
          %v726 = vadd.f32 %v724, %v725
          %v727 = vrot.slane %v726, 1
          %v728 = vadd.f32 %v726, %v727
          %v729 = vmul.f32 %v713, %v443
          %v730 = vmul.f32 %v728, %v443
          %v733 = vsel %vm448, %v730, %v729
          %735 = vst.msk [vmem:[#allocation2 + $0xc] sm:$0x3] %vm451, %v733
          %v736 = vld [vmem:[%s641 + $0x6] sm:$0x1f]
          %v737 = vld [vmem:[%s641 + $0x1e] sm:$0x1f]
          %v738 = vld [vmem:[%s641 + $0x36] sm:$0x1f]
          %v739 = vld [vmem:[%s641 + $0x4e] sm:$0x1f]
          %v740 = vld [vmem:[%s641 + $0x66] sm:$0x1f]
          %v741 = vld [vmem:[%s641 + $0x19e] sm:$0x1f]
          %v742 = vld [vmem:[%s641 + $0x1b6] sm:$0x1f]
          %v743 = vld [vmem:[%s641 + $0x1ce] sm:$0x1f]
          %v744 = vld [vmem:[%s641 + $0x1e6] sm:$0x1f]
          %v745 = vld [vmem:[%s641 + $0x1fe] sm:$0x1f]
          %v746 = vsel %vm412, %v736, 0.0
          %v747 = vsel %vm412, %v737, 0.0
          %v748 = vadd.f32 %v746, %v747
          %v749 = vsel %vm412, %v738, 0.0
          %v750 = vadd.f32 %v748, %v749
          %v751 = vsel %vm412, %v739, 0.0
          %v752 = vadd.f32 %v750, %v751
          %v753 = vsel %vm412, %v740, 0.0
          %v754 = vadd.f32 %v752, %v753
          %v755 = vrot.slane %v754, 4
          %v756 = vadd.f32 %v754, %v755
          %v757 = vrot.slane %v756, 2
          %v758 = vadd.f32 %v756, %v757
          %v759 = vrot.slane %v758, 1
          %v760 = vadd.f32 %v758, %v759
          %v761 = vsel %vm412, %v741, 0.0
          %v762 = vsel %vm412, %v742, 0.0
          %v763 = vadd.f32 %v761, %v762
          %v764 = vsel %vm412, %v743, 0.0
          %v765 = vadd.f32 %v763, %v764
          %v766 = vsel %vm412, %v744, 0.0
          %v767 = vadd.f32 %v765, %v766
          %v768 = vsel %vm412, %v745, 0.0
          %v769 = vadd.f32 %v767, %v768
          %v770 = vrot.slane %v769, 4
          %v771 = vadd.f32 %v769, %v770
          %v772 = vrot.slane %v771, 2
          %v773 = vadd.f32 %v771, %v772
          %v774 = vrot.slane %v773, 1
          %v775 = vadd.f32 %v773, %v774
          %v776 = vmul.f32 %v760, %v443
          %v777 = vmul.f32 %v775, %v443
          %v780 = vsel %vm448, %v777, %v776
          %782 = vst.msk [vmem:[#allocation2 + $0xe] sm:$0x3] %vm451, %v780
          %v783 = vld [vmem:[%s641 + $0x9] sm:$0x1f]
          %v784 = vld [vmem:[%s641 + $0x21] sm:$0x1f]
          %v785 = vld [vmem:[%s641 + $0x39] sm:$0x1f]
          %v786 = vld [vmem:[%s641 + $0x51] sm:$0x1f]
          %v787 = vld [vmem:[%s641 + $0x69] sm:$0x1f]
          %v788 = vld [vmem:[%s641 + $0x1a1] sm:$0x1f]
          %v789 = vld [vmem:[%s641 + $0x1b9] sm:$0x1f]
          %v790 = vld [vmem:[%s641 + $0x1d1] sm:$0x1f]
          %v791 = vld [vmem:[%s641 + $0x1e9] sm:$0x1f]
          %v792 = vld [vmem:[%s641 + $0x201] sm:$0x1f]
          %v793 = vsel %vm412, %v783, 0.0
          %v794 = vsel %vm412, %v784, 0.0
          %v795 = vadd.f32 %v793, %v794
          %v796 = vsel %vm412, %v785, 0.0
          %v797 = vadd.f32 %v795, %v796
          %v798 = vsel %vm412, %v786, 0.0
          %v799 = vadd.f32 %v797, %v798
          %v800 = vsel %vm412, %v787, 0.0
          %v801 = vadd.f32 %v799, %v800
          %v802 = vrot.slane %v801, 4
          %v803 = vadd.f32 %v801, %v802
          %v804 = vrot.slane %v803, 2
          %v805 = vadd.f32 %v803, %v804
          %v806 = vrot.slane %v805, 1
          %v807 = vadd.f32 %v805, %v806
          %v808 = vsel %vm412, %v788, 0.0
          %v809 = vsel %vm412, %v789, 0.0
          %v810 = vadd.f32 %v808, %v809
          %v811 = vsel %vm412, %v790, 0.0
          %v812 = vadd.f32 %v810, %v811
          %v813 = vsel %vm412, %v791, 0.0
          %v814 = vadd.f32 %v812, %v813
          %v815 = vsel %vm412, %v792, 0.0
          %v816 = vadd.f32 %v814, %v815
          %v817 = vrot.slane %v816, 4
          %v818 = vadd.f32 %v816, %v817
          %v819 = vrot.slane %v818, 2
          %v820 = vadd.f32 %v818, %v819
          %v821 = vrot.slane %v820, 1
          %v822 = vadd.f32 %v820, %v821
          %v823 = vmul.f32 %v807, %v443
          %v824 = vmul.f32 %v822, %v443
          %v827 = vsel %vm448, %v824, %v823
          %829 = vst.msk [vmem:[#allocation2 + $0x10] sm:$0x3] %vm451, %v827
          %v830 = vld [vmem:[%s641 + $0xc] sm:$0x1f]
          %v831 = vld [vmem:[%s641 + $0x24] sm:$0x1f]
          %v832 = vld [vmem:[%s641 + $0x3c] sm:$0x1f]
          %v833 = vld [vmem:[%s641 + $0x54] sm:$0x1f]
          %v834 = vld [vmem:[%s641 + $0x6c] sm:$0x1f]
          %v835 = vld [vmem:[%s641 + $0x1a4] sm:$0x1f]
          %v836 = vld [vmem:[%s641 + $0x1bc] sm:$0x1f]
          %v837 = vld [vmem:[%s641 + $0x1d4] sm:$0x1f]
          %v838 = vld [vmem:[%s641 + $0x1ec] sm:$0x1f]
          %v839 = vld [vmem:[%s641 + $0x204] sm:$0x1f]
          %v840 = vsel %vm412, %v830, 0.0
          %v841 = vsel %vm412, %v831, 0.0
          %v842 = vadd.f32 %v840, %v841
          %v843 = vsel %vm412, %v832, 0.0
          %v844 = vadd.f32 %v842, %v843
          %v845 = vsel %vm412, %v833, 0.0
          %v846 = vadd.f32 %v844, %v845
          %v847 = vsel %vm412, %v834, 0.0
          %v848 = vadd.f32 %v846, %v847
          %v849 = vrot.slane %v848, 4
          %v850 = vadd.f32 %v848, %v849
          %v851 = vrot.slane %v850, 2
          %v852 = vadd.f32 %v850, %v851
          %v853 = vrot.slane %v852, 1
          %v854 = vadd.f32 %v852, %v853
          %v855 = vsel %vm412, %v835, 0.0
          %v856 = vsel %vm412, %v836, 0.0
          %v857 = vadd.f32 %v855, %v856
          %v858 = vsel %vm412, %v837, 0.0
          %v859 = vadd.f32 %v857, %v858
          %v860 = vsel %vm412, %v838, 0.0
          %v861 = vadd.f32 %v859, %v860
          %v862 = vsel %vm412, %v839, 0.0
          %v863 = vadd.f32 %v861, %v862
          %v864 = vrot.slane %v863, 4
          %v865 = vadd.f32 %v863, %v864
          %v866 = vrot.slane %v865, 2
          %v867 = vadd.f32 %v865, %v866
          %v868 = vrot.slane %v867, 1
          %v869 = vadd.f32 %v867, %v868
          %v870 = vmul.f32 %v854, %v443
          %v871 = vmul.f32 %v869, %v443
          %v874 = vsel %vm448, %v871, %v870
          %876 = vst.msk [vmem:[#allocation2 + $0x12] sm:$0x3] %vm451, %v874
          %s877 = scalar_lea.vmem %s0, 144
          %v878 = vld [vmem:[%s877] sm:$0x1f]
          %v879 = vld [vmem:[%s877 + $0x18] sm:$0x1f]
          %v880 = vld [vmem:[%s877 + $0x30] sm:$0x1f]
          %v881 = vld [vmem:[%s877 + $0x48] sm:$0x1f]
          %v882 = vld [vmem:[%s877 + $0x60] sm:$0x1f]
          %v883 = vld [vmem:[%s877 + $0x198] sm:$0x1f]
          %v884 = vld [vmem:[%s877 + $0x1b0] sm:$0x1f]
          %v885 = vld [vmem:[%s877 + $0x1c8] sm:$0x1f]
          %v886 = vld [vmem:[%s877 + $0x1e0] sm:$0x1f]
          %v887 = vld [vmem:[%s877 + $0x1f8] sm:$0x1f]
          %v888 = vsel %vm412, %v878, 0.0
          %v889 = vsel %vm412, %v879, 0.0
          %v890 = vadd.f32 %v888, %v889
          %v891 = vsel %vm412, %v880, 0.0
          %v892 = vadd.f32 %v890, %v891
          %v893 = vsel %vm412, %v881, 0.0
          %v894 = vadd.f32 %v892, %v893
          %v895 = vsel %vm412, %v882, 0.0
          %v896 = vadd.f32 %v894, %v895
          %v897 = vrot.slane %v896, 4
          %v898 = vadd.f32 %v896, %v897
          %v899 = vrot.slane %v898, 2
          %v900 = vadd.f32 %v898, %v899
          %v901 = vrot.slane %v900, 1
          %v902 = vadd.f32 %v900, %v901
          %v903 = vsel %vm412, %v883, 0.0
          %v904 = vsel %vm412, %v884, 0.0
          %v905 = vadd.f32 %v903, %v904
          %v906 = vsel %vm412, %v885, 0.0
          %v907 = vadd.f32 %v905, %v906
          %v908 = vsel %vm412, %v886, 0.0
          %v909 = vadd.f32 %v907, %v908
          %v910 = vsel %vm412, %v887, 0.0
          %v911 = vadd.f32 %v909, %v910
          %v912 = vrot.slane %v911, 4
          %v913 = vadd.f32 %v911, %v912
          %v914 = vrot.slane %v913, 2
          %v915 = vadd.f32 %v913, %v914
          %v916 = vrot.slane %v915, 1
          %v917 = vadd.f32 %v915, %v916
          %v918 = vmul.f32 %v902, %v443
          %v919 = vmul.f32 %v917, %v443
          %v922 = vsel %vm448, %v919, %v918
          %924 = vst.msk [vmem:[#allocation2 + $0x14] sm:$0x3] %vm451, %v922
          %v925 = vld [vmem:[%s877 + $0x3] sm:$0x1f]
          %v926 = vld [vmem:[%s877 + $0x1b] sm:$0x1f]
          %v927 = vld [vmem:[%s877 + $0x33] sm:$0x1f]
          %v928 = vld [vmem:[%s877 + $0x4b] sm:$0x1f]
          %v929 = vld [vmem:[%s877 + $0x63] sm:$0x1f]
          %v930 = vld [vmem:[%s877 + $0x19b] sm:$0x1f]
          %v931 = vld [vmem:[%s877 + $0x1b3] sm:$0x1f]
          %v932 = vld [vmem:[%s877 + $0x1cb] sm:$0x1f]
          %v933 = vld [vmem:[%s877 + $0x1e3] sm:$0x1f]
          %v934 = vld [vmem:[%s877 + $0x1fb] sm:$0x1f]
          %v935 = vsel %vm412, %v925, 0.0
          %v936 = vsel %vm412, %v926, 0.0
          %v937 = vadd.f32 %v935, %v936
          %v938 = vsel %vm412, %v927, 0.0
          %v939 = vadd.f32 %v937, %v938
          %v940 = vsel %vm412, %v928, 0.0
          %v941 = vadd.f32 %v939, %v940
          %v942 = vsel %vm412, %v929, 0.0
          %v943 = vadd.f32 %v941, %v942
          %v944 = vrot.slane %v943, 4
          %v945 = vadd.f32 %v943, %v944
          %v946 = vrot.slane %v945, 2
          %v947 = vadd.f32 %v945, %v946
          %v948 = vrot.slane %v947, 1
          %v949 = vadd.f32 %v947, %v948
          %v950 = vsel %vm412, %v930, 0.0
          %v951 = vsel %vm412, %v931, 0.0
          %v952 = vadd.f32 %v950, %v951
          %v953 = vsel %vm412, %v932, 0.0
          %v954 = vadd.f32 %v952, %v953
          %v955 = vsel %vm412, %v933, 0.0
          %v956 = vadd.f32 %v954, %v955
          %v957 = vsel %vm412, %v934, 0.0
          %v958 = vadd.f32 %v956, %v957
          %v959 = vrot.slane %v958, 4
          %v960 = vadd.f32 %v958, %v959
          %v961 = vrot.slane %v960, 2
          %v962 = vadd.f32 %v960, %v961
          %v963 = vrot.slane %v962, 1
          %v964 = vadd.f32 %v962, %v963
          %v965 = vmul.f32 %v949, %v443
          %v966 = vmul.f32 %v964, %v443
          %v969 = vsel %vm448, %v966, %v965
          %971 = vst.msk [vmem:[#allocation2 + $0x16] sm:$0x3] %vm451, %v969
          %v972 = vld [vmem:[%s877 + $0x6] sm:$0x1f]
          %v973 = vld [vmem:[%s877 + $0x1e] sm:$0x1f]
          %v974 = vld [vmem:[%s877 + $0x36] sm:$0x1f]
          %v975 = vld [vmem:[%s877 + $0x4e] sm:$0x1f]
          %v976 = vld [vmem:[%s877 + $0x66] sm:$0x1f]
          %v977 = vld [vmem:[%s877 + $0x19e] sm:$0x1f]
          %v978 = vld [vmem:[%s877 + $0x1b6] sm:$0x1f]
          %v979 = vld [vmem:[%s877 + $0x1ce] sm:$0x1f]
          %v980 = vld [vmem:[%s877 + $0x1e6] sm:$0x1f]
          %v981 = vld [vmem:[%s877 + $0x1fe] sm:$0x1f]
          %v982 = vsel %vm412, %v972, 0.0
          %v983 = vsel %vm412, %v973, 0.0
          %v984 = vadd.f32 %v982, %v983
          %v985 = vsel %vm412, %v974, 0.0
          %v986 = vadd.f32 %v984, %v985
          %v987 = vsel %vm412, %v975, 0.0
          %v988 = vadd.f32 %v986, %v987
          %v989 = vsel %vm412, %v976, 0.0
          %v990 = vadd.f32 %v988, %v989
          %v991 = vrot.slane %v990, 4
          %v992 = vadd.f32 %v990, %v991
          %v993 = vrot.slane %v992, 2
          %v994 = vadd.f32 %v992, %v993
          %v995 = vrot.slane %v994, 1
          %v996 = vadd.f32 %v994, %v995
          %v997 = vsel %vm412, %v977, 0.0
          %v998 = vsel %vm412, %v978, 0.0
          %v999 = vadd.f32 %v997, %v998
          %v1000 = vsel %vm412, %v979, 0.0
          %v1001 = vadd.f32 %v999, %v1000
          %v1002 = vsel %vm412, %v980, 0.0
          %v1003 = vadd.f32 %v1001, %v1002
          %v1004 = vsel %vm412, %v981, 0.0
          %v1005 = vadd.f32 %v1003, %v1004
          %v1006 = vrot.slane %v1005, 4
          %v1007 = vadd.f32 %v1005, %v1006
          %v1008 = vrot.slane %v1007, 2
          %v1009 = vadd.f32 %v1007, %v1008
          %v1010 = vrot.slane %v1009, 1
          %v1011 = vadd.f32 %v1009, %v1010
          %v1012 = vmul.f32 %v996, %v443
          %v1013 = vmul.f32 %v1011, %v443
          %v1016 = vsel %vm448, %v1013, %v1012
          %1018 = vst.msk [vmem:[#allocation2 + $0x18] sm:$0x3] %vm451, %v1016
          %v1019 = vld [vmem:[%s877 + $0x9] sm:$0x1f]
          %v1020 = vld [vmem:[%s877 + $0x21] sm:$0x1f]
          %v1021 = vld [vmem:[%s877 + $0x39] sm:$0x1f]
          %v1022 = vld [vmem:[%s877 + $0x51] sm:$0x1f]
          %v1023 = vld [vmem:[%s877 + $0x69] sm:$0x1f]
          %v1024 = vld [vmem:[%s877 + $0x1a1] sm:$0x1f]
          %v1025 = vld [vmem:[%s877 + $0x1b9] sm:$0x1f]
          %v1026 = vld [vmem:[%s877 + $0x1d1] sm:$0x1f]
          %v1027 = vld [vmem:[%s877 + $0x1e9] sm:$0x1f]
          %v1028 = vld [vmem:[%s877 + $0x201] sm:$0x1f]
          %v1029 = vsel %vm412, %v1019, 0.0
          %v1030 = vsel %vm412, %v1020, 0.0
          %v1031 = vadd.f32 %v1029, %v1030
          %v1032 = vsel %vm412, %v1021, 0.0
          %v1033 = vadd.f32 %v1031, %v1032
          %v1034 = vsel %vm412, %v1022, 0.0
          %v1035 = vadd.f32 %v1033, %v1034
          %v1036 = vsel %vm412, %v1023, 0.0
          %v1037 = vadd.f32 %v1035, %v1036
          %v1038 = vrot.slane %v1037, 4
          %v1039 = vadd.f32 %v1037, %v1038
          %v1040 = vrot.slane %v1039, 2
          %v1041 = vadd.f32 %v1039, %v1040
          %v1042 = vrot.slane %v1041, 1
          %v1043 = vadd.f32 %v1041, %v1042
          %v1044 = vsel %vm412, %v1024, 0.0
          %v1045 = vsel %vm412, %v1025, 0.0
          %v1046 = vadd.f32 %v1044, %v1045
          %v1047 = vsel %vm412, %v1026, 0.0
          %v1048 = vadd.f32 %v1046, %v1047
          %v1049 = vsel %vm412, %v1027, 0.0
          %v1050 = vadd.f32 %v1048, %v1049
          %v1051 = vsel %vm412, %v1028, 0.0
          %v1052 = vadd.f32 %v1050, %v1051
          %v1053 = vrot.slane %v1052, 4
          %v1054 = vadd.f32 %v1052, %v1053
          %v1055 = vrot.slane %v1054, 2
          %v1056 = vadd.f32 %v1054, %v1055
          %v1057 = vrot.slane %v1056, 1
          %v1058 = vadd.f32 %v1056, %v1057
          %v1059 = vmul.f32 %v1043, %v443
          %v1060 = vmul.f32 %v1058, %v443
          %v1063 = vsel %vm448, %v1060, %v1059
          %1065 = vst.msk [vmem:[#allocation2 + $0x1a] sm:$0x3] %vm451, %v1063
          %v1066 = vld [vmem:[%s877 + $0xc] sm:$0x1f]
          %v1067 = vld [vmem:[%s877 + $0x24] sm:$0x1f]
          %v1068 = vld [vmem:[%s877 + $0x3c] sm:$0x1f]
          %v1069 = vld [vmem:[%s877 + $0x54] sm:$0x1f]
          %v1070 = vld [vmem:[%s877 + $0x6c] sm:$0x1f]
          %v1071 = vld [vmem:[%s877 + $0x1a4] sm:$0x1f]
          %v1072 = vld [vmem:[%s877 + $0x1bc] sm:$0x1f]
          %v1073 = vld [vmem:[%s877 + $0x1d4] sm:$0x1f]
          %v1074 = vld [vmem:[%s877 + $0x1ec] sm:$0x1f]
          %v1075 = vld [vmem:[%s877 + $0x204] sm:$0x1f]
          %v1076 = vsel %vm412, %v1066, 0.0
          %v1077 = vsel %vm412, %v1067, 0.0
          %v1078 = vadd.f32 %v1076, %v1077
          %v1079 = vsel %vm412, %v1068, 0.0
          %v1080 = vadd.f32 %v1078, %v1079
          %v1081 = vsel %vm412, %v1069, 0.0
          %v1082 = vadd.f32 %v1080, %v1081
          %v1083 = vsel %vm412, %v1070, 0.0
          %v1084 = vadd.f32 %v1082, %v1083
          %v1085 = vrot.slane %v1084, 4
          %v1086 = vadd.f32 %v1084, %v1085
          %v1087 = vrot.slane %v1086, 2
          %v1088 = vadd.f32 %v1086, %v1087
          %v1089 = vrot.slane %v1088, 1
          %v1090 = vadd.f32 %v1088, %v1089
          %v1091 = vsel %vm412, %v1071, 0.0
          %v1092 = vsel %vm412, %v1072, 0.0
          %v1093 = vadd.f32 %v1091, %v1092
          %v1094 = vsel %vm412, %v1073, 0.0
          %v1095 = vadd.f32 %v1093, %v1094
          %v1096 = vsel %vm412, %v1074, 0.0
          %v1097 = vadd.f32 %v1095, %v1096
          %v1098 = vsel %vm412, %v1075, 0.0
          %v1099 = vadd.f32 %v1097, %v1098
          %v1100 = vrot.slane %v1099, 4
          %v1101 = vadd.f32 %v1099, %v1100
          %v1102 = vrot.slane %v1101, 2
          %v1103 = vadd.f32 %v1101, %v1102
          %v1104 = vrot.slane %v1103, 1
          %v1105 = vadd.f32 %v1103, %v1104
          %v1106 = vmul.f32 %v1090, %v443
          %v1107 = vmul.f32 %v1105, %v443
          %v1110 = vsel %vm448, %v1107, %v1106
          %1112 = vst.msk [vmem:[#allocation2 + $0x1c] sm:$0x3] %vm451, %v1110
          %s1113 = scalar_lea.vmem %s0, 216
          %v1114 = vld [vmem:[%s1113] sm:$0x1f]
          %v1115 = vld [vmem:[%s1113 + $0x18] sm:$0x1f]
          %v1116 = vld [vmem:[%s1113 + $0x30] sm:$0x1f]
          %v1117 = vld [vmem:[%s1113 + $0x48] sm:$0x1f]
          %v1118 = vld [vmem:[%s1113 + $0x60] sm:$0x1f]
          %v1119 = vld [vmem:[%s1113 + $0x198] sm:$0x1f]
          %v1120 = vld [vmem:[%s1113 + $0x1b0] sm:$0x1f]
          %v1121 = vld [vmem:[%s1113 + $0x1c8] sm:$0x1f]
          %v1122 = vld [vmem:[%s1113 + $0x1e0] sm:$0x1f]
          %v1123 = vld [vmem:[%s1113 + $0x1f8] sm:$0x1f]
          %v1124 = vsel %vm412, %v1114, 0.0
          %v1125 = vsel %vm412, %v1115, 0.0
          %v1126 = vadd.f32 %v1124, %v1125
          %v1127 = vsel %vm412, %v1116, 0.0
          %v1128 = vadd.f32 %v1126, %v1127
          %v1129 = vsel %vm412, %v1117, 0.0
          %v1130 = vadd.f32 %v1128, %v1129
          %v1131 = vsel %vm412, %v1118, 0.0
          %v1132 = vadd.f32 %v1130, %v1131
          %v1133 = vrot.slane %v1132, 4
          %v1134 = vadd.f32 %v1132, %v1133
          %v1135 = vrot.slane %v1134, 2
          %v1136 = vadd.f32 %v1134, %v1135
          %v1137 = vrot.slane %v1136, 1
          %v1138 = vadd.f32 %v1136, %v1137
          %v1139 = vsel %vm412, %v1119, 0.0
          %v1140 = vsel %vm412, %v1120, 0.0
          %v1141 = vadd.f32 %v1139, %v1140
          %v1142 = vsel %vm412, %v1121, 0.0
          %v1143 = vadd.f32 %v1141, %v1142
          %v1144 = vsel %vm412, %v1122, 0.0
          %v1145 = vadd.f32 %v1143, %v1144
          %v1146 = vsel %vm412, %v1123, 0.0
          %v1147 = vadd.f32 %v1145, %v1146
          %v1148 = vrot.slane %v1147, 4
          %v1149 = vadd.f32 %v1147, %v1148
          %v1150 = vrot.slane %v1149, 2
          %v1151 = vadd.f32 %v1149, %v1150
          %v1152 = vrot.slane %v1151, 1
          %v1153 = vadd.f32 %v1151, %v1152
          %v1154 = vmul.f32 %v1138, %v443
          %v1155 = vmul.f32 %v1153, %v443
          %v1158 = vsel %vm448, %v1155, %v1154
          %1160 = vst.msk [vmem:[#allocation2 + $0x1e] sm:$0x3] %vm451, %v1158
          %v1161 = vld [vmem:[%s1113 + $0x3] sm:$0x1f]
          %v1162 = vld [vmem:[%s1113 + $0x1b] sm:$0x1f]
          %v1163 = vld [vmem:[%s1113 + $0x33] sm:$0x1f]
          %v1164 = vld [vmem:[%s1113 + $0x4b] sm:$0x1f]
          %v1165 = vld [vmem:[%s1113 + $0x63] sm:$0x1f]
          %v1166 = vld [vmem:[%s1113 + $0x19b] sm:$0x1f]
          %v1167 = vld [vmem:[%s1113 + $0x1b3] sm:$0x1f]
          %v1168 = vld [vmem:[%s1113 + $0x1cb] sm:$0x1f]
          %v1169 = vld [vmem:[%s1113 + $0x1e3] sm:$0x1f]
          %v1170 = vld [vmem:[%s1113 + $0x1fb] sm:$0x1f]
          %v1171 = vsel %vm412, %v1161, 0.0
          %v1172 = vsel %vm412, %v1162, 0.0
          %v1173 = vadd.f32 %v1171, %v1172
          %v1174 = vsel %vm412, %v1163, 0.0
          %v1175 = vadd.f32 %v1173, %v1174
          %v1176 = vsel %vm412, %v1164, 0.0
          %v1177 = vadd.f32 %v1175, %v1176
          %v1178 = vsel %vm412, %v1165, 0.0
          %v1179 = vadd.f32 %v1177, %v1178
          %v1180 = vrot.slane %v1179, 4
          %v1181 = vadd.f32 %v1179, %v1180
          %v1182 = vrot.slane %v1181, 2
          %v1183 = vadd.f32 %v1181, %v1182
          %v1184 = vrot.slane %v1183, 1
          %v1185 = vadd.f32 %v1183, %v1184
          %v1186 = vsel %vm412, %v1166, 0.0
          %v1187 = vsel %vm412, %v1167, 0.0
          %v1188 = vadd.f32 %v1186, %v1187
          %v1189 = vsel %vm412, %v1168, 0.0
          %v1190 = vadd.f32 %v1188, %v1189
          %v1191 = vsel %vm412, %v1169, 0.0
          %v1192 = vadd.f32 %v1190, %v1191
          %v1193 = vsel %vm412, %v1170, 0.0
          %v1194 = vadd.f32 %v1192, %v1193
          %v1195 = vrot.slane %v1194, 4
          %v1196 = vadd.f32 %v1194, %v1195
          %v1197 = vrot.slane %v1196, 2
          %v1198 = vadd.f32 %v1196, %v1197
          %v1199 = vrot.slane %v1198, 1
          %v1200 = vadd.f32 %v1198, %v1199
          %v1201 = vmul.f32 %v1185, %v443
          %v1202 = vmul.f32 %v1200, %v443
          %v1205 = vsel %vm448, %v1202, %v1201
          %1207 = vst.msk [vmem:[#allocation2 + $0x20] sm:$0x3] %vm451, %v1205
          %v1208 = vld [vmem:[%s1113 + $0x6] sm:$0x1f]
          %v1209 = vld [vmem:[%s1113 + $0x1e] sm:$0x1f]
          %v1210 = vld [vmem:[%s1113 + $0x36] sm:$0x1f]
          %v1211 = vld [vmem:[%s1113 + $0x4e] sm:$0x1f]
          %v1212 = vld [vmem:[%s1113 + $0x66] sm:$0x1f]
          %v1213 = vld [vmem:[%s1113 + $0x19e] sm:$0x1f]
          %v1214 = vld [vmem:[%s1113 + $0x1b6] sm:$0x1f]
          %v1215 = vld [vmem:[%s1113 + $0x1ce] sm:$0x1f]
          %v1216 = vld [vmem:[%s1113 + $0x1e6] sm:$0x1f]
          %v1217 = vld [vmem:[%s1113 + $0x1fe] sm:$0x1f]
          %v1218 = vsel %vm412, %v1208, 0.0
          %v1219 = vsel %vm412, %v1209, 0.0
          %v1220 = vadd.f32 %v1218, %v1219
          %v1221 = vsel %vm412, %v1210, 0.0
          %v1222 = vadd.f32 %v1220, %v1221
          %v1223 = vsel %vm412, %v1211, 0.0
          %v1224 = vadd.f32 %v1222, %v1223
          %v1225 = vsel %vm412, %v1212, 0.0
          %v1226 = vadd.f32 %v1224, %v1225
          %v1227 = vrot.slane %v1226, 4
          %v1228 = vadd.f32 %v1226, %v1227
          %v1229 = vrot.slane %v1228, 2
          %v1230 = vadd.f32 %v1228, %v1229
          %v1231 = vrot.slane %v1230, 1
          %v1232 = vadd.f32 %v1230, %v1231
          %v1233 = vsel %vm412, %v1213, 0.0
          %v1234 = vsel %vm412, %v1214, 0.0
          %v1235 = vadd.f32 %v1233, %v1234
          %v1236 = vsel %vm412, %v1215, 0.0
          %v1237 = vadd.f32 %v1235, %v1236
          %v1238 = vsel %vm412, %v1216, 0.0
          %v1239 = vadd.f32 %v1237, %v1238
          %v1240 = vsel %vm412, %v1217, 0.0
          %v1241 = vadd.f32 %v1239, %v1240
          %v1242 = vrot.slane %v1241, 4
          %v1243 = vadd.f32 %v1241, %v1242
          %v1244 = vrot.slane %v1243, 2
          %v1245 = vadd.f32 %v1243, %v1244
          %v1246 = vrot.slane %v1245, 1
          %v1247 = vadd.f32 %v1245, %v1246
          %v1248 = vmul.f32 %v1232, %v443
          %v1249 = vmul.f32 %v1247, %v443
          %v1252 = vsel %vm448, %v1249, %v1248
          %1254 = vst.msk [vmem:[#allocation2 + $0x22] sm:$0x3] %vm451, %v1252
          %v1255 = vld [vmem:[%s1113 + $0x9] sm:$0x1f]
          %v1256 = vld [vmem:[%s1113 + $0x21] sm:$0x1f]
          %v1257 = vld [vmem:[%s1113 + $0x39] sm:$0x1f]
          %v1258 = vld [vmem:[%s1113 + $0x51] sm:$0x1f]
          %v1259 = vld [vmem:[%s1113 + $0x69] sm:$0x1f]
          %v1260 = vld [vmem:[%s1113 + $0x1a1] sm:$0x1f]
          %v1261 = vld [vmem:[%s1113 + $0x1b9] sm:$0x1f]
          %v1262 = vld [vmem:[%s1113 + $0x1d1] sm:$0x1f]
          %v1263 = vld [vmem:[%s1113 + $0x1e9] sm:$0x1f]
          %v1264 = vld [vmem:[%s1113 + $0x201] sm:$0x1f]
          %v1265 = vsel %vm412, %v1255, 0.0
          %v1266 = vsel %vm412, %v1256, 0.0
          %v1267 = vadd.f32 %v1265, %v1266
          %v1268 = vsel %vm412, %v1257, 0.0
          %v1269 = vadd.f32 %v1267, %v1268
          %v1270 = vsel %vm412, %v1258, 0.0
          %v1271 = vadd.f32 %v1269, %v1270
          %v1272 = vsel %vm412, %v1259, 0.0
          %v1273 = vadd.f32 %v1271, %v1272
          %v1274 = vrot.slane %v1273, 4
          %v1275 = vadd.f32 %v1273, %v1274
          %v1276 = vrot.slane %v1275, 2
          %v1277 = vadd.f32 %v1275, %v1276
          %v1278 = vrot.slane %v1277, 1
          %v1279 = vadd.f32 %v1277, %v1278
          %v1280 = vsel %vm412, %v1260, 0.0
          %v1281 = vsel %vm412, %v1261, 0.0
          %v1282 = vadd.f32 %v1280, %v1281
          %v1283 = vsel %vm412, %v1262, 0.0
          %v1284 = vadd.f32 %v1282, %v1283
          %v1285 = vsel %vm412, %v1263, 0.0
          %v1286 = vadd.f32 %v1284, %v1285
          %v1287 = vsel %vm412, %v1264, 0.0
          %v1288 = vadd.f32 %v1286, %v1287
          %v1289 = vrot.slane %v1288, 4
          %v1290 = vadd.f32 %v1288, %v1289
          %v1291 = vrot.slane %v1290, 2
          %v1292 = vadd.f32 %v1290, %v1291
          %v1293 = vrot.slane %v1292, 1
          %v1294 = vadd.f32 %v1292, %v1293
          %v1295 = vmul.f32 %v1279, %v443
          %v1296 = vmul.f32 %v1294, %v443
          %v1299 = vsel %vm448, %v1296, %v1295
          %1301 = vst.msk [vmem:[#allocation2 + $0x24] sm:$0x3] %vm451, %v1299
          %v1302 = vld [vmem:[%s1113 + $0xc] sm:$0x1f]
          %v1303 = vld [vmem:[%s1113 + $0x24] sm:$0x1f]
          %v1304 = vld [vmem:[%s1113 + $0x3c] sm:$0x1f]
          %v1305 = vld [vmem:[%s1113 + $0x54] sm:$0x1f]
          %v1306 = vld [vmem:[%s1113 + $0x6c] sm:$0x1f]
          %v1307 = vld [vmem:[%s1113 + $0x1a4] sm:$0x1f]
          %v1308 = vld [vmem:[%s1113 + $0x1bc] sm:$0x1f]
          %v1309 = vld [vmem:[%s1113 + $0x1d4] sm:$0x1f]
          %v1310 = vld [vmem:[%s1113 + $0x1ec] sm:$0x1f]
          %v1311 = vld [vmem:[%s1113 + $0x204] sm:$0x1f]
          %v1312 = vsel %vm412, %v1302, 0.0
          %v1313 = vsel %vm412, %v1303, 0.0
          %v1314 = vadd.f32 %v1312, %v1313
          %v1315 = vsel %vm412, %v1304, 0.0
          %v1316 = vadd.f32 %v1314, %v1315
          %v1317 = vsel %vm412, %v1305, 0.0
          %v1318 = vadd.f32 %v1316, %v1317
          %v1319 = vsel %vm412, %v1306, 0.0
          %v1320 = vadd.f32 %v1318, %v1319
          %v1321 = vrot.slane %v1320, 4
          %v1322 = vadd.f32 %v1320, %v1321
          %v1323 = vrot.slane %v1322, 2
          %v1324 = vadd.f32 %v1322, %v1323
          %v1325 = vrot.slane %v1324, 1
          %v1326 = vadd.f32 %v1324, %v1325
          %v1327 = vsel %vm412, %v1307, 0.0
          %v1328 = vsel %vm412, %v1308, 0.0
          %v1329 = vadd.f32 %v1327, %v1328
          %v1330 = vsel %vm412, %v1309, 0.0
          %v1331 = vadd.f32 %v1329, %v1330
          %v1332 = vsel %vm412, %v1310, 0.0
          %v1333 = vadd.f32 %v1331, %v1332
          %v1334 = vsel %vm412, %v1311, 0.0
          %v1335 = vadd.f32 %v1333, %v1334
          %v1336 = vrot.slane %v1335, 4
          %v1337 = vadd.f32 %v1335, %v1336
          %v1338 = vrot.slane %v1337, 2
          %v1339 = vadd.f32 %v1337, %v1338
          %v1340 = vrot.slane %v1339, 1
          %v1341 = vadd.f32 %v1339, %v1340
          %v1342 = vmul.f32 %v1326, %v443
          %v1343 = vmul.f32 %v1341, %v443
          %v1346 = vsel %vm448, %v1343, %v1342
          %1348 = vst.msk [vmem:[#allocation2 + $0x26] sm:$0x3] %vm451, %v1346
          %s1349 = scalar_lea.vmem %s0, 288
          %v1350 = vld [vmem:[%s1349] sm:$0x1f]
          %v1351 = vld [vmem:[%s1349 + $0x18] sm:$0x1f]
          %v1352 = vld [vmem:[%s1349 + $0x30] sm:$0x1f]
          %v1353 = vld [vmem:[%s1349 + $0x48] sm:$0x1f]
          %v1354 = vld [vmem:[%s1349 + $0x60] sm:$0x1f]
          %v1355 = vld [vmem:[%s1349 + $0x198] sm:$0x1f]
          %v1356 = vld [vmem:[%s1349 + $0x1b0] sm:$0x1f]
          %v1357 = vld [vmem:[%s1349 + $0x1c8] sm:$0x1f]
          %v1358 = vld [vmem:[%s1349 + $0x1e0] sm:$0x1f]
          %v1359 = vld [vmem:[%s1349 + $0x1f8] sm:$0x1f]
          %v1360 = vsel %vm412, %v1350, 0.0
          %v1361 = vsel %vm412, %v1351, 0.0
          %v1362 = vadd.f32 %v1360, %v1361
          %v1363 = vsel %vm412, %v1352, 0.0
          %v1364 = vadd.f32 %v1362, %v1363
          %v1365 = vsel %vm412, %v1353, 0.0
          %v1366 = vadd.f32 %v1364, %v1365
          %v1367 = vsel %vm412, %v1354, 0.0
          %v1368 = vadd.f32 %v1366, %v1367
          %v1369 = vrot.slane %v1368, 4
          %v1370 = vadd.f32 %v1368, %v1369
          %v1371 = vrot.slane %v1370, 2
          %v1372 = vadd.f32 %v1370, %v1371
          %v1373 = vrot.slane %v1372, 1
          %v1374 = vadd.f32 %v1372, %v1373
          %v1375 = vsel %vm412, %v1355, 0.0
          %v1376 = vsel %vm412, %v1356, 0.0
          %v1377 = vadd.f32 %v1375, %v1376
          %v1378 = vsel %vm412, %v1357, 0.0
          %v1379 = vadd.f32 %v1377, %v1378
          %v1380 = vsel %vm412, %v1358, 0.0
          %v1381 = vadd.f32 %v1379, %v1380
          %v1382 = vsel %vm412, %v1359, 0.0
          %v1383 = vadd.f32 %v1381, %v1382
          %v1384 = vrot.slane %v1383, 4
          %v1385 = vadd.f32 %v1383, %v1384
          %v1386 = vrot.slane %v1385, 2
          %v1387 = vadd.f32 %v1385, %v1386
          %v1388 = vrot.slane %v1387, 1
          %v1389 = vadd.f32 %v1387, %v1388
          %v1390 = vmul.f32 %v1374, %v443
          %v1391 = vmul.f32 %v1389, %v443
          %v1394 = vsel %vm448, %v1391, %v1390
          %1396 = vst.msk [vmem:[#allocation2 + $0x28] sm:$0x3] %vm451, %v1394
          %v1397 = vld [vmem:[%s1349 + $0x3] sm:$0x1f]
          %v1398 = vld [vmem:[%s1349 + $0x1b] sm:$0x1f]
          %v1399 = vld [vmem:[%s1349 + $0x33] sm:$0x1f]
          %v1400 = vld [vmem:[%s1349 + $0x4b] sm:$0x1f]
          %v1401 = vld [vmem:[%s1349 + $0x63] sm:$0x1f]
          %v1402 = vld [vmem:[%s1349 + $0x19b] sm:$0x1f]
          %v1403 = vld [vmem:[%s1349 + $0x1b3] sm:$0x1f]
          %v1404 = vld [vmem:[%s1349 + $0x1cb] sm:$0x1f]
          %v1405 = vld [vmem:[%s1349 + $0x1e3] sm:$0x1f]
          %v1406 = vld [vmem:[%s1349 + $0x1fb] sm:$0x1f]
          %v1407 = vsel %vm412, %v1397, 0.0
          %v1408 = vsel %vm412, %v1398, 0.0
          %v1409 = vadd.f32 %v1407, %v1408
          %v1410 = vsel %vm412, %v1399, 0.0
          %v1411 = vadd.f32 %v1409, %v1410
          %v1412 = vsel %vm412, %v1400, 0.0
          %v1413 = vadd.f32 %v1411, %v1412
          %v1414 = vsel %vm412, %v1401, 0.0
          %v1415 = vadd.f32 %v1413, %v1414
          %v1416 = vrot.slane %v1415, 4
          %v1417 = vadd.f32 %v1415, %v1416
          %v1418 = vrot.slane %v1417, 2
          %v1419 = vadd.f32 %v1417, %v1418
          %v1420 = vrot.slane %v1419, 1
          %v1421 = vadd.f32 %v1419, %v1420
          %v1422 = vsel %vm412, %v1402, 0.0
          %v1423 = vsel %vm412, %v1403, 0.0
          %v1424 = vadd.f32 %v1422, %v1423
          %v1425 = vsel %vm412, %v1404, 0.0
          %v1426 = vadd.f32 %v1424, %v1425
          %v1427 = vsel %vm412, %v1405, 0.0
          %v1428 = vadd.f32 %v1426, %v1427
          %v1429 = vsel %vm412, %v1406, 0.0
          %v1430 = vadd.f32 %v1428, %v1429
          %v1431 = vrot.slane %v1430, 4
          %v1432 = vadd.f32 %v1430, %v1431
          %v1433 = vrot.slane %v1432, 2
          %v1434 = vadd.f32 %v1432, %v1433
          %v1435 = vrot.slane %v1434, 1
          %v1436 = vadd.f32 %v1434, %v1435
          %v1437 = vmul.f32 %v1421, %v443
          %v1438 = vmul.f32 %v1436, %v443
          %v1441 = vsel %vm448, %v1438, %v1437
          %1443 = vst.msk [vmem:[#allocation2 + $0x2a] sm:$0x3] %vm451, %v1441
          %v1444 = vld [vmem:[%s1349 + $0x6] sm:$0x1f]
          %v1445 = vld [vmem:[%s1349 + $0x1e] sm:$0x1f]
          %v1446 = vld [vmem:[%s1349 + $0x36] sm:$0x1f]
          %v1447 = vld [vmem:[%s1349 + $0x4e] sm:$0x1f]
          %v1448 = vld [vmem:[%s1349 + $0x66] sm:$0x1f]
          %v1449 = vld [vmem:[%s1349 + $0x19e] sm:$0x1f]
          %v1450 = vld [vmem:[%s1349 + $0x1b6] sm:$0x1f]
          %v1451 = vld [vmem:[%s1349 + $0x1ce] sm:$0x1f]
          %v1452 = vld [vmem:[%s1349 + $0x1e6] sm:$0x1f]
          %v1453 = vld [vmem:[%s1349 + $0x1fe] sm:$0x1f]
          %v1454 = vsel %vm412, %v1444, 0.0
          %v1455 = vsel %vm412, %v1445, 0.0
          %v1456 = vadd.f32 %v1454, %v1455
          %v1457 = vsel %vm412, %v1446, 0.0
          %v1458 = vadd.f32 %v1456, %v1457
          %v1459 = vsel %vm412, %v1447, 0.0
          %v1460 = vadd.f32 %v1458, %v1459
          %v1461 = vsel %vm412, %v1448, 0.0
          %v1462 = vadd.f32 %v1460, %v1461
          %v1463 = vrot.slane %v1462, 4
          %v1464 = vadd.f32 %v1462, %v1463
          %v1465 = vrot.slane %v1464, 2
          %v1466 = vadd.f32 %v1464, %v1465
          %v1467 = vrot.slane %v1466, 1
          %v1468 = vadd.f32 %v1466, %v1467
          %v1469 = vsel %vm412, %v1449, 0.0
          %v1470 = vsel %vm412, %v1450, 0.0
          %v1471 = vadd.f32 %v1469, %v1470
          %v1472 = vsel %vm412, %v1451, 0.0
          %v1473 = vadd.f32 %v1471, %v1472
          %v1474 = vsel %vm412, %v1452, 0.0
          %v1475 = vadd.f32 %v1473, %v1474
          %v1476 = vsel %vm412, %v1453, 0.0
          %v1477 = vadd.f32 %v1475, %v1476
          %v1478 = vrot.slane %v1477, 4
          %v1479 = vadd.f32 %v1477, %v1478
          %v1480 = vrot.slane %v1479, 2
          %v1481 = vadd.f32 %v1479, %v1480
          %v1482 = vrot.slane %v1481, 1
          %v1483 = vadd.f32 %v1481, %v1482
          %v1484 = vmul.f32 %v1468, %v443
          %v1485 = vmul.f32 %v1483, %v443
          %v1488 = vsel %vm448, %v1485, %v1484
          %1490 = vst.msk [vmem:[#allocation2 + $0x2c] sm:$0x3] %vm451, %v1488
          %v1491 = vld [vmem:[%s1349 + $0x9] sm:$0x1f]
          %v1492 = vld [vmem:[%s1349 + $0x21] sm:$0x1f]
          %v1493 = vld [vmem:[%s1349 + $0x39] sm:$0x1f]
          %v1494 = vld [vmem:[%s1349 + $0x51] sm:$0x1f]
          %v1495 = vld [vmem:[%s1349 + $0x69] sm:$0x1f]
          %v1496 = vld [vmem:[%s1349 + $0x1a1] sm:$0x1f]
          %v1497 = vld [vmem:[%s1349 + $0x1b9] sm:$0x1f]
          %v1498 = vld [vmem:[%s1349 + $0x1d1] sm:$0x1f]
          %v1499 = vld [vmem:[%s1349 + $0x1e9] sm:$0x1f]
          %v1500 = vld [vmem:[%s1349 + $0x201] sm:$0x1f]
          %v1501 = vsel %vm412, %v1491, 0.0
          %v1502 = vsel %vm412, %v1492, 0.0
          %v1503 = vadd.f32 %v1501, %v1502
          %v1504 = vsel %vm412, %v1493, 0.0
          %v1505 = vadd.f32 %v1503, %v1504
          %v1506 = vsel %vm412, %v1494, 0.0
          %v1507 = vadd.f32 %v1505, %v1506
          %v1508 = vsel %vm412, %v1495, 0.0
          %v1509 = vadd.f32 %v1507, %v1508
          %v1510 = vrot.slane %v1509, 4
          %v1511 = vadd.f32 %v1509, %v1510
          %v1512 = vrot.slane %v1511, 2
          %v1513 = vadd.f32 %v1511, %v1512
          %v1514 = vrot.slane %v1513, 1
          %v1515 = vadd.f32 %v1513, %v1514
          %v1516 = vsel %vm412, %v1496, 0.0
          %v1517 = vsel %vm412, %v1497, 0.0
          %v1518 = vadd.f32 %v1516, %v1517
          %v1519 = vsel %vm412, %v1498, 0.0
          %v1520 = vadd.f32 %v1518, %v1519
          %v1521 = vsel %vm412, %v1499, 0.0
          %v1522 = vadd.f32 %v1520, %v1521
          %v1523 = vsel %vm412, %v1500, 0.0
          %v1524 = vadd.f32 %v1522, %v1523
          %v1525 = vrot.slane %v1524, 4
          %v1526 = vadd.f32 %v1524, %v1525
          %v1527 = vrot.slane %v1526, 2
          %v1528 = vadd.f32 %v1526, %v1527
          %v1529 = vrot.slane %v1528, 1
          %v1530 = vadd.f32 %v1528, %v1529
          %v1531 = vmul.f32 %v1515, %v443
          %v1532 = vmul.f32 %v1530, %v443
          %v1535 = vsel %vm448, %v1532, %v1531
          %1537 = vst.msk [vmem:[#allocation2 + $0x2e] sm:$0x3] %vm451, %v1535
          %v1538 = vld [vmem:[%s1349 + $0xc] sm:$0x1f]
          %v1539 = vld [vmem:[%s1349 + $0x24] sm:$0x1f]
          %v1540 = vld [vmem:[%s1349 + $0x3c] sm:$0x1f]
          %v1541 = vld [vmem:[%s1349 + $0x54] sm:$0x1f]
          %v1542 = vld [vmem:[%s1349 + $0x6c] sm:$0x1f]
          %v1543 = vld [vmem:[%s1349 + $0x1a4] sm:$0x1f]
          %v1544 = vld [vmem:[%s1349 + $0x1bc] sm:$0x1f]
          %v1545 = vld [vmem:[%s1349 + $0x1d4] sm:$0x1f]
          %v1546 = vld [vmem:[%s1349 + $0x1ec] sm:$0x1f]
          %v1547 = vld [vmem:[%s1349 + $0x204] sm:$0x1f]
          %v1548 = vsel %vm412, %v1538, 0.0
          %v1549 = vsel %vm412, %v1539, 0.0
          %v1550 = vadd.f32 %v1548, %v1549
          %v1551 = vsel %vm412, %v1540, 0.0
          %v1552 = vadd.f32 %v1550, %v1551
          %v1553 = vsel %vm412, %v1541, 0.0
          %v1554 = vadd.f32 %v1552, %v1553
          %v1555 = vsel %vm412, %v1542, 0.0
          %v1556 = vadd.f32 %v1554, %v1555
          %v1557 = vrot.slane %v1556, 4
          %v1558 = vadd.f32 %v1556, %v1557
          %v1559 = vrot.slane %v1558, 2
          %v1560 = vadd.f32 %v1558, %v1559
          %v1561 = vrot.slane %v1560, 1
          %v1562 = vadd.f32 %v1560, %v1561
          %v1563 = vsel %vm412, %v1543, 0.0
          %v1564 = vsel %vm412, %v1544, 0.0
          %v1565 = vadd.f32 %v1563, %v1564
          %v1566 = vsel %vm412, %v1545, 0.0
          %v1567 = vadd.f32 %v1565, %v1566
          %v1568 = vsel %vm412, %v1546, 0.0
          %v1569 = vadd.f32 %v1567, %v1568
          %v1570 = vsel %vm412, %v1547, 0.0
          %v1571 = vadd.f32 %v1569, %v1570
          %v1572 = vrot.slane %v1571, 4
          %v1573 = vadd.f32 %v1571, %v1572
          %v1574 = vrot.slane %v1573, 2
          %v1575 = vadd.f32 %v1573, %v1574
          %v1576 = vrot.slane %v1575, 1
          %v1577 = vadd.f32 %v1575, %v1576
          %v1578 = vmul.f32 %v1562, %v443
          %v1579 = vmul.f32 %v1577, %v443
          %v1582 = vsel %vm448, %v1579, %v1578
          %1584 = vst.msk [vmem:[#allocation2 + $0x30] sm:$0x3] %vm451, %v1582
          %v1585 = vld [vmem:[#allocation2] sm:$0xff]
          %v1586 = vld [vmem:[#allocation2 + $0x8] sm:$0xff]
          %v1587 = vld [vmem:[#allocation2 + $0x10] sm:$0xff]
          %v1588 = vld [vmem:[#allocation2 + $0x18] sm:$0xff]
          %v1589 = vld [vmem:[#allocation2 + $0x20] sm:$0xff]
          %v1590 = vld [vmem:[#allocation2 + $0x28] sm:$0xff]
          %v1591 = vld [vmem:[#allocation2 + $0x30] sm:$0x3]
          %v1592 = vld [vmem:[#allocation5] sm:$0xff]
          %v1593 = vld [vmem:[#allocation7] sm:$0x1]
          %v1595 = vlaneseq
          %v1596 = vshrl.u32 %v1595, 7
          %v1597 = vsub.s32 0, %v1596
          %v1598 = vrot.slane %v1593, %v1597
          %vm1600 = vcmask 64512
          %v1602 = vsel %vm1600, %v1585, 0
          %v1605 = vsel %vm1600, %v1586, 0
          %v1608 = vsel %vm1600, %v1587, 0
          %v1611 = vsel %vm1600, %v1588, 0
          %v1614 = vsel %vm1600, %v1589, 0
          %v1617 = vsel %vm1600, %v1590, 0
          %v1620 = vsel %vm1600, %v1591, 0
          %1622 = vmatprep.subr.mxu0 0.0
          %1623 = vmatpush1.msra.mxu0 %v1592
          %1624 = vmatprep.subr.mxu0 0.0
          %1625 = vmatpush1.msra.mxu0 0.0
          %1626 = vmatprep.subr.mxu0 0.0
          %1627 = vmatpush1.msra.mxu0 0.0
          %1628 = vmatprep.subr.mxu0 0.0
          %1629 = vmatpush1.msra.mxu0 0.0
          %1630 = vmatprep.subr.mxu0 0.0
          %1631 = vmatpush1.msra.mxu0 0.0
          %1632 = vmatprep.subr.mxu0 0.0
          %1633 = vmatpush1.msra.mxu0 0.0
          %1634 = vmatprep.subr.mxu0 0.0
          %1635 = vmatpush1.msra.mxu0 0.0
          %1636 = vmatprep.subr.mxu0 0.0
          %1637 = vmatpush1.msra.mxu0 0.0
          %1638 = vmatprep.subr.mxu0 0.0
          %1639 = vmatpush1.msra.mxu0 0.0
          %1640 = vmatprep.subr.mxu0 0.0
          %1641 = vmatpush1.msra.mxu0 0.0
          %1642 = vmatprep.subr.mxu0 0.0
          %1643 = vmatpush1.msra.mxu0 0.0
          %1644 = vmatprep.subr.mxu0 0.0
          %1645 = vmatpush1.msra.mxu0 0.0
          %1646 = vmatprep.subr.mxu0 0.0
          %1647 = vmatpush1.msra.mxu0 0.0
          %1648 = vmatprep.subr.mxu0 0.0
          %1649 = vmatpush1.msra.mxu0 0.0
          %1650 = vmatprep.subr.mxu0 0.0
          %1651 = vmatpush1.msra.mxu0 0.0
          %1652 = vmatprep.subr.mxu0 0.0
          %1653 = vmatpush1.msra.mxu0 0.0
          %1654 = vmatprep.subr.mxu0 0.0
          %1655 = vmatpush1.msra.mxu0 0.0
          %1656 = vmatprep.subr.mxu0 0.0
          %1657 = vmatpush1.msra.mxu0 0.0
          %1658 = vmatprep.subr.mxu0 0.0
          %1659 = vmatpush1.msra.mxu0 0.0
          %1660 = vmatprep.subr.mxu0 0.0
          %1661 = vmatpush1.msra.mxu0 0.0
          %1662 = vmatprep.subr.mxu0 0.0
          %1663 = vmatpush1.msra.mxu0 0.0
          %1664 = vmatprep.subr.mxu0 0.0
          %1665 = vmatpush1.msra.mxu0 0.0
          %1666 = vmatprep.subr.mxu0 0.0
          %1667 = vmatpush1.msra.mxu0 0.0
          %1668 = vmatprep.subr.mxu0 0.0
          %1669 = vmatpush1.msra.mxu0 0.0
          %1670 = vmatprep.subr.mxu0 0.0
          %1671 = vmatpush1.msra.mxu0 0.0
          %1672 = vmatprep.subr.mxu0 0.0
          %1673 = vmatpush1.msra.mxu0 0.0
          %1674 = vmatprep.subr.mxu0 0.0
          %1675 = vmatpush1.msra.mxu0 0.0
          %1676 = vmatprep.subr.mxu0 0.0
          %1677 = vmatpush1.msra.mxu0 0.0
          %1678 = vmatprep.subr.mxu0 0.0
          %1679 = vmatpush1.msra.mxu0 0.0
          %1680 = vmatprep.subr.mxu0 0.0
          %1681 = vmatpush1.msra.mxu0 0.0
          %1682 = vmatprep.subr.mxu0 0.0
          %1683 = vmatpush1.msra.mxu0 0.0
          %1684 = vmatprep.subr.mxu0 0.0
          %1685 = vmatpush1.msra.mxu0 0.0
          %1686 = vmatprep.mubr.f32.mxu0 0.0
          %1687 = vmatmul.mubr.f32.gmra.mrb[0].mxu0 %v1602
          %v1688 = vpop.f32.mrb[0].mxu0
          %v1689 = vadd.f32 %v1598, %v1688
          %v1690 = vpop.f32.mrb[0].mxu0
          %1691 = vmatprep.mubr.f32.mxu0 0.0
          %1692 = vmatmul.mubr.f32.gmra.mrb[0].mxu0 %v1605
          %v1693 = vpop.f32.mrb[0].mxu0
          %v1694 = vadd.f32 %v1598, %v1693
          %v1695 = vpop.f32.mrb[0].mxu0
          %1696 = vmatprep.mubr.f32.mxu0 0.0
          %1697 = vmatmul.mubr.f32.gmra.mrb[0].mxu0 %v1608
          %v1698 = vpop.f32.mrb[0].mxu0
          %v1699 = vadd.f32 %v1598, %v1698
          %v1700 = vpop.f32.mrb[0].mxu0
          %1701 = vmatprep.mubr.f32.mxu0 0.0
          %1702 = vmatmul.mubr.f32.gmra.mrb[0].mxu0 %v1611
          %v1703 = vpop.f32.mrb[0].mxu0
          %v1704 = vadd.f32 %v1598, %v1703
          %v1705 = vpop.f32.mrb[0].mxu0
          %1706 = vmatprep.mubr.f32.mxu0 0.0
          %1707 = vmatmul.mubr.f32.gmra.mrb[0].mxu0 %v1614
          %v1708 = vpop.f32.mrb[0].mxu0
          %v1709 = vadd.f32 %v1598, %v1708
          %v1710 = vpop.f32.mrb[0].mxu0
          %1711 = vmatprep.mubr.f32.mxu0 0.0
          %1712 = vmatmul.mubr.f32.gmra.mrb[0].mxu0 %v1617
          %v1713 = vpop.f32.mrb[0].mxu0
          %v1714 = vadd.f32 %v1598, %v1713
          %v1715 = vpop.f32.mrb[0].mxu0
          %1716 = vmatprep.mubr.f32.mxu0 0.0
          %1717 = vmatmul.mubr.f32.gmra.mrb[0].mxu0 %v1620
          %v1718 = vpop.f32.mrb[0].mxu0
          %v1719 = vadd.f32 %v1598, %v1718
          %v1720 = vpop.f32.mrb[0].mxu0
          %1721 = vdwg.mxu0
          %v1722 = vmax.f32 %v1689, 0.0
          %v1723 = vmax.f32 %v1694, 0.0
          %v1724 = vmax.f32 %v1699, 0.0
          %v1725 = vmax.f32 %v1704, 0.0
          %v1726 = vmax.f32 %v1709, 0.0
          %v1727 = vmax.f32 %v1714, 0.0
          %v1728 = vmax.f32 %v1719, 0.0
          %v1729 = vpack.c.bf16 %v1723, %v1722
          %v1730 = vpack.c.bf16 %v1725, %v1724
          %v1731 = vpack.c.bf16 %v1727, %v1726
          %v1732 = vpack.c.bf16 %v1728, %v1728
          %v1737 = vunpack.c.l.b16 %v1729
          %v1738 = vunpack.c.h.b16 %v1729
          %v1739 = vunpack.c.l.b16 %v1730
          %v1740 = vunpack.c.h.b16 %v1730
          %v1741 = vunpack.c.l.b16 %v1731
          %v1742 = vunpack.c.h.b16 %v1731
          %v1743 = vunpack.c.l.b16 %v1732
          %v1744 = vpack.c.b16 %v1737, %v1737
          %v1745 = vpack.c.b16 %v1738, %v1738
          %v1746 = vpack.c.b16 %v1739, %v1739
          %v1747 = vpack.c.b16 %v1740, %v1740
          %v1748 = vpack.c.b16 %v1741, %v1741
          %v1749 = vpack.c.b16 %v1742, %v1742
          %v1750 = vpack.c.b16 %v1743, %v1743
          %1758 = vst [vmem:[#allocation3] sm:$0xf] %v1744
          %1759 = vst [vmem:[#allocation3 + $0x4] sm:$0xf] %v1745
          %1760 = vst [vmem:[#allocation3 + $0x8] sm:$0xf] %v1746
          %1761 = vst [vmem:[#allocation3 + $0xc] sm:$0xf] %v1747
          %1762 = vst [vmem:[#allocation3 + $0x10] sm:$0xf] %v1748
          %1763 = vst [vmem:[#allocation3 + $0x14] sm:$0xf] %v1749
          %1764 = vst [vmem:[#allocation3 + $0x18] sm:$0x1] %v1750
          %v1765 = vld [vmem:[#allocation3] sm:$0x1]
          %1766 = vst [vmem:[#allocation4] sm:$0x1] %v1765
          %v1767 = vld [vmem:[#allocation3] sm:$0x2]
          %v1770 = vunpack.c.l.s4 1966171168
          %v1771 = vunpack.c.0.s8 %v1770
          %v1772 = vlaneseq
          %v1773 = vshrl.u32 %v1772, 7
          %v1774 = vsub.s32 %v1771, %v1773
          %v1775 = vrot.slane %v1767, %v1774
          %v1776 = vcombine.high %v1775, %v1775
          %v1778 = vunpack.c.l.s4 1966171168
          %v1779 = vunpack.c.0.s8 %v1778
          %v1780 = vlaneseq
          %v1781 = vshrl.u32 %v1780, 7
          %v1782 = vsub.s32 %v1779, %v1781
          %v1783 = vrot.slane %v1776, %v1782
          %1785 = vst [vmem:[#allocation4 + $0x1] sm:$0x1] %v1783
          %v1786 = vld [vmem:[#allocation3] sm:$0x4]
          %v1789 = vunpack.c.l.s4 1966171168
          %v1790 = vunpack.c.0.s8 %v1789
          %v1791 = vlaneseq
          %v1792 = vshrl.u32 %v1791, 7
          %v1793 = vsub.s32 %v1790, %v1792
          %v1794 = vrot.slane %v1786, %v1793
          %v1796 = vunpack.c.l.s4 1966171168
          %v1797 = vunpack.c.0.s8 %v1796
          %v1798 = vlaneseq
          %v1799 = vshrl.u32 %v1798, 7
          %v1800 = vsub.s32 %v1797, %v1799
          %v1801 = vrot.slane %v1794, %v1800
          %v1802 = vcombine.high %v1801, %v1801
          %1804 = vst [vmem:[#allocation4 + $0x2] sm:$0x1] %v1802
          %v1805 = vld [vmem:[#allocation3] sm:$0x8]
          %v1808 = vunpack.c.l.s4 1966171168
          %v1809 = vunpack.c.0.s8 %v1808
          %v1810 = vlaneseq
          %v1811 = vshrl.u32 %v1810, 7
          %v1812 = vsub.s32 %v1809, %v1811
          %v1813 = vrot.slane %v1805, %v1812
          %v1814 = vcombine.high %v1813, %v1813
          %v1816 = vunpack.c.l.s4 1966171168
          %v1817 = vunpack.c.0.s8 %v1816
          %v1818 = vlaneseq
          %v1819 = vshrl.u32 %v1818, 7
          %v1820 = vsub.s32 %v1817, %v1819
          %v1821 = vrot.slane %v1814, %v1820
          %v1822 = vcombine.high %v1821, %v1821
          %1824 = vst [vmem:[#allocation4 + $0x3] sm:$0x1] %v1822
          %v1825 = vld [vmem:[#allocation3 + $0x4] sm:$0x1]
          %1826 = vst [vmem:[#allocation4 + $0x4] sm:$0x1] %v1825
          %v1827 = vld [vmem:[#allocation3 + $0x4] sm:$0x2]
          %v1830 = vunpack.c.l.s4 1966171168
          %v1831 = vunpack.c.0.s8 %v1830
          %v1832 = vlaneseq
          %v1833 = vshrl.u32 %v1832, 7
          %v1834 = vsub.s32 %v1831, %v1833
          %v1835 = vrot.slane %v1827, %v1834
          %v1836 = vcombine.high %v1835, %v1835
          %v1838 = vunpack.c.l.s4 1966171168
          %v1839 = vunpack.c.0.s8 %v1838
          %v1840 = vlaneseq
          %v1841 = vshrl.u32 %v1840, 7
          %v1842 = vsub.s32 %v1839, %v1841
          %v1843 = vrot.slane %v1836, %v1842
          %1845 = vst [vmem:[#allocation4 + $0x5] sm:$0x1] %v1843
          %v1846 = vld [vmem:[#allocation3 + $0x4] sm:$0x4]
          %v1849 = vunpack.c.l.s4 1966171168
          %v1850 = vunpack.c.0.s8 %v1849
          %v1851 = vlaneseq
          %v1852 = vshrl.u32 %v1851, 7
          %v1853 = vsub.s32 %v1850, %v1852
          %v1854 = vrot.slane %v1846, %v1853
          %v1856 = vunpack.c.l.s4 1966171168
          %v1857 = vunpack.c.0.s8 %v1856
          %v1858 = vlaneseq
          %v1859 = vshrl.u32 %v1858, 7
          %v1860 = vsub.s32 %v1857, %v1859
          %v1861 = vrot.slane %v1854, %v1860
          %v1862 = vcombine.high %v1861, %v1861
          %1864 = vst [vmem:[#allocation4 + $0x6] sm:$0x1] %v1862
          %v1865 = vld [vmem:[#allocation3 + $0x4] sm:$0x8]
          %v1868 = vunpack.c.l.s4 1966171168
          %v1869 = vunpack.c.0.s8 %v1868
          %v1870 = vlaneseq
          %v1871 = vshrl.u32 %v1870, 7
          %v1872 = vsub.s32 %v1869, %v1871
          %v1873 = vrot.slane %v1865, %v1872
          %v1874 = vcombine.high %v1873, %v1873
          %v1876 = vunpack.c.l.s4 1966171168
          %v1877 = vunpack.c.0.s8 %v1876
          %v1878 = vlaneseq
          %v1879 = vshrl.u32 %v1878, 7
          %v1880 = vsub.s32 %v1877, %v1879
          %v1881 = vrot.slane %v1874, %v1880
          %v1882 = vcombine.high %v1881, %v1881
          %1884 = vst [vmem:[#allocation4 + $0x7] sm:$0x1] %v1882
          %v1885 = vld [vmem:[#allocation3 + $0x8] sm:$0x1]
          %1886 = vst [vmem:[#allocation4 + $0x8] sm:$0x1] %v1885
          %v1887 = vld [vmem:[#allocation3 + $0x8] sm:$0x2]
          %v1890 = vunpack.c.l.s4 1966171168
          %v1891 = vunpack.c.0.s8 %v1890
          %v1892 = vlaneseq
          %v1893 = vshrl.u32 %v1892, 7
          %v1894 = vsub.s32 %v1891, %v1893
          %v1895 = vrot.slane %v1887, %v1894
          %v1896 = vcombine.high %v1895, %v1895
          %v1898 = vunpack.c.l.s4 1966171168
          %v1899 = vunpack.c.0.s8 %v1898
          %v1900 = vlaneseq
          %v1901 = vshrl.u32 %v1900, 7
          %v1902 = vsub.s32 %v1899, %v1901
          %v1903 = vrot.slane %v1896, %v1902
          %1905 = vst [vmem:[#allocation4 + $0x9] sm:$0x1] %v1903
          %v1906 = vld [vmem:[#allocation3 + $0x8] sm:$0x4]
          %v1909 = vunpack.c.l.s4 1966171168
          %v1910 = vunpack.c.0.s8 %v1909
          %v1911 = vlaneseq
          %v1912 = vshrl.u32 %v1911, 7
          %v1913 = vsub.s32 %v1910, %v1912
          %v1914 = vrot.slane %v1906, %v1913
          %v1916 = vunpack.c.l.s4 1966171168
          %v1917 = vunpack.c.0.s8 %v1916
          %v1918 = vlaneseq
          %v1919 = vshrl.u32 %v1918, 7
          %v1920 = vsub.s32 %v1917, %v1919
          %v1921 = vrot.slane %v1914, %v1920
          %v1922 = vcombine.high %v1921, %v1921
          %1924 = vst [vmem:[#allocation4 + $0xa] sm:$0x1] %v1922
          %v1925 = vld [vmem:[#allocation3 + $0x8] sm:$0x8]
          %v1928 = vunpack.c.l.s4 1966171168
          %v1929 = vunpack.c.0.s8 %v1928
          %v1930 = vlaneseq
          %v1931 = vshrl.u32 %v1930, 7
          %v1932 = vsub.s32 %v1929, %v1931
          %v1933 = vrot.slane %v1925, %v1932
          %v1934 = vcombine.high %v1933, %v1933
          %v1936 = vunpack.c.l.s4 1966171168
          %v1937 = vunpack.c.0.s8 %v1936
          %v1938 = vlaneseq
          %v1939 = vshrl.u32 %v1938, 7
          %v1940 = vsub.s32 %v1937, %v1939
          %v1941 = vrot.slane %v1934, %v1940
          %v1942 = vcombine.high %v1941, %v1941
          %1944 = vst [vmem:[#allocation4 + $0xb] sm:$0x1] %v1942
          %v1945 = vld [vmem:[#allocation3 + $0xc] sm:$0x1]
          %1946 = vst [vmem:[#allocation4 + $0xc] sm:$0x1] %v1945
          %v1947 = vld [vmem:[#allocation3 + $0xc] sm:$0x2]
          %v1950 = vunpack.c.l.s4 1966171168
          %v1951 = vunpack.c.0.s8 %v1950
          %v1952 = vlaneseq
          %v1953 = vshrl.u32 %v1952, 7
          %v1954 = vsub.s32 %v1951, %v1953
          %v1955 = vrot.slane %v1947, %v1954
          %v1956 = vcombine.high %v1955, %v1955
          %v1958 = vunpack.c.l.s4 1966171168
          %v1959 = vunpack.c.0.s8 %v1958
          %v1960 = vlaneseq
          %v1961 = vshrl.u32 %v1960, 7
          %v1962 = vsub.s32 %v1959, %v1961
          %v1963 = vrot.slane %v1956, %v1962
          %1965 = vst [vmem:[#allocation4 + $0xd] sm:$0x1] %v1963
          %v1966 = vld [vmem:[#allocation3 + $0xc] sm:$0x4]
          %v1969 = vunpack.c.l.s4 1966171168
          %v1970 = vunpack.c.0.s8 %v1969
          %v1971 = vlaneseq
          %v1972 = vshrl.u32 %v1971, 7
          %v1973 = vsub.s32 %v1970, %v1972
          %v1974 = vrot.slane %v1966, %v1973
          %v1976 = vunpack.c.l.s4 1966171168
          %v1977 = vunpack.c.0.s8 %v1976
          %v1978 = vlaneseq
          %v1979 = vshrl.u32 %v1978, 7
          %v1980 = vsub.s32 %v1977, %v1979
          %v1981 = vrot.slane %v1974, %v1980
          %v1982 = vcombine.high %v1981, %v1981
          %1984 = vst [vmem:[#allocation4 + $0xe] sm:$0x1] %v1982
          %v1985 = vld [vmem:[#allocation3 + $0xc] sm:$0x8]
          %v1988 = vunpack.c.l.s4 1966171168
          %v1989 = vunpack.c.0.s8 %v1988
          %v1990 = vlaneseq
          %v1991 = vshrl.u32 %v1990, 7
          %v1992 = vsub.s32 %v1989, %v1991
          %v1993 = vrot.slane %v1985, %v1992
          %v1994 = vcombine.high %v1993, %v1993
          %v1996 = vunpack.c.l.s4 1966171168
          %v1997 = vunpack.c.0.s8 %v1996
          %v1998 = vlaneseq
          %v1999 = vshrl.u32 %v1998, 7
          %v2000 = vsub.s32 %v1997, %v1999
          %v2001 = vrot.slane %v1994, %v2000
          %v2002 = vcombine.high %v2001, %v2001
          %2004 = vst [vmem:[#allocation4 + $0xf] sm:$0x1] %v2002
          %v2005 = vld [vmem:[#allocation3 + $0x10] sm:$0x1]
          %2006 = vst [vmem:[#allocation4 + $0x10] sm:$0x1] %v2005
          %v2007 = vld [vmem:[#allocation3 + $0x10] sm:$0x2]
          %v2010 = vunpack.c.l.s4 1966171168
          %v2011 = vunpack.c.0.s8 %v2010
          %v2012 = vlaneseq
          %v2013 = vshrl.u32 %v2012, 7
          %v2014 = vsub.s32 %v2011, %v2013
          %v2015 = vrot.slane %v2007, %v2014
          %v2016 = vcombine.high %v2015, %v2015
          %v2018 = vunpack.c.l.s4 1966171168
          %v2019 = vunpack.c.0.s8 %v2018
          %v2020 = vlaneseq
          %v2021 = vshrl.u32 %v2020, 7
          %v2022 = vsub.s32 %v2019, %v2021
          %v2023 = vrot.slane %v2016, %v2022
          %2025 = vst [vmem:[#allocation4 + $0x11] sm:$0x1] %v2023
          %v2026 = vld [vmem:[#allocation3 + $0x10] sm:$0x4]
          %v2029 = vunpack.c.l.s4 1966171168
          %v2030 = vunpack.c.0.s8 %v2029
          %v2031 = vlaneseq
          %v2032 = vshrl.u32 %v2031, 7
          %v2033 = vsub.s32 %v2030, %v2032
          %v2034 = vrot.slane %v2026, %v2033
          %v2036 = vunpack.c.l.s4 1966171168
          %v2037 = vunpack.c.0.s8 %v2036
          %v2038 = vlaneseq
          %v2039 = vshrl.u32 %v2038, 7
          %v2040 = vsub.s32 %v2037, %v2039
          %v2041 = vrot.slane %v2034, %v2040
          %v2042 = vcombine.high %v2041, %v2041
          %2044 = vst [vmem:[#allocation4 + $0x12] sm:$0x1] %v2042
          %v2045 = vld [vmem:[#allocation3 + $0x10] sm:$0x8]
          %v2048 = vunpack.c.l.s4 1966171168
          %v2049 = vunpack.c.0.s8 %v2048
          %v2050 = vlaneseq
          %v2051 = vshrl.u32 %v2050, 7
          %v2052 = vsub.s32 %v2049, %v2051
          %v2053 = vrot.slane %v2045, %v2052
          %v2054 = vcombine.high %v2053, %v2053
          %v2056 = vunpack.c.l.s4 1966171168
          %v2057 = vunpack.c.0.s8 %v2056
          %v2058 = vlaneseq
          %v2059 = vshrl.u32 %v2058, 7
          %v2060 = vsub.s32 %v2057, %v2059
          %v2061 = vrot.slane %v2054, %v2060
          %v2062 = vcombine.high %v2061, %v2061
          %2064 = vst [vmem:[#allocation4 + $0x13] sm:$0x1] %v2062
          %v2065 = vld [vmem:[#allocation3 + $0x14] sm:$0x1]
          %2066 = vst [vmem:[#allocation4 + $0x14] sm:$0x1] %v2065
          %v2067 = vld [vmem:[#allocation3 + $0x14] sm:$0x2]
          %v2070 = vunpack.c.l.s4 1966171168
          %v2071 = vunpack.c.0.s8 %v2070
          %v2072 = vlaneseq
          %v2073 = vshrl.u32 %v2072, 7
          %v2074 = vsub.s32 %v2071, %v2073
          %v2075 = vrot.slane %v2067, %v2074
          %v2076 = vcombine.high %v2075, %v2075
          %v2078 = vunpack.c.l.s4 1966171168
          %v2079 = vunpack.c.0.s8 %v2078
          %v2080 = vlaneseq
          %v2081 = vshrl.u32 %v2080, 7
          %v2082 = vsub.s32 %v2079, %v2081
          %v2083 = vrot.slane %v2076, %v2082
          %2085 = vst [vmem:[#allocation4 + $0x15] sm:$0x1] %v2083
          %v2086 = vld [vmem:[#allocation3 + $0x14] sm:$0x4]
          %v2089 = vunpack.c.l.s4 1966171168
          %v2090 = vunpack.c.0.s8 %v2089
          %v2091 = vlaneseq
          %v2092 = vshrl.u32 %v2091, 7
          %v2093 = vsub.s32 %v2090, %v2092
          %v2094 = vrot.slane %v2086, %v2093
          %v2096 = vunpack.c.l.s4 1966171168
          %v2097 = vunpack.c.0.s8 %v2096
          %v2098 = vlaneseq
          %v2099 = vshrl.u32 %v2098, 7
          %v2100 = vsub.s32 %v2097, %v2099
          %v2101 = vrot.slane %v2094, %v2100
          %v2102 = vcombine.high %v2101, %v2101
          %2104 = vst [vmem:[#allocation4 + $0x16] sm:$0x1] %v2102
          %v2105 = vld [vmem:[#allocation3 + $0x14] sm:$0x8]
          %v2108 = vunpack.c.l.s4 1966171168
          %v2109 = vunpack.c.0.s8 %v2108
          %v2110 = vlaneseq
          %v2111 = vshrl.u32 %v2110, 7
          %v2112 = vsub.s32 %v2109, %v2111
          %v2113 = vrot.slane %v2105, %v2112
          %v2114 = vcombine.high %v2113, %v2113
          %v2116 = vunpack.c.l.s4 1966171168
          %v2117 = vunpack.c.0.s8 %v2116
          %v2118 = vlaneseq
          %v2119 = vshrl.u32 %v2118, 7
          %v2120 = vsub.s32 %v2117, %v2119
          %v2121 = vrot.slane %v2114, %v2120
          %v2122 = vcombine.high %v2121, %v2121
          %2124 = vst [vmem:[#allocation4 + $0x17] sm:$0x1] %v2122
          %v2125 = vld [vmem:[#allocation3 + $0x18] sm:$0x1]
          %2126 = vst [vmem:[#allocation4 + $0x18] sm:$0x1] %v2125
        $region68: #{inception_aux_forward.1} parent=43 // pred_fallthru
          _
        %v2127 = vld [vmem:[#allocation4] sm:$0xff]
        %v2128 = vld [vmem:[#allocation4 + $0x8] sm:$0xff]
        %v2129 = vld [vmem:[#allocation4 + $0x10] sm:$0xff]
        %v2130 = vld [vmem:[#allocation4 + $0x18] sm:$0x1]
        %v2131 = vld [vmem:[%s332] sm:$0xf]
        %v2132 = vld [vmem:[%s332 + $0x4] sm:$0xf]
        %v2133 = vld [vmem:[%s332 + $0x8] sm:$0xf]
        %v2134 = vld [vmem:[%s332 + $0xc] sm:$0xf]
        %v2135 = vld [vmem:[%s332 + $0x10] sm:$0xf]
        %v2136 = vld [vmem:[%s332 + $0x14] sm:$0xf]
        %v2137 = vld [vmem:[%s332 + $0x18] sm:$0xf]
        %v2138 = vld [vmem:[%s332 + $0x1c] sm:$0xf]
        %v2139 = vld [vmem:[%s332 + $0x20] sm:$0xf]
        %v2140 = vld [vmem:[%s332 + $0x24] sm:$0xf]
        %v2141 = vld [vmem:[%s332 + $0x28] sm:$0xf]
        %v2142 = vld [vmem:[%s332 + $0x2c] sm:$0xf]
        %v2143 = vld [vmem:[%s332 + $0x30] sm:$0xf]
        %v2144 = vld [vmem:[%s332 + $0x34] sm:$0xf]
        %v2145 = vld [vmem:[%s332 + $0x38] sm:$0xf]
        %v2146 = vld [vmem:[%s332 + $0x3c] sm:$0xf]
        %v2147 = vld [vmem:[%s332 + $0x40] sm:$0xf]
        %v2148 = vld [vmem:[%s332 + $0x44] sm:$0xf]
        %v2149 = vld [vmem:[%s332 + $0x48] sm:$0xf]
        %v2150 = vld [vmem:[%s332 + $0x4c] sm:$0xf]
        %v2151 = vld [vmem:[%s332 + $0x50] sm:$0xf]
        %v2152 = vld [vmem:[%s332 + $0x54] sm:$0xf]
        %v2153 = vld [vmem:[%s332 + $0x58] sm:$0xf]
        %v2154 = vld [vmem:[%s332 + $0x5c] sm:$0xf]
        %v2155 = vld [vmem:[%s332 + $0x60] sm:$0xf]
        %v2156 = vld [vmem:[%s332 + $0x64] sm:$0xf]
        %v2157 = vld [vmem:[%s332 + $0x68] sm:$0xf]
        %v2158 = vld [vmem:[%s332 + $0x6c] sm:$0xf]
        %v2159 = vld [vmem:[%s332 + $0x70] sm:$0xf]
        %v2160 = vld [vmem:[%s332 + $0x74] sm:$0xf]
        %v2161 = vld [vmem:[%s332 + $0x78] sm:$0xf]
        %v2162 = vld [vmem:[%s332 + $0x7c] sm:$0xf]
        %v2163 = vld [vmem:[%s332 + $0x80] sm:$0xf]
        %v2164 = vld [vmem:[%s332 + $0x84] sm:$0xf]
        %v2165 = vld [vmem:[%s332 + $0x88] sm:$0xf]
        %v2166 = vld [vmem:[%s332 + $0x8c] sm:$0xf]
        %v2167 = vld [vmem:[%s332 + $0x90] sm:$0xf]
        %v2168 = vld [vmem:[%s332 + $0x94] sm:$0xf]
        %v2169 = vld [vmem:[%s332 + $0x98] sm:$0xf]
        %v2170 = vld [vmem:[%s332 + $0x9c] sm:$0xf]
        %v2171 = vld [vmem:[%s332 + $0xa0] sm:$0xf]
        %v2172 = vld [vmem:[%s332 + $0xa4] sm:$0xf]
        %v2173 = vld [vmem:[%s332 + $0xa8] sm:$0xf]
        %v2174 = vld [vmem:[%s332 + $0xac] sm:$0xf]
        %v2175 = vld [vmem:[%s332 + $0xb0] sm:$0xf]
        %v2176 = vld [vmem:[%s332 + $0xb4] sm:$0xf]
        %v2177 = vld [vmem:[%s332 + $0xb8] sm:$0xf]
        %v2178 = vld [vmem:[%s332 + $0xbc] sm:$0xf]
        %v2179 = vld [vmem:[%s332 + $0xc0] sm:$0xf]
        %v2180 = vld [vmem:[%s332 + $0xc4] sm:$0xf]
        %v2181 = vld [vmem:[%s332 + $0xc8] sm:$0xf]
        %v2182 = vld [vmem:[%s332 + $0xcc] sm:$0xf]
        %v2183 = vld [vmem:[%s332 + $0xd0] sm:$0xf]
        %v2184 = vld [vmem:[%s332 + $0xd4] sm:$0xf]
        %v2185 = vld [vmem:[%s332 + $0xd8] sm:$0xf]
        %v2186 = vld [vmem:[%s332 + $0xdc] sm:$0xf]
        %v2187 = vld [vmem:[%s332 + $0xe0] sm:$0xf]
        %v2188 = vld [vmem:[%s332 + $0xe4] sm:$0xf]
        %v2189 = vld [vmem:[%s332 + $0xe8] sm:$0xf]
        %v2190 = vld [vmem:[%s332 + $0xec] sm:$0xf]
        %v2191 = vld [vmem:[%s332 + $0xf0] sm:$0xf]
        %v2192 = vld [vmem:[%s332 + $0xf4] sm:$0xf]
        %v2193 = vld [vmem:[%s332 + $0xf8] sm:$0xf]
        %v2194 = vld [vmem:[%s332 + $0xfc] sm:$0xf]
        %v2195 = vld [vmem:[%s332 + $0x100] sm:$0xf]
        %v2196 = vld [vmem:[%s332 + $0x104] sm:$0xf]
        %v2197 = vld [vmem:[%s332 + $0x108] sm:$0xf]
        %v2198 = vld [vmem:[%s332 + $0x10c] sm:$0xf]
        %v2199 = vld [vmem:[%s332 + $0x110] sm:$0xf]
        %v2200 = vld [vmem:[%s332 + $0x114] sm:$0xf]
        %v2201 = vld [vmem:[%s332 + $0x118] sm:$0xf]
        %v2202 = vld [vmem:[%s332 + $0x11c] sm:$0xf]
        %v2203 = vld [vmem:[%s332 + $0x120] sm:$0xf]
        %v2204 = vld [vmem:[%s332 + $0x124] sm:$0xf]
        %v2205 = vld [vmem:[%s332 + $0x128] sm:$0xf]
        %v2206 = vld [vmem:[%s332 + $0x12c] sm:$0xf]
        %v2207 = vld [vmem:[%s332 + $0x130] sm:$0xf]
        %v2208 = vld [vmem:[%s332 + $0x134] sm:$0xf]
        %v2209 = vld [vmem:[%s332 + $0x138] sm:$0xf]
        %v2210 = vld [vmem:[%s332 + $0x13c] sm:$0xf]
        %v2211 = vld [vmem:[%s332 + $0x140] sm:$0xf]
        %v2212 = vld [vmem:[%s332 + $0x144] sm:$0xf]
        %v2213 = vld [vmem:[%s332 + $0x148] sm:$0xf]
        %v2214 = vld [vmem:[%s332 + $0x14c] sm:$0xf]
        %v2215 = vld [vmem:[%s332 + $0x150] sm:$0xf]
        %v2216 = vld [vmem:[%s332 + $0x154] sm:$0xf]
        %v2217 = vld [vmem:[%s332 + $0x158] sm:$0xf]
        %v2218 = vld [vmem:[%s332 + $0x15c] sm:$0xf]
        %v2219 = vld [vmem:[%s332 + $0x160] sm:$0xf]
        %v2220 = vld [vmem:[%s332 + $0x164] sm:$0xf]
        %v2221 = vld [vmem:[%s332 + $0x168] sm:$0xf]
        %v2222 = vld [vmem:[%s332 + $0x16c] sm:$0xf]
        %v2223 = vld [vmem:[%s332 + $0x170] sm:$0xf]
        %v2224 = vld [vmem:[%s332 + $0x174] sm:$0xf]
        %v2225 = vld [vmem:[%s332 + $0x178] sm:$0xf]
        %v2226 = vld [vmem:[%s332 + $0x17c] sm:$0xf]
        %v2227 = vld [vmem:[%s332 + $0x180] sm:$0xf]
        %v2228 = vld [vmem:[%s332 + $0x184] sm:$0xf]
        %v2229 = vld [vmem:[%s332 + $0x188] sm:$0xf]
        %v2230 = vld [vmem:[%s332 + $0x18c] sm:$0xf]
        %v2231 = vld [vmem:[%s332 + $0x190] sm:$0xf]
        %v2232 = vld [vmem:[%s332 + $0x194] sm:$0xf]
        %v2233 = vld [vmem:[%s332 + $0x198] sm:$0xf]
        %v2234 = vld [vmem:[%s332 + $0x19c] sm:$0xf]
        %v2235 = vld [vmem:[%s332 + $0x1a0] sm:$0xf]
        %v2236 = vld [vmem:[%s332 + $0x1a4] sm:$0xf]
        %v2237 = vld [vmem:[%s332 + $0x1a8] sm:$0xf]
        %v2238 = vld [vmem:[%s332 + $0x1ac] sm:$0xf]
        %v2239 = vld [vmem:[%s332 + $0x1b0] sm:$0xf]
        %v2240 = vld [vmem:[%s332 + $0x1b4] sm:$0xf]
        %v2241 = vld [vmem:[%s332 + $0x1b8] sm:$0xf]
        %v2242 = vld [vmem:[%s332 + $0x1bc] sm:$0xf]
        %v2243 = vld [vmem:[%s332 + $0x1c0] sm:$0xf]
        %v2244 = vld [vmem:[%s332 + $0x1c4] sm:$0xf]
        %v2245 = vld [vmem:[%s332 + $0x1c8] sm:$0xf]
        %v2246 = vld [vmem:[%s332 + $0x1cc] sm:$0xf]
        %v2247 = vld [vmem:[%s332 + $0x1d0] sm:$0xf]
        %v2248 = vld [vmem:[%s332 + $0x1d4] sm:$0xf]
        %v2249 = vld [vmem:[%s332 + $0x1d8] sm:$0xf]
        %v2250 = vld [vmem:[%s332 + $0x1dc] sm:$0xf]
        %v2251 = vld [vmem:[%s332 + $0x1e0] sm:$0xf]
        %v2252 = vld [vmem:[%s332 + $0x1e4] sm:$0xf]
        %v2253 = vld [vmem:[%s332 + $0x1e8] sm:$0xf]
        %v2254 = vld [vmem:[%s332 + $0x1ec] sm:$0xf]
        %v2255 = vld [vmem:[%s332 + $0x1f0] sm:$0xf]
        %v2256 = vld [vmem:[%s332 + $0x1f4] sm:$0xf]
        %v2257 = vld [vmem:[%s332 + $0x1f8] sm:$0xf]
        %v2258 = vld [vmem:[%s332 + $0x1fc] sm:$0xf]
        %v2259 = vld [vmem:[%s332 + $0x200] sm:$0xf]
        %v2260 = vld [vmem:[%s332 + $0x204] sm:$0xf]
        %v2261 = vld [vmem:[%s332 + $0x208] sm:$0xf]
        %v2262 = vld [vmem:[%s332 + $0x20c] sm:$0xf]
        %v2263 = vld [vmem:[%s332 + $0x210] sm:$0xf]
        %v2264 = vld [vmem:[%s332 + $0x214] sm:$0xf]
        %v2265 = vld [vmem:[%s332 + $0x218] sm:$0xf]
        %v2266 = vld [vmem:[%s332 + $0x21c] sm:$0xf]
        %v2267 = vld [vmem:[%s332 + $0x220] sm:$0xf]
        %v2268 = vld [vmem:[%s332 + $0x224] sm:$0xf]
        %v2269 = vld [vmem:[%s332 + $0x228] sm:$0xf]
        %v2270 = vld [vmem:[%s332 + $0x22c] sm:$0xf]
        %v2271 = vld [vmem:[%s332 + $0x230] sm:$0xf]
        %v2272 = vld [vmem:[%s332 + $0x234] sm:$0xf]
        %v2273 = vld [vmem:[%s332 + $0x238] sm:$0xf]
        %v2274 = vld [vmem:[%s332 + $0x23c] sm:$0xf]
        %v2275 = vld [vmem:[%s332 + $0x240] sm:$0xf]
        %v2276 = vld [vmem:[%s332 + $0x244] sm:$0xf]
        %v2277 = vld [vmem:[%s332 + $0x248] sm:$0xf]
        %v2278 = vld [vmem:[%s332 + $0x24c] sm:$0xf]
        %v2279 = vld [vmem:[%s332 + $0x250] sm:$0xf]
        %v2280 = vld [vmem:[%s332 + $0x254] sm:$0xf]
        %v2281 = vld [vmem:[%s332 + $0x258] sm:$0xf]
        %v2282 = vld [vmem:[%s332 + $0x25c] sm:$0xf]
        %v2283 = vld [vmem:[%s332 + $0x260] sm:$0xf]
        %v2284 = vld [vmem:[%s332 + $0x264] sm:$0xf]
        %v2285 = vld [vmem:[%s332 + $0x268] sm:$0xf]
        %v2286 = vld [vmem:[%s332 + $0x26c] sm:$0xf]
        %v2287 = vld [vmem:[%s332 + $0x270] sm:$0xf]
        %v2288 = vld [vmem:[%s332 + $0x274] sm:$0xf]
        %v2289 = vld [vmem:[%s332 + $0x278] sm:$0xf]
        %v2290 = vld [vmem:[%s332 + $0x27c] sm:$0xf]
        %v2291 = vld [vmem:[%s332 + $0x280] sm:$0xf]
        %v2292 = vld [vmem:[%s332 + $0x284] sm:$0xf]
        %v2293 = vld [vmem:[%s332 + $0x288] sm:$0xf]
        %v2294 = vld [vmem:[%s332 + $0x28c] sm:$0xf]
        %v2295 = vld [vmem:[%s332 + $0x290] sm:$0xf]
        %v2296 = vld [vmem:[%s332 + $0x294] sm:$0xf]
        %v2297 = vld [vmem:[%s332 + $0x298] sm:$0xf]
        %v2298 = vld [vmem:[%s332 + $0x29c] sm:$0xf]
        %v2299 = vld [vmem:[%s332 + $0x2a0] sm:$0xf]
        %v2300 = vld [vmem:[%s332 + $0x2a4] sm:$0xf]
        %v2301 = vld [vmem:[%s332 + $0x2a8] sm:$0xf]
        %v2302 = vld [vmem:[%s332 + $0x2ac] sm:$0xf]
        %v2303 = vld [vmem:[%s332 + $0x2b0] sm:$0xf]
        %v2304 = vld [vmem:[%s332 + $0x2b4] sm:$0xf]
        %v2305 = vld [vmem:[%s332 + $0x2b8] sm:$0xf]
        %v2306 = vld [vmem:[%s332 + $0x2bc] sm:$0xf]
        %v2307 = vld [vmem:[%s332 + $0x2c0] sm:$0xf]
        %v2308 = vld [vmem:[%s332 + $0x2c4] sm:$0xf]
        %v2309 = vld [vmem:[%s332 + $0x2c8] sm:$0xf]
        %v2310 = vld [vmem:[%s332 + $0x2cc] sm:$0xf]
        %v2311 = vld [vmem:[%s332 + $0x2d0] sm:$0xf]
        %v2312 = vld [vmem:[%s332 + $0x2d4] sm:$0xf]
        %v2313 = vld [vmem:[%s332 + $0x2d8] sm:$0xf]
        %v2314 = vld [vmem:[%s332 + $0x2dc] sm:$0xf]
        %v2315 = vld [vmem:[%s332 + $0x2e0] sm:$0xf]
        %v2316 = vld [vmem:[%s332 + $0x2e4] sm:$0xf]
        %v2317 = vld [vmem:[%s332 + $0x2e8] sm:$0xf]
        %v2318 = vld [vmem:[%s332 + $0x2ec] sm:$0xf]
        %v2319 = vld [vmem:[%s332 + $0x2f0] sm:$0xf]
        %v2320 = vld [vmem:[%s332 + $0x2f4] sm:$0xf]
        %v2321 = vld [vmem:[%s332 + $0x2f8] sm:$0xf]
        %v2322 = vld [vmem:[%s332 + $0x2fc] sm:$0xf]
        %v2323 = vld [vmem:[%s332 + $0x300] sm:$0xf]
        %v2324 = vld [vmem:[%s332 + $0x304] sm:$0xf]
        %v2325 = vld [vmem:[%s332 + $0x308] sm:$0xf]
        %v2326 = vld [vmem:[%s332 + $0x30c] sm:$0xf]
        %v2327 = vld [vmem:[%s332 + $0x310] sm:$0xf]
        %v2328 = vld [vmem:[%s332 + $0x314] sm:$0xf]
        %v2329 = vld [vmem:[%s332 + $0x318] sm:$0xf]
        %v2330 = vld [vmem:[%s332 + $0x31c] sm:$0xf]
        %v2331 = vld [vmem:[%s332 + $0x320] sm:$0xf]
        %v2332 = vld [vmem:[%s332 + $0x324] sm:$0xf]
        %v2333 = vld [vmem:[%s332 + $0x328] sm:$0xf]
        %v2334 = vld [vmem:[%s332 + $0x32c] sm:$0xf]
        %v2335 = vld [vmem:[%s332 + $0x330] sm:$0xf]
        %v2336 = vld [vmem:[%s332 + $0x334] sm:$0xf]
        %v2337 = vld [vmem:[%s332 + $0x338] sm:$0xf]
        %v2338 = vld [vmem:[%s332 + $0x33c] sm:$0xf]
        %v2339 = vld [vmem:[%s332 + $0x340] sm:$0xf]
        %v2340 = vld [vmem:[%s332 + $0x344] sm:$0xf]
        %v2341 = vld [vmem:[%s332 + $0x348] sm:$0xf]
        %v2342 = vld [vmem:[%s332 + $0x34c] sm:$0xf]
        %v2343 = vld [vmem:[%s332 + $0x350] sm:$0xf]
        %v2344 = vld [vmem:[%s332 + $0x354] sm:$0xf]
        %v2345 = vld [vmem:[%s332 + $0x358] sm:$0xf]
        %v2346 = vld [vmem:[%s332 + $0x35c] sm:$0xf]
        %v2347 = vld [vmem:[%s332 + $0x360] sm:$0xf]
        %v2348 = vld [vmem:[%s332 + $0x364] sm:$0xf]
        %v2349 = vld [vmem:[%s332 + $0x368] sm:$0xf]
        %v2350 = vld [vmem:[%s332 + $0x36c] sm:$0xf]
        %v2351 = vld [vmem:[%s332 + $0x370] sm:$0xf]
        %v2352 = vld [vmem:[%s332 + $0x374] sm:$0xf]
        %v2353 = vld [vmem:[%s332 + $0x378] sm:$0xf]
        %v2354 = vld [vmem:[%s332 + $0x37c] sm:$0xf]
        %v2355 = vld [vmem:[%s332 + $0x380] sm:$0xf]
        %v2356 = vld [vmem:[%s332 + $0x384] sm:$0xf]
        %v2357 = vld [vmem:[%s332 + $0x388] sm:$0xf]
        %v2358 = vld [vmem:[%s332 + $0x38c] sm:$0xf]
        %v2359 = vld [vmem:[%s332 + $0x390] sm:$0xf]
        %v2360 = vld [vmem:[%s332 + $0x394] sm:$0xf]
        %v2361 = vld [vmem:[%s332 + $0x398] sm:$0xf]
        %v2362 = vld [vmem:[%s332 + $0x39c] sm:$0xf]
        %v2363 = vld [vmem:[%s332 + $0x3a0] sm:$0xf]
        %v2364 = vld [vmem:[%s332 + $0x3a4] sm:$0xf]
        %v2365 = vld [vmem:[%s332 + $0x3a8] sm:$0xf]
        %v2366 = vld [vmem:[%s332 + $0x3ac] sm:$0xf]
        %v2367 = vld [vmem:[%s332 + $0x3b0] sm:$0xf]
        %v2368 = vld [vmem:[%s332 + $0x3b4] sm:$0xf]
        %v2369 = vld [vmem:[%s332 + $0x3b8] sm:$0xf]
        %v2370 = vld [vmem:[%s332 + $0x3bc] sm:$0xf]
        %v2371 = vld [vmem:[%s332 + $0x3c0] sm:$0xf]
        %v2372 = vld [vmem:[%s332 + $0x3c4] sm:$0xf]
        %v2373 = vld [vmem:[%s332 + $0x3c8] sm:$0xf]
        %v2374 = vld [vmem:[%s332 + $0x3cc] sm:$0xf]
        %v2375 = vld [vmem:[%s332 + $0x3d0] sm:$0xf]
        %v2376 = vld [vmem:[%s332 + $0x3d4] sm:$0xf]
        %v2377 = vld [vmem:[%s332 + $0x3d8] sm:$0xf]
        %v2378 = vld [vmem:[%s332 + $0x3dc] sm:$0xf]
        %v2379 = vld [vmem:[%s332 + $0x3e0] sm:$0xf]
        %v2380 = vld [vmem:[%s332 + $0x3e4] sm:$0xf]
        %v2381 = vld [vmem:[%s332 + $0x3e8] sm:$0xf]
        %v2382 = vld [vmem:[%s332 + $0x3ec] sm:$0xf]
        %v2383 = vld [vmem:[%s332 + $0x3f0] sm:$0xf]
        %v2384 = vld [vmem:[%s332 + $0x3f4] sm:$0xf]
        %v2385 = vld [vmem:[%s332 + $0x3f8] sm:$0xf]
        %v2386 = vld [vmem:[%s332 + $0x3fc] sm:$0xf]
        %v2387 = vld [vmem:[%s332 + $0x400] sm:$0xf]
        %v2388 = vld [vmem:[%s332 + $0x404] sm:$0xf]
        %v2389 = vld [vmem:[%s332 + $0x408] sm:$0xf]
        %v2390 = vld [vmem:[%s332 + $0x40c] sm:$0xf]
        %v2391 = vld [vmem:[%s332 + $0x410] sm:$0xf]
        %v2392 = vld [vmem:[%s332 + $0x414] sm:$0xf]
        %v2393 = vld [vmem:[%s332 + $0x418] sm:$0xf]
        %v2394 = vld [vmem:[%s332 + $0x41c] sm:$0xf]
        %v2395 = vld [vmem:[%s332 + $0x420] sm:$0xf]
        %v2396 = vld [vmem:[%s332 + $0x424] sm:$0xf]
        %v2397 = vld [vmem:[%s332 + $0x428] sm:$0xf]
        %v2398 = vld [vmem:[%s332 + $0x42c] sm:$0xf]
        %v2399 = vld [vmem:[%s332 + $0x430] sm:$0xf]
        %v2400 = vld [vmem:[%s332 + $0x434] sm:$0xf]
        %v2401 = vld [vmem:[%s332 + $0x438] sm:$0xf]
        %v2402 = vld [vmem:[%s332 + $0x43c] sm:$0xf]
        %v2403 = vld [vmem:[%s332 + $0x440] sm:$0xf]
        %v2404 = vld [vmem:[%s332 + $0x444] sm:$0xf]
        %v2405 = vld [vmem:[%s332 + $0x448] sm:$0xf]
        %v2406 = vld [vmem:[%s332 + $0x44c] sm:$0xf]
        %v2407 = vld [vmem:[%s332 + $0x450] sm:$0xf]
        %v2408 = vld [vmem:[%s332 + $0x454] sm:$0xf]
        %v2409 = vld [vmem:[%s332 + $0x458] sm:$0xf]
        %v2410 = vld [vmem:[%s332 + $0x45c] sm:$0xf]
        %v2411 = vld [vmem:[%s332 + $0x460] sm:$0xf]
        %v2412 = vld [vmem:[%s332 + $0x464] sm:$0xf]
        %v2413 = vld [vmem:[%s332 + $0x468] sm:$0xf]
        %v2414 = vld [vmem:[%s332 + $0x46c] sm:$0xf]
        %v2415 = vld [vmem:[%s332 + $0x470] sm:$0xf]
        %v2416 = vld [vmem:[%s332 + $0x474] sm:$0xf]
        %v2417 = vld [vmem:[%s332 + $0x478] sm:$0xf]
        %v2418 = vld [vmem:[%s332 + $0x47c] sm:$0xf]
        %v2419 = vld [vmem:[%s332 + $0x480] sm:$0xf]
        %v2420 = vld [vmem:[%s332 + $0x484] sm:$0xf]
        %v2421 = vld [vmem:[%s332 + $0x488] sm:$0xf]
        %v2422 = vld [vmem:[%s332 + $0x48c] sm:$0xf]
        %v2423 = vld [vmem:[%s332 + $0x490] sm:$0xf]
        %v2424 = vld [vmem:[%s332 + $0x494] sm:$0xf]
        %v2425 = vld [vmem:[%s332 + $0x498] sm:$0xf]
        %v2426 = vld [vmem:[%s332 + $0x49c] sm:$0xf]
        %v2427 = vld [vmem:[%s332 + $0x4a0] sm:$0xf]
        %v2428 = vld [vmem:[%s332 + $0x4a4] sm:$0xf]
        %v2429 = vld [vmem:[%s332 + $0x4a8] sm:$0xf]
        %v2430 = vld [vmem:[%s332 + $0x4ac] sm:$0xf]
        %v2431 = vld [vmem:[%s332 + $0x4b0] sm:$0xf]
        %v2432 = vld [vmem:[%s332 + $0x4b4] sm:$0xf]
        %v2433 = vld [vmem:[%s332 + $0x4b8] sm:$0xf]
        %v2434 = vld [vmem:[%s332 + $0x4bc] sm:$0xf]
        %v2435 = vld [vmem:[%s332 + $0x4c0] sm:$0xf]
        %v2436 = vld [vmem:[%s332 + $0x4c4] sm:$0xf]
        %v2437 = vld [vmem:[%s332 + $0x4c8] sm:$0xf]
        %v2438 = vld [vmem:[%s332 + $0x4cc] sm:$0xf]
        %v2439 = vld [vmem:[%s332 + $0x4d0] sm:$0xf]
        %v2440 = vld [vmem:[%s332 + $0x4d4] sm:$0xf]
        %v2441 = vld [vmem:[%s332 + $0x4d8] sm:$0xf]
        %v2442 = vld [vmem:[%s332 + $0x4dc] sm:$0xf]
        %v2443 = vld [vmem:[%s332 + $0x4e0] sm:$0xf]
        %v2444 = vld [vmem:[%s332 + $0x4e4] sm:$0xf]
        %v2445 = vld [vmem:[%s332 + $0x4e8] sm:$0xf]
        %v2446 = vld [vmem:[%s332 + $0x4ec] sm:$0xf]
        %v2447 = vld [vmem:[%s332 + $0x4f0] sm:$0xf]
        %v2448 = vld [vmem:[%s332 + $0x4f4] sm:$0xf]
        %v2449 = vld [vmem:[%s332 + $0x4f8] sm:$0xf]
        %v2450 = vld [vmem:[%s332 + $0x4fc] sm:$0xf]
        %v2451 = vld [vmem:[%s332 + $0x500] sm:$0xf]
        %v2452 = vld [vmem:[%s332 + $0x504] sm:$0xf]
        %v2453 = vld [vmem:[%s332 + $0x508] sm:$0xf]
        %v2454 = vld [vmem:[%s332 + $0x50c] sm:$0xf]
        %v2455 = vld [vmem:[%s332 + $0x510] sm:$0xf]
        %v2456 = vld [vmem:[%s332 + $0x514] sm:$0xf]
        %v2457 = vld [vmem:[%s332 + $0x518] sm:$0xf]
        %v2458 = vld [vmem:[%s332 + $0x51c] sm:$0xf]
        %v2459 = vld [vmem:[%s332 + $0x520] sm:$0xf]
        %v2460 = vld [vmem:[%s332 + $0x524] sm:$0xf]
        %v2461 = vld [vmem:[%s332 + $0x528] sm:$0xf]
        %v2462 = vld [vmem:[%s332 + $0x52c] sm:$0xf]
        %v2463 = vld [vmem:[%s332 + $0x530] sm:$0xf]
        %v2464 = vld [vmem:[%s332 + $0x534] sm:$0xf]
        %v2465 = vld [vmem:[%s332 + $0x538] sm:$0xf]
        %v2466 = vld [vmem:[%s332 + $0x53c] sm:$0xf]
        %v2467 = vld [vmem:[%s332 + $0x540] sm:$0xf]
        %v2468 = vld [vmem:[%s332 + $0x544] sm:$0xf]
        %v2469 = vld [vmem:[%s332 + $0x548] sm:$0xf]
        %v2470 = vld [vmem:[%s332 + $0x54c] sm:$0xf]
        %v2471 = vld [vmem:[%s332 + $0x550] sm:$0xf]
        %v2472 = vld [vmem:[%s332 + $0x554] sm:$0xf]
        %v2473 = vld [vmem:[%s332 + $0x558] sm:$0xf]
        %v2474 = vld [vmem:[%s332 + $0x55c] sm:$0xf]
        %v2475 = vld [vmem:[%s332 + $0x560] sm:$0xf]
        %v2476 = vld [vmem:[%s332 + $0x564] sm:$0xf]
        %v2477 = vld [vmem:[%s332 + $0x568] sm:$0xf]
        %v2478 = vld [vmem:[%s332 + $0x56c] sm:$0xf]
        %v2479 = vld [vmem:[%s332 + $0x570] sm:$0xf]
        %v2480 = vld [vmem:[%s332 + $0x574] sm:$0xf]
        %v2481 = vld [vmem:[%s332 + $0x578] sm:$0xf]
        %v2482 = vld [vmem:[%s332 + $0x57c] sm:$0xf]
        %v2483 = vld [vmem:[%s332 + $0x580] sm:$0xf]
        %v2484 = vld [vmem:[%s332 + $0x584] sm:$0xf]
        %v2485 = vld [vmem:[%s332 + $0x588] sm:$0xf]
        %v2486 = vld [vmem:[%s332 + $0x58c] sm:$0xf]
        %v2487 = vld [vmem:[%s332 + $0x590] sm:$0xf]
        %v2488 = vld [vmem:[%s332 + $0x594] sm:$0xf]
        %v2489 = vld [vmem:[%s332 + $0x598] sm:$0xf]
        %v2490 = vld [vmem:[%s332 + $0x59c] sm:$0xf]
        %v2491 = vld [vmem:[%s332 + $0x5a0] sm:$0xf]
        %v2492 = vld [vmem:[%s332 + $0x5a4] sm:$0xf]
        %v2493 = vld [vmem:[%s332 + $0x5a8] sm:$0xf]
        %v2494 = vld [vmem:[%s332 + $0x5ac] sm:$0xf]
        %v2495 = vld [vmem:[%s332 + $0x5b0] sm:$0xf]
        %v2496 = vld [vmem:[%s332 + $0x5b4] sm:$0xf]
        %v2497 = vld [vmem:[%s332 + $0x5b8] sm:$0xf]
        %v2498 = vld [vmem:[%s332 + $0x5bc] sm:$0xf]
        %v2499 = vld [vmem:[%s332 + $0x5c0] sm:$0xf]
        %v2500 = vld [vmem:[%s332 + $0x5c4] sm:$0xf]
        %v2501 = vld [vmem:[%s332 + $0x5c8] sm:$0xf]
        %v2502 = vld [vmem:[%s332 + $0x5cc] sm:$0xf]
        %v2503 = vld [vmem:[%s332 + $0x5d0] sm:$0xf]
        %v2504 = vld [vmem:[%s332 + $0x5d4] sm:$0xf]
        %v2505 = vld [vmem:[%s332 + $0x5d8] sm:$0xf]
        %v2506 = vld [vmem:[%s332 + $0x5dc] sm:$0xf]
        %v2507 = vld [vmem:[%s332 + $0x5e0] sm:$0xf]
        %v2508 = vld [vmem:[%s332 + $0x5e4] sm:$0xf]
        %v2509 = vld [vmem:[%s332 + $0x5e8] sm:$0xf]
        %v2510 = vld [vmem:[%s332 + $0x5ec] sm:$0xf]
        %v2511 = vld [vmem:[%s332 + $0x5f0] sm:$0xf]
        %v2512 = vld [vmem:[%s332 + $0x5f4] sm:$0xf]
        %v2513 = vld [vmem:[%s332 + $0x5f8] sm:$0xf]
        %v2514 = vld [vmem:[%s332 + $0x5fc] sm:$0xf]
        %v2515 = vld [vmem:[%s332 + $0x600] sm:$0xf]
        %v2516 = vld [vmem:[%s332 + $0x604] sm:$0xf]
        %v2517 = vld [vmem:[%s332 + $0x608] sm:$0xf]
        %v2518 = vld [vmem:[%s332 + $0x60c] sm:$0xf]
        %v2519 = vld [vmem:[%s332 + $0x610] sm:$0xf]
        %v2520 = vld [vmem:[%s332 + $0x614] sm:$0xf]
        %v2521 = vld [vmem:[%s332 + $0x618] sm:$0xf]
        %v2522 = vld [vmem:[%s332 + $0x61c] sm:$0xf]
        %v2523 = vld [vmem:[%s332 + $0x620] sm:$0xf]
        %v2524 = vld [vmem:[%s332 + $0x624] sm:$0xf]
        %v2525 = vld [vmem:[%s332 + $0x628] sm:$0xf]
        %v2526 = vld [vmem:[%s332 + $0x62c] sm:$0xf]
        %v2527 = vld [vmem:[%s332 + $0x630] sm:$0xf]
        %v2528 = vld [vmem:[%s332 + $0x634] sm:$0xf]
        %v2529 = vld [vmem:[%s332 + $0x638] sm:$0xf]
        %v2530 = vld [vmem:[%s332 + $0x63c] sm:$0xf]
        %v2531 = vld [vmem:[%s340] sm:$0x1]
        %v2533 = vlaneseq
        %v2534 = vshrl.u32 %v2533, 7
        %v2535 = vsub.s32 0, %v2534
        %v2536 = vrot.slane %v2531, %v2535
        %v2542 = vcombine.high %v2127, %v2127
        %v2544 = vunpack.c.l.s4 1966171168
        %v2545 = vunpack.c.0.s8 %v2544
        %v2546 = vlaneseq
        %v2547 = vshrl.u32 %v2546, 7
        %v2548 = vsub.s32 %v2545, %v2547
        %v2549 = vrot.slane %v2127, %v2548
        %v2551 = vunpack.c.l.s4 1966171168
        %v2552 = vunpack.c.0.s8 %v2551
        %v2553 = vlaneseq
        %v2554 = vshrl.u32 %v2553, 7
        %v2555 = vsub.s32 %v2552, %v2554
        %v2556 = vrot.slane %v2542, %v2555
        %v2557 = vcombine.high %v2549, %v2549
        %v2558 = vcombine.high %v2556, %v2556
        %v2560 = vunpack.c.l.s4 1966171168
        %v2561 = vunpack.c.0.s8 %v2560
        %v2562 = vlaneseq
        %v2563 = vshrl.u32 %v2562, 7
        %v2564 = vsub.s32 %v2561, %v2563
        %v2565 = vrot.slane %v2549, %v2564
        %v2567 = vunpack.c.l.s4 1966171168
        %v2568 = vunpack.c.0.s8 %v2567
        %v2569 = vlaneseq
        %v2570 = vshrl.u32 %v2569, 7
        %v2571 = vsub.s32 %v2568, %v2570
        %v2572 = vrot.slane %v2556, %v2571
        %v2574 = vunpack.c.l.s4 1966171168
        %v2575 = vunpack.c.0.s8 %v2574
        %v2576 = vlaneseq
        %v2577 = vshrl.u32 %v2576, 7
        %v2578 = vsub.s32 %v2575, %v2577
        %v2579 = vrot.slane %v2557, %v2578
        %v2581 = vunpack.c.l.s4 1966171168
        %v2582 = vunpack.c.0.s8 %v2581
        %v2583 = vlaneseq
        %v2584 = vshrl.u32 %v2583, 7
        %v2585 = vsub.s32 %v2582, %v2584
        %v2586 = vrot.slane %v2558, %v2585
        %v2587 = vcombine.high %v2565, %v2565
        %v2588 = vcombine.high %v2572, %v2572
        %v2589 = vcombine.high %v2579, %v2579
        %v2590 = vcombine.high %v2586, %v2586
        %v2591 = vcombine.high %v2128, %v2128
        %v2593 = vunpack.c.l.s4 1966171168
        %v2594 = vunpack.c.0.s8 %v2593
        %v2595 = vlaneseq
        %v2596 = vshrl.u32 %v2595, 7
        %v2597 = vsub.s32 %v2594, %v2596
        %v2598 = vrot.slane %v2128, %v2597
        %v2600 = vunpack.c.l.s4 1966171168
        %v2601 = vunpack.c.0.s8 %v2600
        %v2602 = vlaneseq
        %v2603 = vshrl.u32 %v2602, 7
        %v2604 = vsub.s32 %v2601, %v2603
        %v2605 = vrot.slane %v2591, %v2604
        %v2606 = vcombine.high %v2598, %v2598
        %v2607 = vcombine.high %v2605, %v2605
        %v2609 = vunpack.c.l.s4 1966171168
        %v2610 = vunpack.c.0.s8 %v2609
        %v2611 = vlaneseq
        %v2612 = vshrl.u32 %v2611, 7
        %v2613 = vsub.s32 %v2610, %v2612
        %v2614 = vrot.slane %v2598, %v2613
        %v2616 = vunpack.c.l.s4 1966171168
        %v2617 = vunpack.c.0.s8 %v2616
        %v2618 = vlaneseq
        %v2619 = vshrl.u32 %v2618, 7
        %v2620 = vsub.s32 %v2617, %v2619
        %v2621 = vrot.slane %v2605, %v2620
        %v2623 = vunpack.c.l.s4 1966171168
        %v2624 = vunpack.c.0.s8 %v2623
        %v2625 = vlaneseq
        %v2626 = vshrl.u32 %v2625, 7
        %v2627 = vsub.s32 %v2624, %v2626
        %v2628 = vrot.slane %v2606, %v2627
        %v2630 = vunpack.c.l.s4 1966171168
        %v2631 = vunpack.c.0.s8 %v2630
        %v2632 = vlaneseq
        %v2633 = vshrl.u32 %v2632, 7
        %v2634 = vsub.s32 %v2631, %v2633
        %v2635 = vrot.slane %v2607, %v2634
        %v2636 = vcombine.high %v2614, %v2614
        %v2637 = vcombine.high %v2621, %v2621
        %v2638 = vcombine.high %v2628, %v2628
        %v2639 = vcombine.high %v2635, %v2635
        %v2640 = vcombine.high %v2129, %v2129
        %v2642 = vunpack.c.l.s4 1966171168
        %v2643 = vunpack.c.0.s8 %v2642
        %v2644 = vlaneseq
        %v2645 = vshrl.u32 %v2644, 7
        %v2646 = vsub.s32 %v2643, %v2645
        %v2647 = vrot.slane %v2129, %v2646
        %v2649 = vunpack.c.l.s4 1966171168
        %v2650 = vunpack.c.0.s8 %v2649
        %v2651 = vlaneseq
        %v2652 = vshrl.u32 %v2651, 7
        %v2653 = vsub.s32 %v2650, %v2652
        %v2654 = vrot.slane %v2640, %v2653
        %v2655 = vcombine.high %v2647, %v2647
        %v2656 = vcombine.high %v2654, %v2654
        %v2658 = vunpack.c.l.s4 1966171168
        %v2659 = vunpack.c.0.s8 %v2658
        %v2660 = vlaneseq
        %v2661 = vshrl.u32 %v2660, 7
        %v2662 = vsub.s32 %v2659, %v2661
        %v2663 = vrot.slane %v2647, %v2662
        %v2665 = vunpack.c.l.s4 1966171168
        %v2666 = vunpack.c.0.s8 %v2665
        %v2667 = vlaneseq
        %v2668 = vshrl.u32 %v2667, 7
        %v2669 = vsub.s32 %v2666, %v2668
        %v2670 = vrot.slane %v2654, %v2669
        %v2672 = vunpack.c.l.s4 1966171168
        %v2673 = vunpack.c.0.s8 %v2672
        %v2674 = vlaneseq
        %v2675 = vshrl.u32 %v2674, 7
        %v2676 = vsub.s32 %v2673, %v2675
        %v2677 = vrot.slane %v2655, %v2676
        %v2679 = vunpack.c.l.s4 1966171168
        %v2680 = vunpack.c.0.s8 %v2679
        %v2681 = vlaneseq
        %v2682 = vshrl.u32 %v2681, 7
        %v2683 = vsub.s32 %v2680, %v2682
        %v2684 = vrot.slane %v2656, %v2683
        %v2685 = vcombine.high %v2663, %v2663
        %v2686 = vcombine.high %v2670, %v2670
        %v2687 = vcombine.high %v2677, %v2677
        %v2688 = vcombine.high %v2684, %v2684
        %v2690 = vunpack.c.l.s4 1966171168
        %v2691 = vunpack.c.0.s8 %v2690
        %v2692 = vlaneseq
        %v2693 = vshrl.u32 %v2692, 7
        %v2694 = vsub.s32 %v2691, %v2693
        %v2695 = vrot.slane %v2130, %v2694
        %v2697 = vunpack.c.l.s4 1966171168
        %v2698 = vunpack.c.0.s8 %v2697
        %v2699 = vlaneseq
        %v2700 = vshrl.u32 %v2699, 7
        %v2701 = vsub.s32 %v2698, %v2700
        %v2702 = vrot.slane %v2695, %v2701
        %v3128 = vunpack.c.l.b16 %v2131
        %v3129 = vunpack.c.l.b16 %v2132
        %v3130 = vunpack.c.l.b16 %v2133
        %v3131 = vunpack.c.l.b16 %v2134
        %v3132 = vunpack.c.l.b16 %v2135
        %v3133 = vunpack.c.l.b16 %v2136
        %v3134 = vunpack.c.l.b16 %v2137
        %v3135 = vunpack.c.l.b16 %v2138
        %v3136 = vunpack.c.l.b16 %v2139
        %v3137 = vunpack.c.l.b16 %v2140
        %v3138 = vunpack.c.l.b16 %v2141
        %v3139 = vunpack.c.l.b16 %v2142
        %v3140 = vunpack.c.l.b16 %v2143
        %v3141 = vunpack.c.l.b16 %v2144
        %v3142 = vunpack.c.l.b16 %v2145
        %v3143 = vunpack.c.l.b16 %v2146
        %v3144 = vunpack.c.l.b16 %v2147
        %v3145 = vunpack.c.l.b16 %v2148
        %v3146 = vunpack.c.l.b16 %v2149
        %v3147 = vunpack.c.l.b16 %v2150
        %v3148 = vunpack.c.l.b16 %v2151
        %v3149 = vunpack.c.l.b16 %v2152
        %v3150 = vunpack.c.l.b16 %v2153
        %v3151 = vunpack.c.l.b16 %v2154
        %v3152 = vunpack.c.l.b16 %v2155
        %v3153 = vunpack.c.l.b16 %v2156
        %v3154 = vunpack.c.l.b16 %v2157
        %v3155 = vunpack.c.l.b16 %v2158
        %v3156 = vunpack.c.l.b16 %v2159
        %v3157 = vunpack.c.l.b16 %v2160
        %v3158 = vunpack.c.l.b16 %v2161
        %v3159 = vunpack.c.l.b16 %v2162
        %v3160 = vunpack.c.l.b16 %v2163
        %v3161 = vunpack.c.l.b16 %v2164
        %v3162 = vunpack.c.l.b16 %v2165
        %v3163 = vunpack.c.l.b16 %v2166
        %v3164 = vunpack.c.l.b16 %v2167
        %v3165 = vunpack.c.l.b16 %v2168
        %v3166 = vunpack.c.l.b16 %v2169
        %v3167 = vunpack.c.l.b16 %v2170
        %v3168 = vunpack.c.l.b16 %v2171
        %v3169 = vunpack.c.l.b16 %v2172
        %v3170 = vunpack.c.l.b16 %v2173
        %v3171 = vunpack.c.l.b16 %v2174
        %v3172 = vunpack.c.l.b16 %v2175
        %v3173 = vunpack.c.l.b16 %v2176
        %v3174 = vunpack.c.l.b16 %v2177
        %v3175 = vunpack.c.l.b16 %v2178
        %v3176 = vunpack.c.l.b16 %v2179
        %v3177 = vunpack.c.l.b16 %v2180
        %v3178 = vunpack.c.l.b16 %v2181
        %v3179 = vunpack.c.l.b16 %v2182
        %v3180 = vunpack.c.l.b16 %v2183
        %v3181 = vunpack.c.l.b16 %v2184
        %v3182 = vunpack.c.l.b16 %v2185
        %v3183 = vunpack.c.l.b16 %v2186
        %v3184 = vunpack.c.l.b16 %v2187
        %v3185 = vunpack.c.l.b16 %v2188
        %v3186 = vunpack.c.l.b16 %v2189
        %v3187 = vunpack.c.l.b16 %v2190
        %v3188 = vunpack.c.l.b16 %v2191
        %v3189 = vunpack.c.l.b16 %v2192
        %v3190 = vunpack.c.l.b16 %v2193
        %v3191 = vunpack.c.l.b16 %v2194
        %v3192 = vunpack.c.l.b16 %v2195
        %v3193 = vunpack.c.l.b16 %v2196
        %v3194 = vunpack.c.l.b16 %v2197
        %v3195 = vunpack.c.l.b16 %v2198
        %v3196 = vunpack.c.l.b16 %v2199
        %v3197 = vunpack.c.l.b16 %v2200
        %v3198 = vunpack.c.l.b16 %v2201
        %v3199 = vunpack.c.l.b16 %v2202
        %v3200 = vunpack.c.l.b16 %v2203
        %v3201 = vunpack.c.l.b16 %v2204
        %v3202 = vunpack.c.l.b16 %v2205
        %v3203 = vunpack.c.l.b16 %v2206
        %v3204 = vunpack.c.l.b16 %v2207
        %v3205 = vunpack.c.l.b16 %v2208
        %v3206 = vunpack.c.l.b16 %v2209
        %v3207 = vunpack.c.l.b16 %v2210
        %v3208 = vunpack.c.l.b16 %v2211
        %v3209 = vunpack.c.l.b16 %v2212
        %v3210 = vunpack.c.l.b16 %v2213
        %v3211 = vunpack.c.l.b16 %v2214
        %v3212 = vunpack.c.l.b16 %v2215
        %v3213 = vunpack.c.l.b16 %v2216
        %v3214 = vunpack.c.l.b16 %v2217
        %v3215 = vunpack.c.l.b16 %v2218
        %v3216 = vunpack.c.l.b16 %v2219
        %v3217 = vunpack.c.l.b16 %v2220
        %v3218 = vunpack.c.l.b16 %v2221
        %v3219 = vunpack.c.l.b16 %v2222
        %v3220 = vunpack.c.l.b16 %v2223
        %v3221 = vunpack.c.l.b16 %v2224
        %v3222 = vunpack.c.l.b16 %v2225
        %v3223 = vunpack.c.l.b16 %v2226
        %v3224 = vunpack.c.l.b16 %v2227
        %v3225 = vunpack.c.l.b16 %v2228
        %v3226 = vunpack.c.l.b16 %v2229
        %v3227 = vunpack.c.l.b16 %v2230
        %v3228 = vunpack.c.l.b16 %v2231
        %v3229 = vunpack.c.l.b16 %v2232
        %v3230 = vunpack.c.l.b16 %v2233
        %v3231 = vunpack.c.l.b16 %v2234
        %v3232 = vunpack.c.l.b16 %v2235
        %v3233 = vunpack.c.l.b16 %v2236
        %v3234 = vunpack.c.l.b16 %v2237
        %v3235 = vunpack.c.l.b16 %v2238
        %v3236 = vunpack.c.l.b16 %v2239
        %v3237 = vunpack.c.l.b16 %v2240
        %v3238 = vunpack.c.l.b16 %v2241
        %v3239 = vunpack.c.l.b16 %v2242
        %v3240 = vunpack.c.l.b16 %v2243
        %v3241 = vunpack.c.l.b16 %v2244
        %v3242 = vunpack.c.l.b16 %v2245
        %v3243 = vunpack.c.l.b16 %v2246
        %v3244 = vunpack.c.l.b16 %v2247
        %v3245 = vunpack.c.l.b16 %v2248
        %v3246 = vunpack.c.l.b16 %v2249
        %v3247 = vunpack.c.l.b16 %v2250
        %v3248 = vunpack.c.l.b16 %v2251
        %v3249 = vunpack.c.l.b16 %v2252
        %v3250 = vunpack.c.l.b16 %v2253
        %v3251 = vunpack.c.l.b16 %v2254
        %v3252 = vunpack.c.l.b16 %v2255
        %v3253 = vunpack.c.l.b16 %v2256
        %v3254 = vunpack.c.l.b16 %v2257
        %v3255 = vunpack.c.l.b16 %v2258
        %v3256 = vunpack.c.l.b16 %v2259
        %v3257 = vunpack.c.l.b16 %v2260
        %v3258 = vunpack.c.l.b16 %v2261
        %v3259 = vunpack.c.l.b16 %v2262
        %v3260 = vunpack.c.l.b16 %v2263
        %v3261 = vunpack.c.l.b16 %v2264
        %v3262 = vunpack.c.l.b16 %v2265
        %v3263 = vunpack.c.l.b16 %v2266
        %v3264 = vunpack.c.l.b16 %v2267
        %v3265 = vunpack.c.l.b16 %v2268
        %v3266 = vunpack.c.l.b16 %v2269
        %v3267 = vunpack.c.l.b16 %v2270
        %v3268 = vunpack.c.l.b16 %v2271
        %v3269 = vunpack.c.l.b16 %v2272
        %v3270 = vunpack.c.l.b16 %v2273
        %v3271 = vunpack.c.l.b16 %v2274
        %v3272 = vunpack.c.l.b16 %v2275
        %v3273 = vunpack.c.l.b16 %v2276
        %v3274 = vunpack.c.l.b16 %v2277
        %v3275 = vunpack.c.l.b16 %v2278
        %v3276 = vunpack.c.l.b16 %v2279
        %v3277 = vunpack.c.l.b16 %v2280
        %v3278 = vunpack.c.l.b16 %v2281
        %v3279 = vunpack.c.l.b16 %v2282
        %v3280 = vunpack.c.l.b16 %v2283
        %v3281 = vunpack.c.l.b16 %v2284
        %v3282 = vunpack.c.l.b16 %v2285
        %v3283 = vunpack.c.l.b16 %v2286
        %v3284 = vunpack.c.l.b16 %v2287
        %v3285 = vunpack.c.l.b16 %v2288
        %v3286 = vunpack.c.l.b16 %v2289
        %v3287 = vunpack.c.l.b16 %v2290
        %v3288 = vunpack.c.l.b16 %v2291
        %v3289 = vunpack.c.l.b16 %v2292
        %v3290 = vunpack.c.l.b16 %v2293
        %v3291 = vunpack.c.l.b16 %v2294
        %v3292 = vunpack.c.l.b16 %v2295
        %v3293 = vunpack.c.l.b16 %v2296
        %v3294 = vunpack.c.l.b16 %v2297
        %v3295 = vunpack.c.l.b16 %v2298
        %v3296 = vunpack.c.l.b16 %v2299
        %v3297 = vunpack.c.l.b16 %v2300
        %v3298 = vunpack.c.l.b16 %v2301
        %v3299 = vunpack.c.l.b16 %v2302
        %v3300 = vunpack.c.l.b16 %v2303
        %v3301 = vunpack.c.l.b16 %v2304
        %v3302 = vunpack.c.l.b16 %v2305
        %v3303 = vunpack.c.l.b16 %v2306
        %v3304 = vunpack.c.l.b16 %v2307
        %v3305 = vunpack.c.l.b16 %v2308
        %v3306 = vunpack.c.l.b16 %v2309
        %v3307 = vunpack.c.l.b16 %v2310
        %v3308 = vunpack.c.l.b16 %v2311
        %v3309 = vunpack.c.l.b16 %v2312
        %v3310 = vunpack.c.l.b16 %v2313
        %v3311 = vunpack.c.l.b16 %v2314
        %v3312 = vunpack.c.l.b16 %v2315
        %v3313 = vunpack.c.l.b16 %v2316
        %v3314 = vunpack.c.l.b16 %v2317
        %v3315 = vunpack.c.l.b16 %v2318
        %v3316 = vunpack.c.l.b16 %v2319
        %v3317 = vunpack.c.l.b16 %v2320
        %v3318 = vunpack.c.l.b16 %v2321
        %v3319 = vunpack.c.l.b16 %v2322
        %v3320 = vunpack.c.l.b16 %v2323
        %v3321 = vunpack.c.l.b16 %v2324
        %v3322 = vunpack.c.l.b16 %v2325
        %v3323 = vunpack.c.l.b16 %v2326
        %v3324 = vunpack.c.l.b16 %v2327
        %v3325 = vunpack.c.l.b16 %v2328
        %v3326 = vunpack.c.l.b16 %v2329
        %v3327 = vunpack.c.l.b16 %v2330
        %v3328 = vunpack.c.l.b16 %v2331
        %v3329 = vunpack.c.l.b16 %v2332
        %v3330 = vunpack.c.l.b16 %v2333
        %v3331 = vunpack.c.l.b16 %v2334
        %v3332 = vunpack.c.l.b16 %v2335
        %v3333 = vunpack.c.l.b16 %v2336
        %v3334 = vunpack.c.l.b16 %v2337
        %v3335 = vunpack.c.l.b16 %v2338
        %v3336 = vunpack.c.l.b16 %v2339
        %v3337 = vunpack.c.l.b16 %v2340
        %v3338 = vunpack.c.l.b16 %v2341
        %v3339 = vunpack.c.l.b16 %v2342
        %v3340 = vunpack.c.l.b16 %v2343
        %v3341 = vunpack.c.l.b16 %v2344
        %v3342 = vunpack.c.l.b16 %v2345
        %v3343 = vunpack.c.l.b16 %v2346
        %v3344 = vunpack.c.l.b16 %v2347
        %v3345 = vunpack.c.l.b16 %v2348
        %v3346 = vunpack.c.l.b16 %v2349
        %v3347 = vunpack.c.l.b16 %v2350
        %v3348 = vunpack.c.l.b16 %v2351
        %v3349 = vunpack.c.l.b16 %v2352
        %v3350 = vunpack.c.l.b16 %v2353
        %v3351 = vunpack.c.l.b16 %v2354
        %v3352 = vunpack.c.l.b16 %v2355
        %v3353 = vunpack.c.l.b16 %v2356
        %v3354 = vunpack.c.l.b16 %v2357
        %v3355 = vunpack.c.l.b16 %v2358
        %v3356 = vunpack.c.l.b16 %v2359
        %v3357 = vunpack.c.l.b16 %v2360
        %v3358 = vunpack.c.l.b16 %v2361
        %v3359 = vunpack.c.l.b16 %v2362
        %v3360 = vunpack.c.l.b16 %v2363
        %v3361 = vunpack.c.l.b16 %v2364
        %v3362 = vunpack.c.l.b16 %v2365
        %v3363 = vunpack.c.l.b16 %v2366
        %v3364 = vunpack.c.l.b16 %v2367
        %v3365 = vunpack.c.l.b16 %v2368
        %v3366 = vunpack.c.l.b16 %v2369
        %v3367 = vunpack.c.l.b16 %v2370
        %v3368 = vunpack.c.l.b16 %v2371
        %v3369 = vunpack.c.l.b16 %v2372
        %v3370 = vunpack.c.l.b16 %v2373
        %v3371 = vunpack.c.l.b16 %v2374
        %v3372 = vunpack.c.l.b16 %v2375
        %v3373 = vunpack.c.l.b16 %v2376
        %v3374 = vunpack.c.l.b16 %v2377
        %v3375 = vunpack.c.l.b16 %v2378
        %v3376 = vunpack.c.l.b16 %v2379
        %v3377 = vunpack.c.l.b16 %v2380
        %v3378 = vunpack.c.l.b16 %v2381
        %v3379 = vunpack.c.l.b16 %v2382
        %v3380 = vunpack.c.l.b16 %v2383
        %v3381 = vunpack.c.l.b16 %v2384
        %v3382 = vunpack.c.l.b16 %v2385
        %v3383 = vunpack.c.l.b16 %v2386
        %v3384 = vunpack.c.l.b16 %v2387
        %v3385 = vunpack.c.l.b16 %v2388
        %v3386 = vunpack.c.l.b16 %v2389
        %v3387 = vunpack.c.l.b16 %v2390
        %v3388 = vunpack.c.l.b16 %v2391
        %v3389 = vunpack.c.l.b16 %v2392
        %v3390 = vunpack.c.l.b16 %v2393
        %v3391 = vunpack.c.l.b16 %v2394
        %v3392 = vunpack.c.l.b16 %v2395
        %v3393 = vunpack.c.l.b16 %v2396
        %v3394 = vunpack.c.l.b16 %v2397
        %v3395 = vunpack.c.l.b16 %v2398
        %v3396 = vunpack.c.l.b16 %v2399
        %v3397 = vunpack.c.l.b16 %v2400
        %v3398 = vunpack.c.l.b16 %v2401
        %v3399 = vunpack.c.l.b16 %v2402
        %v3400 = vunpack.c.l.b16 %v2403
        %v3401 = vunpack.c.l.b16 %v2404
        %v3402 = vunpack.c.l.b16 %v2405
        %v3403 = vunpack.c.l.b16 %v2406
        %v3404 = vunpack.c.l.b16 %v2407
        %v3405 = vunpack.c.l.b16 %v2408
        %v3406 = vunpack.c.l.b16 %v2409
        %v3407 = vunpack.c.l.b16 %v2410
        %v3408 = vunpack.c.l.b16 %v2411
        %v3409 = vunpack.c.l.b16 %v2412
        %v3410 = vunpack.c.l.b16 %v2413
        %v3411 = vunpack.c.l.b16 %v2414
        %v3412 = vunpack.c.l.b16 %v2415
        %v3413 = vunpack.c.l.b16 %v2416
        %v3414 = vunpack.c.l.b16 %v2417
        %v3415 = vunpack.c.l.b16 %v2418
        %v3416 = vunpack.c.l.b16 %v2419
        %v3417 = vunpack.c.l.b16 %v2420
        %v3418 = vunpack.c.l.b16 %v2421
        %v3419 = vunpack.c.l.b16 %v2422
        %v3420 = vunpack.c.l.b16 %v2423
        %v3421 = vunpack.c.l.b16 %v2424
        %v3422 = vunpack.c.l.b16 %v2425
        %v3423 = vunpack.c.l.b16 %v2426
        %v3424 = vunpack.c.l.b16 %v2427
        %v3425 = vunpack.c.l.b16 %v2428
        %v3426 = vunpack.c.l.b16 %v2429
        %v3427 = vunpack.c.l.b16 %v2430
        %v3428 = vunpack.c.l.b16 %v2431
        %v3429 = vunpack.c.l.b16 %v2432
        %v3430 = vunpack.c.l.b16 %v2433
        %v3431 = vunpack.c.l.b16 %v2434
        %v3432 = vunpack.c.l.b16 %v2435
        %v3433 = vunpack.c.l.b16 %v2436
        %v3434 = vunpack.c.l.b16 %v2437
        %v3435 = vunpack.c.l.b16 %v2438
        %v3436 = vunpack.c.l.b16 %v2439
        %v3437 = vunpack.c.l.b16 %v2440
        %v3438 = vunpack.c.l.b16 %v2441
        %v3439 = vunpack.c.l.b16 %v2442
        %v3440 = vunpack.c.l.b16 %v2443
        %v3441 = vunpack.c.l.b16 %v2444
        %v3442 = vunpack.c.l.b16 %v2445
        %v3443 = vunpack.c.l.b16 %v2446
        %v3444 = vunpack.c.l.b16 %v2447
        %v3445 = vunpack.c.l.b16 %v2448
        %v3446 = vunpack.c.l.b16 %v2449
        %v3447 = vunpack.c.l.b16 %v2450
        %v3448 = vunpack.c.l.b16 %v2451
        %v3449 = vunpack.c.l.b16 %v2452
        %v3450 = vunpack.c.l.b16 %v2453
        %v3451 = vunpack.c.l.b16 %v2454
        %v3452 = vunpack.c.l.b16 %v2455
        %v3453 = vunpack.c.l.b16 %v2456
        %v3454 = vunpack.c.l.b16 %v2457
        %v3455 = vunpack.c.l.b16 %v2458
        %v3456 = vunpack.c.l.b16 %v2459
        %v3457 = vunpack.c.l.b16 %v2460
        %v3458 = vunpack.c.l.b16 %v2461
        %v3459 = vunpack.c.l.b16 %v2462
        %v3460 = vunpack.c.l.b16 %v2463
        %v3461 = vunpack.c.l.b16 %v2464
        %v3462 = vunpack.c.l.b16 %v2465
        %v3463 = vunpack.c.l.b16 %v2466
        %v3464 = vunpack.c.l.b16 %v2467
        %v3465 = vunpack.c.l.b16 %v2468
        %v3466 = vunpack.c.l.b16 %v2469
        %v3467 = vunpack.c.l.b16 %v2470
        %v3468 = vunpack.c.l.b16 %v2471
        %v3469 = vunpack.c.l.b16 %v2472
        %v3470 = vunpack.c.l.b16 %v2473
        %v3471 = vunpack.c.l.b16 %v2474
        %v3472 = vunpack.c.l.b16 %v2475
        %v3473 = vunpack.c.l.b16 %v2476
        %v3474 = vunpack.c.l.b16 %v2477
        %v3475 = vunpack.c.l.b16 %v2478
        %v3476 = vunpack.c.l.b16 %v2479
        %v3477 = vunpack.c.l.b16 %v2480
        %v3478 = vunpack.c.l.b16 %v2481
        %v3479 = vunpack.c.l.b16 %v2482
        %v3480 = vunpack.c.l.b16 %v2483
        %v3481 = vunpack.c.l.b16 %v2484
        %v3482 = vunpack.c.l.b16 %v2485
        %v3483 = vunpack.c.l.b16 %v2486
        %v3484 = vunpack.c.l.b16 %v2487
        %v3485 = vunpack.c.l.b16 %v2488
        %v3486 = vunpack.c.l.b16 %v2489
        %v3487 = vunpack.c.l.b16 %v2490
        %v3488 = vunpack.c.l.b16 %v2491
        %v3489 = vunpack.c.l.b16 %v2492
        %v3490 = vunpack.c.l.b16 %v2493
        %v3491 = vunpack.c.l.b16 %v2494
        %v3492 = vunpack.c.l.b16 %v2495
        %v3493 = vunpack.c.l.b16 %v2496
        %v3494 = vunpack.c.l.b16 %v2497
        %v3495 = vunpack.c.l.b16 %v2498
        %v3496 = vunpack.c.l.b16 %v2499
        %v3497 = vunpack.c.l.b16 %v2500
        %v3498 = vunpack.c.l.b16 %v2501
        %v3499 = vunpack.c.l.b16 %v2502
        %v3500 = vunpack.c.l.b16 %v2503
        %v3501 = vunpack.c.l.b16 %v2504
        %v3502 = vunpack.c.l.b16 %v2505
        %v3503 = vunpack.c.l.b16 %v2506
        %v3504 = vunpack.c.l.b16 %v2507
        %v3505 = vunpack.c.l.b16 %v2508
        %v3506 = vunpack.c.l.b16 %v2509
        %v3507 = vunpack.c.l.b16 %v2510
        %v3508 = vunpack.c.l.b16 %v2511
        %v3509 = vunpack.c.l.b16 %v2512
        %v3510 = vunpack.c.l.b16 %v2513
        %v3511 = vunpack.c.l.b16 %v2514
        %v3512 = vunpack.c.l.b16 %v2515
        %v3513 = vunpack.c.l.b16 %v2516
        %v3514 = vunpack.c.l.b16 %v2517
        %v3515 = vunpack.c.l.b16 %v2518
        %v3516 = vunpack.c.l.b16 %v2519
        %v3517 = vunpack.c.l.b16 %v2520
        %v3518 = vunpack.c.l.b16 %v2521
        %v3519 = vunpack.c.l.b16 %v2522
        %v3520 = vunpack.c.l.b16 %v2523
        %v3521 = vunpack.c.l.b16 %v2524
        %v3522 = vunpack.c.l.b16 %v2525
        %v3523 = vunpack.c.l.b16 %v2526
        %v3524 = vunpack.c.l.b16 %v2527
        %v3525 = vunpack.c.l.b16 %v2528
        %v3526 = vunpack.c.l.b16 %v2529
        %v3527 = vunpack.c.l.b16 %v2530
        %v3528 = vpack.c.b16 %v3129, %v3128
        %v3529 = vpack.c.b16 %v3131, %v3130
        %v3530 = vpack.c.b16 %v3133, %v3132
        %v3531 = vpack.c.b16 %v3135, %v3134
        %v3532 = vpack.c.b16 %v3137, %v3136
        %v3533 = vpack.c.b16 %v3139, %v3138
        %v3534 = vpack.c.b16 %v3141, %v3140
        %v3535 = vpack.c.b16 %v3143, %v3142
        %v3536 = vpack.c.b16 %v3145, %v3144
        %v3537 = vpack.c.b16 %v3147, %v3146
        %v3538 = vpack.c.b16 %v3149, %v3148
        %v3539 = vpack.c.b16 %v3151, %v3150
        %v3540 = vpack.c.b16 %v3153, %v3152
        %v3541 = vpack.c.b16 %v3155, %v3154
        %v3542 = vpack.c.b16 %v3157, %v3156
        %v3543 = vpack.c.b16 %v3159, %v3158
        %v3544 = vpack.c.b16 %v3161, %v3160
        %v3545 = vpack.c.b16 %v3163, %v3162
        %v3546 = vpack.c.b16 %v3165, %v3164
        %v3547 = vpack.c.b16 %v3167, %v3166
        %v3548 = vpack.c.b16 %v3169, %v3168
        %v3549 = vpack.c.b16 %v3171, %v3170
        %v3550 = vpack.c.b16 %v3173, %v3172
        %v3551 = vpack.c.b16 %v3175, %v3174
        %v3552 = vpack.c.b16 %v3177, %v3176
        %v3553 = vpack.c.b16 %v3179, %v3178
        %v3554 = vpack.c.b16 %v3181, %v3180
        %v3555 = vpack.c.b16 %v3183, %v3182
        %v3556 = vpack.c.b16 %v3185, %v3184
        %v3557 = vpack.c.b16 %v3187, %v3186
        %v3558 = vpack.c.b16 %v3189, %v3188
        %v3559 = vpack.c.b16 %v3191, %v3190
        %v3560 = vpack.c.b16 %v3193, %v3192
        %v3561 = vpack.c.b16 %v3195, %v3194
        %v3562 = vpack.c.b16 %v3197, %v3196
        %v3563 = vpack.c.b16 %v3199, %v3198
        %v3564 = vpack.c.b16 %v3201, %v3200
        %v3565 = vpack.c.b16 %v3203, %v3202
        %v3566 = vpack.c.b16 %v3205, %v3204
        %v3567 = vpack.c.b16 %v3207, %v3206
        %v3568 = vpack.c.b16 %v3209, %v3208
        %v3569 = vpack.c.b16 %v3211, %v3210
        %v3570 = vpack.c.b16 %v3213, %v3212
        %v3571 = vpack.c.b16 %v3215, %v3214
        %v3572 = vpack.c.b16 %v3217, %v3216
        %v3573 = vpack.c.b16 %v3219, %v3218
        %v3574 = vpack.c.b16 %v3221, %v3220
        %v3575 = vpack.c.b16 %v3223, %v3222
        %v3576 = vpack.c.b16 %v3225, %v3224
        %v3577 = vpack.c.b16 %v3227, %v3226
        %v3578 = vpack.c.b16 %v3229, %v3228
        %v3579 = vpack.c.b16 %v3231, %v3230
        %v3580 = vpack.c.b16 %v3233, %v3232
        %v3581 = vpack.c.b16 %v3235, %v3234
        %v3582 = vpack.c.b16 %v3237, %v3236
        %v3583 = vpack.c.b16 %v3239, %v3238
        %v3584 = vpack.c.b16 %v3241, %v3240
        %v3585 = vpack.c.b16 %v3243, %v3242
        %v3586 = vpack.c.b16 %v3245, %v3244
        %v3587 = vpack.c.b16 %v3247, %v3246
        %v3588 = vpack.c.b16 %v3249, %v3248
        %v3589 = vpack.c.b16 %v3251, %v3250
        %v3590 = vpack.c.b16 %v3253, %v3252
        %v3591 = vpack.c.b16 %v3255, %v3254
        %v3592 = vpack.c.b16 %v3257, %v3256
        %v3593 = vpack.c.b16 %v3259, %v3258
        %v3594 = vpack.c.b16 %v3261, %v3260
        %v3595 = vpack.c.b16 %v3263, %v3262
        %v3596 = vpack.c.b16 %v3265, %v3264
        %v3597 = vpack.c.b16 %v3267, %v3266
        %v3598 = vpack.c.b16 %v3269, %v3268
        %v3599 = vpack.c.b16 %v3271, %v3270
        %v3600 = vpack.c.b16 %v3273, %v3272
        %v3601 = vpack.c.b16 %v3275, %v3274
        %v3602 = vpack.c.b16 %v3277, %v3276
        %v3603 = vpack.c.b16 %v3279, %v3278
        %v3604 = vpack.c.b16 %v3281, %v3280
        %v3605 = vpack.c.b16 %v3283, %v3282
        %v3606 = vpack.c.b16 %v3285, %v3284
        %v3607 = vpack.c.b16 %v3287, %v3286
        %v3608 = vpack.c.b16 %v3289, %v3288
        %v3609 = vpack.c.b16 %v3291, %v3290
        %v3610 = vpack.c.b16 %v3293, %v3292
        %v3611 = vpack.c.b16 %v3295, %v3294
        %v3612 = vpack.c.b16 %v3297, %v3296
        %v3613 = vpack.c.b16 %v3299, %v3298
        %v3614 = vpack.c.b16 %v3301, %v3300
        %v3615 = vpack.c.b16 %v3303, %v3302
        %v3616 = vpack.c.b16 %v3305, %v3304
        %v3617 = vpack.c.b16 %v3307, %v3306
        %v3618 = vpack.c.b16 %v3309, %v3308
        %v3619 = vpack.c.b16 %v3311, %v3310
        %v3620 = vpack.c.b16 %v3313, %v3312
        %v3621 = vpack.c.b16 %v3315, %v3314
        %v3622 = vpack.c.b16 %v3317, %v3316
        %v3623 = vpack.c.b16 %v3319, %v3318
        %v3624 = vpack.c.b16 %v3321, %v3320
        %v3625 = vpack.c.b16 %v3323, %v3322
        %v3626 = vpack.c.b16 %v3325, %v3324
        %v3627 = vpack.c.b16 %v3327, %v3326
        %v3628 = vpack.c.b16 %v3329, %v3328
        %v3629 = vpack.c.b16 %v3331, %v3330
        %v3630 = vpack.c.b16 %v3333, %v3332
        %v3631 = vpack.c.b16 %v3335, %v3334
        %v3632 = vpack.c.b16 %v3337, %v3336
        %v3633 = vpack.c.b16 %v3339, %v3338
        %v3634 = vpack.c.b16 %v3341, %v3340
        %v3635 = vpack.c.b16 %v3343, %v3342
        %v3636 = vpack.c.b16 %v3345, %v3344
        %v3637 = vpack.c.b16 %v3347, %v3346
        %v3638 = vpack.c.b16 %v3349, %v3348
        %v3639 = vpack.c.b16 %v3351, %v3350
        %v3640 = vpack.c.b16 %v3353, %v3352
        %v3641 = vpack.c.b16 %v3355, %v3354
        %v3642 = vpack.c.b16 %v3357, %v3356
        %v3643 = vpack.c.b16 %v3359, %v3358
        %v3644 = vpack.c.b16 %v3361, %v3360
        %v3645 = vpack.c.b16 %v3363, %v3362
        %v3646 = vpack.c.b16 %v3365, %v3364
        %v3647 = vpack.c.b16 %v3367, %v3366
        %v3648 = vpack.c.b16 %v3369, %v3368
        %v3649 = vpack.c.b16 %v3371, %v3370
        %v3650 = vpack.c.b16 %v3373, %v3372
        %v3651 = vpack.c.b16 %v3375, %v3374
        %v3652 = vpack.c.b16 %v3377, %v3376
        %v3653 = vpack.c.b16 %v3379, %v3378
        %v3654 = vpack.c.b16 %v3381, %v3380
        %v3655 = vpack.c.b16 %v3383, %v3382
        %v3656 = vpack.c.b16 %v3385, %v3384
        %v3657 = vpack.c.b16 %v3387, %v3386
        %v3658 = vpack.c.b16 %v3389, %v3388
        %v3659 = vpack.c.b16 %v3391, %v3390
        %v3660 = vpack.c.b16 %v3393, %v3392
        %v3661 = vpack.c.b16 %v3395, %v3394
        %v3662 = vpack.c.b16 %v3397, %v3396
        %v3663 = vpack.c.b16 %v3399, %v3398
        %v3664 = vpack.c.b16 %v3401, %v3400
        %v3665 = vpack.c.b16 %v3403, %v3402
        %v3666 = vpack.c.b16 %v3405, %v3404
        %v3667 = vpack.c.b16 %v3407, %v3406
        %v3668 = vpack.c.b16 %v3409, %v3408
        %v3669 = vpack.c.b16 %v3411, %v3410
        %v3670 = vpack.c.b16 %v3413, %v3412
        %v3671 = vpack.c.b16 %v3415, %v3414
        %v3672 = vpack.c.b16 %v3417, %v3416
        %v3673 = vpack.c.b16 %v3419, %v3418
        %v3674 = vpack.c.b16 %v3421, %v3420
        %v3675 = vpack.c.b16 %v3423, %v3422
        %v3676 = vpack.c.b16 %v3425, %v3424
        %v3677 = vpack.c.b16 %v3427, %v3426
        %v3678 = vpack.c.b16 %v3429, %v3428
        %v3679 = vpack.c.b16 %v3431, %v3430
        %v3680 = vpack.c.b16 %v3433, %v3432
        %v3681 = vpack.c.b16 %v3435, %v3434
        %v3682 = vpack.c.b16 %v3437, %v3436
        %v3683 = vpack.c.b16 %v3439, %v3438
        %v3684 = vpack.c.b16 %v3441, %v3440
        %v3685 = vpack.c.b16 %v3443, %v3442
        %v3686 = vpack.c.b16 %v3445, %v3444
        %v3687 = vpack.c.b16 %v3447, %v3446
        %v3688 = vpack.c.b16 %v3449, %v3448
        %v3689 = vpack.c.b16 %v3451, %v3450
        %v3690 = vpack.c.b16 %v3453, %v3452
        %v3691 = vpack.c.b16 %v3455, %v3454
        %v3692 = vpack.c.b16 %v3457, %v3456
        %v3693 = vpack.c.b16 %v3459, %v3458
        %v3694 = vpack.c.b16 %v3461, %v3460
        %v3695 = vpack.c.b16 %v3463, %v3462
        %v3696 = vpack.c.b16 %v3465, %v3464
        %v3697 = vpack.c.b16 %v3467, %v3466
        %v3698 = vpack.c.b16 %v3469, %v3468
        %v3699 = vpack.c.b16 %v3471, %v3470
        %v3700 = vpack.c.b16 %v3473, %v3472
        %v3701 = vpack.c.b16 %v3475, %v3474
        %v3702 = vpack.c.b16 %v3477, %v3476
        %v3703 = vpack.c.b16 %v3479, %v3478
        %v3704 = vpack.c.b16 %v3481, %v3480
        %v3705 = vpack.c.b16 %v3483, %v3482
        %v3706 = vpack.c.b16 %v3485, %v3484
        %v3707 = vpack.c.b16 %v3487, %v3486
        %v3708 = vpack.c.b16 %v3489, %v3488
        %v3709 = vpack.c.b16 %v3491, %v3490
        %v3710 = vpack.c.b16 %v3493, %v3492
        %v3711 = vpack.c.b16 %v3495, %v3494
        %v3712 = vpack.c.b16 %v3497, %v3496
        %v3713 = vpack.c.b16 %v3499, %v3498
        %v3714 = vpack.c.b16 %v3501, %v3500
        %v3715 = vpack.c.b16 %v3503, %v3502
        %v3716 = vpack.c.b16 %v3505, %v3504
        %v3717 = vpack.c.b16 %v3507, %v3506
        %v3718 = vpack.c.b16 %v3509, %v3508
        %v3719 = vpack.c.b16 %v3511, %v3510
        %v3720 = vpack.c.b16 %v3513, %v3512
        %v3721 = vpack.c.b16 %v3515, %v3514
        %v3722 = vpack.c.b16 %v3517, %v3516
        %v3723 = vpack.c.b16 %v3519, %v3518
        %v3724 = vpack.c.b16 %v3521, %v3520
        %v3725 = vpack.c.b16 %v3523, %v3522
        %v3726 = vpack.c.b16 %v3525, %v3524
        %v3727 = vpack.c.b16 %v3527, %v3526
        %3928 = vmatprep.subr.bf16.mxu0 0
        %3929 = vmatpush1.bf16.msra.mxu0 %v3528
        %3930 = vmatprep.subr.bf16.mxu0 0
        %3931 = vmatpush1.bf16.msra.mxu0 %v3529
        %3932 = vmatprep.subr.bf16.mxu0 0
        %3933 = vmatpush1.bf16.msra.mxu0 %v3530
        %3934 = vmatprep.subr.bf16.mxu0 0
        %3935 = vmatpush1.bf16.msra.mxu0 %v3531
        %3936 = vmatprep.subr.bf16.mxu0 0
        %3937 = vmatpush1.bf16.msra.mxu0 %v3532
        %3938 = vmatprep.subr.bf16.mxu0 0
        %3939 = vmatpush1.bf16.msra.mxu0 %v3533
        %3940 = vmatprep.subr.bf16.mxu0 0
        %3941 = vmatpush1.bf16.msra.mxu0 %v3534
        %3942 = vmatprep.subr.bf16.mxu0 0
        %3943 = vmatpush1.bf16.msra.mxu0 %v3535
        %3944 = vmatprep.subr.bf16.mxu0 0
        %3945 = vmatpush1.bf16.msra.mxu0 %v3536
        %3946 = vmatprep.subr.bf16.mxu0 0
        %3947 = vmatpush1.bf16.msra.mxu0 %v3537
        %3948 = vmatprep.subr.bf16.mxu0 0
        %3949 = vmatpush1.bf16.msra.mxu0 %v3538
        %3950 = vmatprep.subr.bf16.mxu0 0
        %3951 = vmatpush1.bf16.msra.mxu0 %v3539
        %3952 = vmatprep.subr.bf16.mxu0 0
        %3953 = vmatpush1.bf16.msra.mxu0 %v3540
        %3954 = vmatprep.subr.bf16.mxu0 0
        %3955 = vmatpush1.bf16.msra.mxu0 %v3541
        %3956 = vmatprep.subr.bf16.mxu0 0
        %3957 = vmatpush1.bf16.msra.mxu0 %v3542
        %3958 = vmatprep.subr.bf16.mxu0 0
        %3959 = vmatpush1.bf16.msra.mxu0 %v3543
        %3960 = vmatprep.mubr.bf16.mxu0 %v2579
        %3961 = vmatmul.mubr.bf16.gmra.mrb[0].mxu0 %v2565
        %v3962 = vpop.f32.mrb[0].mxu0
        %v3963 = vadd.f32 %v2536, %v3962
        %v3964 = vpop.f32.mrb[0].mxu0
        %v3965 = vpop.f32.mrb[0].mxu0
        %v3966 = vpop.f32.mrb[0].mxu0
        %3967 = vdwg.mxu0
        %3968 = vmatprep.subr.bf16.mxu0 0
        %3969 = vmatpush1.bf16.msra.mxu0 %v3544
        %3970 = vmatprep.subr.bf16.mxu0 0
        %3971 = vmatpush1.bf16.msra.mxu0 %v3545
        %3972 = vmatprep.subr.bf16.mxu0 0
        %3973 = vmatpush1.bf16.msra.mxu0 %v3546
        %3974 = vmatprep.subr.bf16.mxu0 0
        %3975 = vmatpush1.bf16.msra.mxu0 %v3547
        %3976 = vmatprep.subr.bf16.mxu0 0
        %3977 = vmatpush1.bf16.msra.mxu0 %v3548
        %3978 = vmatprep.subr.bf16.mxu0 0
        %3979 = vmatpush1.bf16.msra.mxu0 %v3549
        %3980 = vmatprep.subr.bf16.mxu0 0
        %3981 = vmatpush1.bf16.msra.mxu0 %v3550
        %3982 = vmatprep.subr.bf16.mxu0 0
        %3983 = vmatpush1.bf16.msra.mxu0 %v3551
        %3984 = vmatprep.subr.bf16.mxu0 0
        %3985 = vmatpush1.bf16.msra.mxu0 %v3552
        %3986 = vmatprep.subr.bf16.mxu0 0
        %3987 = vmatpush1.bf16.msra.mxu0 %v3553
        %3988 = vmatprep.subr.bf16.mxu0 0
        %3989 = vmatpush1.bf16.msra.mxu0 %v3554
        %3990 = vmatprep.subr.bf16.mxu0 0
        %3991 = vmatpush1.bf16.msra.mxu0 %v3555
        %3992 = vmatprep.subr.bf16.mxu0 0
        %3993 = vmatpush1.bf16.msra.mxu0 %v3556
        %3994 = vmatprep.subr.bf16.mxu0 0
        %3995 = vmatpush1.bf16.msra.mxu0 %v3557
        %3996 = vmatprep.subr.bf16.mxu0 0
        %3997 = vmatpush1.bf16.msra.mxu0 %v3558
        %3998 = vmatprep.subr.bf16.mxu0 0
        %3999 = vmatpush1.bf16.msra.mxu0 %v3559
        %4000 = vmatprep.mubr.bf16.mxu0 %v2589
        %4001 = vmatmul.mubr.bf16.gmra.mrb[0].mxu0 %v2587
        %v4002 = vpop.f32.mrb[0].mxu0
        %v4003 = vadd.f32 %v3963, %v4002
        %v4004 = vpop.f32.mrb[0].mxu0
        %v4005 = vpop.f32.mrb[0].mxu0
        %v4006 = vpop.f32.mrb[0].mxu0
        %4007 = vdwg.mxu0
        %4008 = vmatprep.subr.bf16.mxu0 0
        %4009 = vmatpush1.bf16.msra.mxu0 %v3560
        %4010 = vmatprep.subr.bf16.mxu0 0
        %4011 = vmatpush1.bf16.msra.mxu0 %v3561
        %4012 = vmatprep.subr.bf16.mxu0 0
        %4013 = vmatpush1.bf16.msra.mxu0 %v3562
        %4014 = vmatprep.subr.bf16.mxu0 0
        %4015 = vmatpush1.bf16.msra.mxu0 %v3563
        %4016 = vmatprep.subr.bf16.mxu0 0
        %4017 = vmatpush1.bf16.msra.mxu0 %v3564
        %4018 = vmatprep.subr.bf16.mxu0 0
        %4019 = vmatpush1.bf16.msra.mxu0 %v3565
        %4020 = vmatprep.subr.bf16.mxu0 0
        %4021 = vmatpush1.bf16.msra.mxu0 %v3566
        %4022 = vmatprep.subr.bf16.mxu0 0
        %4023 = vmatpush1.bf16.msra.mxu0 %v3567
        %4024 = vmatprep.subr.bf16.mxu0 0
        %4025 = vmatpush1.bf16.msra.mxu0 %v3568
        %4026 = vmatprep.subr.bf16.mxu0 0
        %4027 = vmatpush1.bf16.msra.mxu0 %v3569
        %4028 = vmatprep.subr.bf16.mxu0 0
        %4029 = vmatpush1.bf16.msra.mxu0 %v3570
        %4030 = vmatprep.subr.bf16.mxu0 0
        %4031 = vmatpush1.bf16.msra.mxu0 %v3571
        %4032 = vmatprep.subr.bf16.mxu0 0
        %4033 = vmatpush1.bf16.msra.mxu0 %v3572
        %4034 = vmatprep.subr.bf16.mxu0 0
        %4035 = vmatpush1.bf16.msra.mxu0 %v3573
        %4036 = vmatprep.subr.bf16.mxu0 0
        %4037 = vmatpush1.bf16.msra.mxu0 %v3574
        %4038 = vmatprep.subr.bf16.mxu0 0
        %4039 = vmatpush1.bf16.msra.mxu0 %v3575
        %4040 = vmatprep.mubr.bf16.mxu0 %v2586
        %4041 = vmatmul.mubr.bf16.gmra.mrb[0].mxu0 %v2572
        %v4042 = vpop.f32.mrb[0].mxu0
        %v4043 = vadd.f32 %v4003, %v4042
        %v4044 = vpop.f32.mrb[0].mxu0
        %v4045 = vpop.f32.mrb[0].mxu0
        %v4046 = vpop.f32.mrb[0].mxu0
        %4047 = vdwg.mxu0
        %4048 = vmatprep.subr.bf16.mxu0 0
        %4049 = vmatpush1.bf16.msra.mxu0 %v3576
        %4050 = vmatprep.subr.bf16.mxu0 0
        %4051 = vmatpush1.bf16.msra.mxu0 %v3577
        %4052 = vmatprep.subr.bf16.mxu0 0
        %4053 = vmatpush1.bf16.msra.mxu0 %v3578
        %4054 = vmatprep.subr.bf16.mxu0 0
        %4055 = vmatpush1.bf16.msra.mxu0 %v3579
        %4056 = vmatprep.subr.bf16.mxu0 0
        %4057 = vmatpush1.bf16.msra.mxu0 %v3580
        %4058 = vmatprep.subr.bf16.mxu0 0
        %4059 = vmatpush1.bf16.msra.mxu0 %v3581
        %4060 = vmatprep.subr.bf16.mxu0 0
        %4061 = vmatpush1.bf16.msra.mxu0 %v3582
        %4062 = vmatprep.subr.bf16.mxu0 0
        %4063 = vmatpush1.bf16.msra.mxu0 %v3583
        %4064 = vmatprep.subr.bf16.mxu0 0
        %4065 = vmatpush1.bf16.msra.mxu0 %v3584
        %4066 = vmatprep.subr.bf16.mxu0 0
        %4067 = vmatpush1.bf16.msra.mxu0 %v3585
        %4068 = vmatprep.subr.bf16.mxu0 0
        %4069 = vmatpush1.bf16.msra.mxu0 %v3586
        %4070 = vmatprep.subr.bf16.mxu0 0
        %4071 = vmatpush1.bf16.msra.mxu0 %v3587
        %4072 = vmatprep.subr.bf16.mxu0 0
        %4073 = vmatpush1.bf16.msra.mxu0 %v3588
        %4074 = vmatprep.subr.bf16.mxu0 0
        %4075 = vmatpush1.bf16.msra.mxu0 %v3589
        %4076 = vmatprep.subr.bf16.mxu0 0
        %4077 = vmatpush1.bf16.msra.mxu0 %v3590
        %4078 = vmatprep.subr.bf16.mxu0 0
        %4079 = vmatpush1.bf16.msra.mxu0 %v3591
        %4080 = vmatprep.mubr.bf16.mxu0 %v2590
        %4081 = vmatmul.mubr.bf16.gmra.mrb[0].mxu0 %v2588
        %v4082 = vpop.f32.mrb[0].mxu0
        %v4083 = vadd.f32 %v4043, %v4082
        %v4084 = vpop.f32.mrb[0].mxu0
        %v4085 = vpop.f32.mrb[0].mxu0
        %v4086 = vpop.f32.mrb[0].mxu0
        %4087 = vdwg.mxu0
        %4088 = vmatprep.subr.bf16.mxu0 0
        %4089 = vmatpush1.bf16.msra.mxu0 %v3592
        %4090 = vmatprep.subr.bf16.mxu0 0
        %4091 = vmatpush1.bf16.msra.mxu0 %v3593
        %4092 = vmatprep.subr.bf16.mxu0 0
        %4093 = vmatpush1.bf16.msra.mxu0 %v3594
        %4094 = vmatprep.subr.bf16.mxu0 0
        %4095 = vmatpush1.bf16.msra.mxu0 %v3595
        %4096 = vmatprep.subr.bf16.mxu0 0
        %4097 = vmatpush1.bf16.msra.mxu0 %v3596
        %4098 = vmatprep.subr.bf16.mxu0 0
        %4099 = vmatpush1.bf16.msra.mxu0 %v3597
        %4100 = vmatprep.subr.bf16.mxu0 0
        %4101 = vmatpush1.bf16.msra.mxu0 %v3598
        %4102 = vmatprep.subr.bf16.mxu0 0
        %4103 = vmatpush1.bf16.msra.mxu0 %v3599
        %4104 = vmatprep.subr.bf16.mxu0 0
        %4105 = vmatpush1.bf16.msra.mxu0 %v3600
        %4106 = vmatprep.subr.bf16.mxu0 0
        %4107 = vmatpush1.bf16.msra.mxu0 %v3601
        %4108 = vmatprep.subr.bf16.mxu0 0
        %4109 = vmatpush1.bf16.msra.mxu0 %v3602
        %4110 = vmatprep.subr.bf16.mxu0 0
        %4111 = vmatpush1.bf16.msra.mxu0 %v3603
        %4112 = vmatprep.subr.bf16.mxu0 0
        %4113 = vmatpush1.bf16.msra.mxu0 %v3604
        %4114 = vmatprep.subr.bf16.mxu0 0
        %4115 = vmatpush1.bf16.msra.mxu0 %v3605
        %4116 = vmatprep.subr.bf16.mxu0 0
        %4117 = vmatpush1.bf16.msra.mxu0 %v3606
        %4118 = vmatprep.subr.bf16.mxu0 0
        %4119 = vmatpush1.bf16.msra.mxu0 %v3607
        %4120 = vmatprep.mubr.bf16.mxu0 %v2628
        %4121 = vmatmul.mubr.bf16.gmra.mrb[0].mxu0 %v2614
        %v4122 = vpop.f32.mrb[0].mxu0
        %v4123 = vadd.f32 %v4083, %v4122
        %v4124 = vpop.f32.mrb[0].mxu0
        %v4125 = vpop.f32.mrb[0].mxu0
        %v4126 = vpop.f32.mrb[0].mxu0
        %4127 = vdwg.mxu0
        %4128 = vmatprep.subr.bf16.mxu0 0
        %4129 = vmatpush1.bf16.msra.mxu0 %v3608
        %4130 = vmatprep.subr.bf16.mxu0 0
        %4131 = vmatpush1.bf16.msra.mxu0 %v3609
        %4132 = vmatprep.subr.bf16.mxu0 0
        %4133 = vmatpush1.bf16.msra.mxu0 %v3610
        %4134 = vmatprep.subr.bf16.mxu0 0
        %4135 = vmatpush1.bf16.msra.mxu0 %v3611
        %4136 = vmatprep.subr.bf16.mxu0 0
        %4137 = vmatpush1.bf16.msra.mxu0 %v3612
        %4138 = vmatprep.subr.bf16.mxu0 0
        %4139 = vmatpush1.bf16.msra.mxu0 %v3613
        %4140 = vmatprep.subr.bf16.mxu0 0
        %4141 = vmatpush1.bf16.msra.mxu0 %v3614
        %4142 = vmatprep.subr.bf16.mxu0 0
        %4143 = vmatpush1.bf16.msra.mxu0 %v3615
        %4144 = vmatprep.subr.bf16.mxu0 0
        %4145 = vmatpush1.bf16.msra.mxu0 %v3616
        %4146 = vmatprep.subr.bf16.mxu0 0
        %4147 = vmatpush1.bf16.msra.mxu0 %v3617
        %4148 = vmatprep.subr.bf16.mxu0 0
        %4149 = vmatpush1.bf16.msra.mxu0 %v3618
        %4150 = vmatprep.subr.bf16.mxu0 0
        %4151 = vmatpush1.bf16.msra.mxu0 %v3619
        %4152 = vmatprep.subr.bf16.mxu0 0
        %4153 = vmatpush1.bf16.msra.mxu0 %v3620
        %4154 = vmatprep.subr.bf16.mxu0 0
        %4155 = vmatpush1.bf16.msra.mxu0 %v3621
        %4156 = vmatprep.subr.bf16.mxu0 0
        %4157 = vmatpush1.bf16.msra.mxu0 %v3622
        %4158 = vmatprep.subr.bf16.mxu0 0
        %4159 = vmatpush1.bf16.msra.mxu0 %v3623
        %4160 = vmatprep.mubr.bf16.mxu0 %v2638
        %4161 = vmatmul.mubr.bf16.gmra.mrb[0].mxu0 %v2636
        %v4162 = vpop.f32.mrb[0].mxu0
        %v4163 = vadd.f32 %v4123, %v4162
        %v4164 = vpop.f32.mrb[0].mxu0
        %v4165 = vpop.f32.mrb[0].mxu0
        %v4166 = vpop.f32.mrb[0].mxu0
        %4167 = vdwg.mxu0
        %4168 = vmatprep.subr.bf16.mxu0 0
        %4169 = vmatpush1.bf16.msra.mxu0 %v3624
        %4170 = vmatprep.subr.bf16.mxu0 0
        %4171 = vmatpush1.bf16.msra.mxu0 %v3625
        %4172 = vmatprep.subr.bf16.mxu0 0
        %4173 = vmatpush1.bf16.msra.mxu0 %v3626
        %4174 = vmatprep.subr.bf16.mxu0 0
        %4175 = vmatpush1.bf16.msra.mxu0 %v3627
        %4176 = vmatprep.subr.bf16.mxu0 0
        %4177 = vmatpush1.bf16.msra.mxu0 %v3628
        %4178 = vmatprep.subr.bf16.mxu0 0
        %4179 = vmatpush1.bf16.msra.mxu0 %v3629
        %4180 = vmatprep.subr.bf16.mxu0 0
        %4181 = vmatpush1.bf16.msra.mxu0 %v3630
        %4182 = vmatprep.subr.bf16.mxu0 0
        %4183 = vmatpush1.bf16.msra.mxu0 %v3631
        %4184 = vmatprep.subr.bf16.mxu0 0
        %4185 = vmatpush1.bf16.msra.mxu0 %v3632
        %4186 = vmatprep.subr.bf16.mxu0 0
        %4187 = vmatpush1.bf16.msra.mxu0 %v3633
        %4188 = vmatprep.subr.bf16.mxu0 0
        %4189 = vmatpush1.bf16.msra.mxu0 %v3634
        %4190 = vmatprep.subr.bf16.mxu0 0
        %4191 = vmatpush1.bf16.msra.mxu0 %v3635
        %4192 = vmatprep.subr.bf16.mxu0 0
        %4193 = vmatpush1.bf16.msra.mxu0 %v3636
        %4194 = vmatprep.subr.bf16.mxu0 0
        %4195 = vmatpush1.bf16.msra.mxu0 %v3637
        %4196 = vmatprep.subr.bf16.mxu0 0
        %4197 = vmatpush1.bf16.msra.mxu0 %v3638
        %4198 = vmatprep.subr.bf16.mxu0 0
        %4199 = vmatpush1.bf16.msra.mxu0 %v3639
        %4200 = vmatprep.mubr.bf16.mxu0 %v2635
        %4201 = vmatmul.mubr.bf16.gmra.mrb[0].mxu0 %v2621
        %v4202 = vpop.f32.mrb[0].mxu0
        %v4203 = vadd.f32 %v4163, %v4202
        %v4204 = vpop.f32.mrb[0].mxu0
        %v4205 = vpop.f32.mrb[0].mxu0
        %v4206 = vpop.f32.mrb[0].mxu0
        %4207 = vdwg.mxu0
        %4208 = vmatprep.subr.bf16.mxu0 0
        %4209 = vmatpush1.bf16.msra.mxu0 %v3640
        %4210 = vmatprep.subr.bf16.mxu0 0
        %4211 = vmatpush1.bf16.msra.mxu0 %v3641
        %4212 = vmatprep.subr.bf16.mxu0 0
        %4213 = vmatpush1.bf16.msra.mxu0 %v3642
        %4214 = vmatprep.subr.bf16.mxu0 0
        %4215 = vmatpush1.bf16.msra.mxu0 %v3643
        %4216 = vmatprep.subr.bf16.mxu0 0
        %4217 = vmatpush1.bf16.msra.mxu0 %v3644
        %4218 = vmatprep.subr.bf16.mxu0 0
        %4219 = vmatpush1.bf16.msra.mxu0 %v3645
        %4220 = vmatprep.subr.bf16.mxu0 0
        %4221 = vmatpush1.bf16.msra.mxu0 %v3646
        %4222 = vmatprep.subr.bf16.mxu0 0
        %4223 = vmatpush1.bf16.msra.mxu0 %v3647
        %4224 = vmatprep.subr.bf16.mxu0 0
        %4225 = vmatpush1.bf16.msra.mxu0 %v3648
        %4226 = vmatprep.subr.bf16.mxu0 0
        %4227 = vmatpush1.bf16.msra.mxu0 %v3649
        %4228 = vmatprep.subr.bf16.mxu0 0
        %4229 = vmatpush1.bf16.msra.mxu0 %v3650
        %4230 = vmatprep.subr.bf16.mxu0 0
        %4231 = vmatpush1.bf16.msra.mxu0 %v3651
        %4232 = vmatprep.subr.bf16.mxu0 0
        %4233 = vmatpush1.bf16.msra.mxu0 %v3652
        %4234 = vmatprep.subr.bf16.mxu0 0
        %4235 = vmatpush1.bf16.msra.mxu0 %v3653
        %4236 = vmatprep.subr.bf16.mxu0 0
        %4237 = vmatpush1.bf16.msra.mxu0 %v3654
        %4238 = vmatprep.subr.bf16.mxu0 0
        %4239 = vmatpush1.bf16.msra.mxu0 %v3655
        %4240 = vmatprep.mubr.bf16.mxu0 %v2639
        %4241 = vmatmul.mubr.bf16.gmra.mrb[0].mxu0 %v2637
        %v4242 = vpop.f32.mrb[0].mxu0
        %v4243 = vadd.f32 %v4203, %v4242
        %v4244 = vpop.f32.mrb[0].mxu0
        %v4245 = vpop.f32.mrb[0].mxu0
        %v4246 = vpop.f32.mrb[0].mxu0
        %4247 = vdwg.mxu0
        %4248 = vmatprep.subr.bf16.mxu0 0
        %4249 = vmatpush1.bf16.msra.mxu0 %v3656
        %4250 = vmatprep.subr.bf16.mxu0 0
        %4251 = vmatpush1.bf16.msra.mxu0 %v3657
        %4252 = vmatprep.subr.bf16.mxu0 0
        %4253 = vmatpush1.bf16.msra.mxu0 %v3658
        %4254 = vmatprep.subr.bf16.mxu0 0
        %4255 = vmatpush1.bf16.msra.mxu0 %v3659
        %4256 = vmatprep.subr.bf16.mxu0 0
        %4257 = vmatpush1.bf16.msra.mxu0 %v3660
        %4258 = vmatprep.subr.bf16.mxu0 0
        %4259 = vmatpush1.bf16.msra.mxu0 %v3661
        %4260 = vmatprep.subr.bf16.mxu0 0
        %4261 = vmatpush1.bf16.msra.mxu0 %v3662
        %4262 = vmatprep.subr.bf16.mxu0 0
        %4263 = vmatpush1.bf16.msra.mxu0 %v3663
        %4264 = vmatprep.subr.bf16.mxu0 0
        %4265 = vmatpush1.bf16.msra.mxu0 %v3664
        %4266 = vmatprep.subr.bf16.mxu0 0
        %4267 = vmatpush1.bf16.msra.mxu0 %v3665
        %4268 = vmatprep.subr.bf16.mxu0 0
        %4269 = vmatpush1.bf16.msra.mxu0 %v3666
        %4270 = vmatprep.subr.bf16.mxu0 0
        %4271 = vmatpush1.bf16.msra.mxu0 %v3667
        %4272 = vmatprep.subr.bf16.mxu0 0
        %4273 = vmatpush1.bf16.msra.mxu0 %v3668
        %4274 = vmatprep.subr.bf16.mxu0 0
        %4275 = vmatpush1.bf16.msra.mxu0 %v3669
        %4276 = vmatprep.subr.bf16.mxu0 0
        %4277 = vmatpush1.bf16.msra.mxu0 %v3670
        %4278 = vmatprep.subr.bf16.mxu0 0
        %4279 = vmatpush1.bf16.msra.mxu0 %v3671
        %4280 = vmatprep.mubr.bf16.mxu0 %v2677
        %4281 = vmatmul.mubr.bf16.gmra.mrb[0].mxu0 %v2663
        %v4282 = vpop.f32.mrb[0].mxu0
        %v4283 = vadd.f32 %v4243, %v4282
        %v4284 = vpop.f32.mrb[0].mxu0
        %v4285 = vpop.f32.mrb[0].mxu0
        %v4286 = vpop.f32.mrb[0].mxu0
        %4287 = vdwg.mxu0
        %4288 = vmatprep.subr.bf16.mxu0 0
        %4289 = vmatpush1.bf16.msra.mxu0 %v3672
        %4290 = vmatprep.subr.bf16.mxu0 0
        %4291 = vmatpush1.bf16.msra.mxu0 %v3673
        %4292 = vmatprep.subr.bf16.mxu0 0
        %4293 = vmatpush1.bf16.msra.mxu0 %v3674
        %4294 = vmatprep.subr.bf16.mxu0 0
        %4295 = vmatpush1.bf16.msra.mxu0 %v3675
        %4296 = vmatprep.subr.bf16.mxu0 0
        %4297 = vmatpush1.bf16.msra.mxu0 %v3676
        %4298 = vmatprep.subr.bf16.mxu0 0
        %4299 = vmatpush1.bf16.msra.mxu0 %v3677
        %4300 = vmatprep.subr.bf16.mxu0 0
        %4301 = vmatpush1.bf16.msra.mxu0 %v3678
        %4302 = vmatprep.subr.bf16.mxu0 0
        %4303 = vmatpush1.bf16.msra.mxu0 %v3679
        %4304 = vmatprep.subr.bf16.mxu0 0
        %4305 = vmatpush1.bf16.msra.mxu0 %v3680
        %4306 = vmatprep.subr.bf16.mxu0 0
        %4307 = vmatpush1.bf16.msra.mxu0 %v3681
        %4308 = vmatprep.subr.bf16.mxu0 0
        %4309 = vmatpush1.bf16.msra.mxu0 %v3682
        %4310 = vmatprep.subr.bf16.mxu0 0
        %4311 = vmatpush1.bf16.msra.mxu0 %v3683
        %4312 = vmatprep.subr.bf16.mxu0 0
        %4313 = vmatpush1.bf16.msra.mxu0 %v3684
        %4314 = vmatprep.subr.bf16.mxu0 0
        %4315 = vmatpush1.bf16.msra.mxu0 %v3685
        %4316 = vmatprep.subr.bf16.mxu0 0
        %4317 = vmatpush1.bf16.msra.mxu0 %v3686
        %4318 = vmatprep.subr.bf16.mxu0 0
        %4319 = vmatpush1.bf16.msra.mxu0 %v3687
        %4320 = vmatprep.mubr.bf16.mxu0 %v2687
        %4321 = vmatmul.mubr.bf16.gmra.mrb[0].mxu0 %v2685
        %v4322 = vpop.f32.mrb[0].mxu0
        %v4323 = vadd.f32 %v4283, %v4322
        %v4324 = vpop.f32.mrb[0].mxu0
        %v4325 = vpop.f32.mrb[0].mxu0
        %v4326 = vpop.f32.mrb[0].mxu0
        %4327 = vdwg.mxu0
        %4328 = vmatprep.subr.bf16.mxu0 0
        %4329 = vmatpush1.bf16.msra.mxu0 %v3688
        %4330 = vmatprep.subr.bf16.mxu0 0
        %4331 = vmatpush1.bf16.msra.mxu0 %v3689
        %4332 = vmatprep.subr.bf16.mxu0 0
        %4333 = vmatpush1.bf16.msra.mxu0 %v3690
        %4334 = vmatprep.subr.bf16.mxu0 0
        %4335 = vmatpush1.bf16.msra.mxu0 %v3691
        %4336 = vmatprep.subr.bf16.mxu0 0
        %4337 = vmatpush1.bf16.msra.mxu0 %v3692
        %4338 = vmatprep.subr.bf16.mxu0 0
        %4339 = vmatpush1.bf16.msra.mxu0 %v3693
        %4340 = vmatprep.subr.bf16.mxu0 0
        %4341 = vmatpush1.bf16.msra.mxu0 %v3694
        %4342 = vmatprep.subr.bf16.mxu0 0
        %4343 = vmatpush1.bf16.msra.mxu0 %v3695
        %4344 = vmatprep.subr.bf16.mxu0 0
        %4345 = vmatpush1.bf16.msra.mxu0 %v3696
        %4346 = vmatprep.subr.bf16.mxu0 0
        %4347 = vmatpush1.bf16.msra.mxu0 %v3697
        %4348 = vmatprep.subr.bf16.mxu0 0
        %4349 = vmatpush1.bf16.msra.mxu0 %v3698
        %4350 = vmatprep.subr.bf16.mxu0 0
        %4351 = vmatpush1.bf16.msra.mxu0 %v3699
        %4352 = vmatprep.subr.bf16.mxu0 0
        %4353 = vmatpush1.bf16.msra.mxu0 %v3700
        %4354 = vmatprep.subr.bf16.mxu0 0
        %4355 = vmatpush1.bf16.msra.mxu0 %v3701
        %4356 = vmatprep.subr.bf16.mxu0 0
        %4357 = vmatpush1.bf16.msra.mxu0 %v3702
        %4358 = vmatprep.subr.bf16.mxu0 0
        %4359 = vmatpush1.bf16.msra.mxu0 %v3703
        %4360 = vmatprep.mubr.bf16.mxu0 %v2684
        %4361 = vmatmul.mubr.bf16.gmra.mrb[0].mxu0 %v2670
        %v4362 = vpop.f32.mrb[0].mxu0
        %v4363 = vadd.f32 %v4323, %v4362
        %v4364 = vpop.f32.mrb[0].mxu0
        %v4365 = vpop.f32.mrb[0].mxu0
        %v4366 = vpop.f32.mrb[0].mxu0
        %4367 = vdwg.mxu0
        %4368 = vmatprep.subr.bf16.mxu0 0
        %4369 = vmatpush1.bf16.msra.mxu0 %v3704
        %4370 = vmatprep.subr.bf16.mxu0 0
        %4371 = vmatpush1.bf16.msra.mxu0 %v3705
        %4372 = vmatprep.subr.bf16.mxu0 0
        %4373 = vmatpush1.bf16.msra.mxu0 %v3706
        %4374 = vmatprep.subr.bf16.mxu0 0
        %4375 = vmatpush1.bf16.msra.mxu0 %v3707
        %4376 = vmatprep.subr.bf16.mxu0 0
        %4377 = vmatpush1.bf16.msra.mxu0 %v3708
        %4378 = vmatprep.subr.bf16.mxu0 0
        %4379 = vmatpush1.bf16.msra.mxu0 %v3709
        %4380 = vmatprep.subr.bf16.mxu0 0
        %4381 = vmatpush1.bf16.msra.mxu0 %v3710
        %4382 = vmatprep.subr.bf16.mxu0 0
        %4383 = vmatpush1.bf16.msra.mxu0 %v3711
        %4384 = vmatprep.subr.bf16.mxu0 0
        %4385 = vmatpush1.bf16.msra.mxu0 %v3712
        %4386 = vmatprep.subr.bf16.mxu0 0
        %4387 = vmatpush1.bf16.msra.mxu0 %v3713
        %4388 = vmatprep.subr.bf16.mxu0 0
        %4389 = vmatpush1.bf16.msra.mxu0 %v3714
        %4390 = vmatprep.subr.bf16.mxu0 0
        %4391 = vmatpush1.bf16.msra.mxu0 %v3715
        %4392 = vmatprep.subr.bf16.mxu0 0
        %4393 = vmatpush1.bf16.msra.mxu0 %v3716
        %4394 = vmatprep.subr.bf16.mxu0 0
        %4395 = vmatpush1.bf16.msra.mxu0 %v3717
        %4396 = vmatprep.subr.bf16.mxu0 0
        %4397 = vmatpush1.bf16.msra.mxu0 %v3718
        %4398 = vmatprep.subr.bf16.mxu0 0
        %4399 = vmatpush1.bf16.msra.mxu0 %v3719
        %4400 = vmatprep.mubr.bf16.mxu0 %v2688
        %4401 = vmatmul.mubr.bf16.gmra.mrb[0].mxu0 %v2686
        %v4402 = vpop.f32.mrb[0].mxu0
        %v4403 = vadd.f32 %v4363, %v4402
        %v4404 = vpop.f32.mrb[0].mxu0
        %v4405 = vpop.f32.mrb[0].mxu0
        %v4406 = vpop.f32.mrb[0].mxu0
        %4407 = vdwg.mxu0
        %4408 = vmatprep.subr.bf16.mxu0 0
        %4409 = vmatpush1.bf16.msra.mxu0 %v3720
        %4410 = vmatprep.subr.bf16.mxu0 0
        %4411 = vmatpush1.bf16.msra.mxu0 %v3721
        %4412 = vmatprep.subr.bf16.mxu0 0
        %4413 = vmatpush1.bf16.msra.mxu0 %v3722
        %4414 = vmatprep.subr.bf16.mxu0 0
        %4415 = vmatpush1.bf16.msra.mxu0 %v3723
        %4416 = vmatprep.subr.bf16.mxu0 0
        %4417 = vmatpush1.bf16.msra.mxu0 %v3724
        %4418 = vmatprep.subr.bf16.mxu0 0
        %4419 = vmatpush1.bf16.msra.mxu0 %v3725
        %4420 = vmatprep.subr.bf16.mxu0 0
        %4421 = vmatpush1.bf16.msra.mxu0 %v3726
        %4422 = vmatprep.subr.bf16.mxu0 0
        %4423 = vmatpush1.bf16.msra.mxu0 %v3727
        %4424 = vmatprep.subr.bf16.mxu0 0
        %4425 = vmatpush1.bf16.msra.mxu0 0
        %4426 = vmatprep.subr.bf16.mxu0 0
        %4427 = vmatpush1.bf16.msra.mxu0 0
        %4428 = vmatprep.subr.bf16.mxu0 0
        %4429 = vmatpush1.bf16.msra.mxu0 0
        %4430 = vmatprep.subr.bf16.mxu0 0
        %4431 = vmatpush1.bf16.msra.mxu0 0
        %4432 = vmatprep.subr.bf16.mxu0 0
        %4433 = vmatpush1.bf16.msra.mxu0 0
        %4434 = vmatprep.subr.bf16.mxu0 0
        %4435 = vmatpush1.bf16.msra.mxu0 0
        %4436 = vmatprep.subr.bf16.mxu0 0
        %4437 = vmatpush1.bf16.msra.mxu0 0
        %4438 = vmatprep.subr.bf16.mxu0 0
        %4439 = vmatpush1.bf16.msra.mxu0 0
        %4440 = vmatprep.mubr.bf16.mxu0 0
        %4441 = vmatmul.mubr.bf16.gmra.mrb[0].mxu0 %v2702
        %v4442 = vpop.f32.mrb[0].mxu0
        %v4443 = vadd.f32 %v4403, %v4442
        %v4444 = vpop.f32.mrb[0].mxu0
        %v4445 = vpop.f32.mrb[0].mxu0
        %v4446 = vpop.f32.mrb[0].mxu0
        %4447 = vdwg.mxu0
        %v4448 = vmax.f32 %v4443, 0.0
        %v4449 = vpack.c.bf16 %v4448, %v4448
        %v4450 = vld [vmem:[%s349] sm:$0xf]
        %v4451 = vld [vmem:[%s349 + $0x4] sm:$0xf]
        %v4452 = vld [vmem:[%s349 + $0x8] sm:$0xf]
        %v4453 = vld [vmem:[%s349 + $0xc] sm:$0xf]
        %v4454 = vld [vmem:[%s349 + $0x10] sm:$0xf]
        %v4455 = vld [vmem:[%s349 + $0x14] sm:$0xf]
        %v4456 = vld [vmem:[%s349 + $0x18] sm:$0xf]
        %v4457 = vld [vmem:[%s349 + $0x1c] sm:$0xf]
        %v4458 = vld [vmem:[%s349 + $0x20] sm:$0xf]
        %v4459 = vld [vmem:[%s349 + $0x24] sm:$0xf]
        %v4460 = vld [vmem:[%s349 + $0x28] sm:$0xf]
        %v4461 = vld [vmem:[%s349 + $0x2c] sm:$0xf]
        %v4462 = vld [vmem:[%s349 + $0x30] sm:$0xf]
        %v4463 = vld [vmem:[%s349 + $0x34] sm:$0xf]
        %v4464 = vld [vmem:[%s349 + $0x38] sm:$0xf]
        %v4465 = vld [vmem:[%s349 + $0x3c] sm:$0xf]
        %v4482 = vunpack.c.l.b16 %v4450
        %v4483 = vunpack.c.l.b16 %v4451
        %v4484 = vunpack.c.l.b16 %v4452
        %v4485 = vunpack.c.l.b16 %v4453
        %v4486 = vunpack.c.l.b16 %v4454
        %v4487 = vunpack.c.l.b16 %v4455
        %v4488 = vunpack.c.l.b16 %v4456
        %v4489 = vunpack.c.l.b16 %v4457
        %v4490 = vunpack.c.l.b16 %v4458
        %v4491 = vunpack.c.l.b16 %v4459
        %v4492 = vunpack.c.l.b16 %v4460
        %v4493 = vunpack.c.l.b16 %v4461
        %v4494 = vunpack.c.l.b16 %v4462
        %v4495 = vunpack.c.l.b16 %v4463
        %v4496 = vunpack.c.l.b16 %v4464
        %v4497 = vunpack.c.l.b16 %v4465
        %v4498 = vpack.c.b16 %v4483, %v4482
        %v4499 = vpack.c.b16 %v4485, %v4484
        %v4500 = vpack.c.b16 %v4487, %v4486
        %v4501 = vpack.c.b16 %v4489, %v4488
        %v4502 = vpack.c.b16 %v4491, %v4490
        %v4503 = vpack.c.b16 %v4493, %v4492
        %v4504 = vpack.c.b16 %v4495, %v4494
        %v4505 = vpack.c.b16 %v4497, %v4496
        %4514 = vmatprep.subr.bf16.mxu0 0
        %4515 = vmatpush1.bf16.msra.mxu0 %v4498
        %4516 = vmatprep.subr.bf16.mxu0 0
        %4517 = vmatpush1.bf16.msra.mxu0 %v4499
        %4518 = vmatprep.subr.bf16.mxu0 0
        %4519 = vmatpush1.bf16.msra.mxu0 %v4500
        %4520 = vmatprep.subr.bf16.mxu0 0
        %4521 = vmatpush1.bf16.msra.mxu0 %v4501
        %4522 = vmatprep.subr.bf16.mxu0 0
        %4523 = vmatpush1.bf16.msra.mxu0 %v4502
        %4524 = vmatprep.subr.bf16.mxu0 0
        %4525 = vmatpush1.bf16.msra.mxu0 %v4503
        %4526 = vmatprep.subr.bf16.mxu0 0
        %4527 = vmatpush1.bf16.msra.mxu0 %v4504
        %4528 = vmatprep.subr.bf16.mxu0 0
        %4529 = vmatpush1.bf16.msra.mxu0 %v4505
        %4530 = vmatprep.subr.bf16.mxu0 0
        %4531 = vmatpush1.bf16.msra.mxu0 0
        %4532 = vmatprep.subr.bf16.mxu0 0
        %4533 = vmatpush1.bf16.msra.mxu0 0
        %4534 = vmatprep.subr.bf16.mxu0 0
        %4535 = vmatpush1.bf16.msra.mxu0 0
        %4536 = vmatprep.subr.bf16.mxu0 0
        %4537 = vmatpush1.bf16.msra.mxu0 0
        %4538 = vmatprep.subr.bf16.mxu0 0
        %4539 = vmatpush1.bf16.msra.mxu0 0
        %4540 = vmatprep.subr.bf16.mxu0 0
        %4541 = vmatpush1.bf16.msra.mxu0 0
        %4542 = vmatprep.subr.bf16.mxu0 0
        %4543 = vmatpush1.bf16.msra.mxu0 0
        %4544 = vmatprep.subr.bf16.mxu0 0
        %4545 = vmatpush1.bf16.msra.mxu0 0
        %4546 = vmatprep.mubr.bf16.mxu0 0
        %4547 = vmatmul.mubr.bf16.gmra.mrb[0].mxu0 %v4449
        %v4548 = vpop.f32.mrb[0].mxu0
        %v4549 = vadd.f32 0.0, %v4548
        %v4550 = vpop.f32.mrb[0].mxu0
        %v4551 = vpop.f32.mrb[0].mxu0
        %v4552 = vpop.f32.mrb[0].mxu0
        %4553 = vdwg.mxu0
        // Predicated region
        $region69: #{inception_aux_forward.1} parent=43 // pred_check
          %p4554 = pneg %p398
        $region70: #{inception_aux_forward.1} parent=43 // pred_check_branch
          %4556 = sbr.rel (%p4554) target = $region72
        $region71: #{inception_aux_forward.1} parent=43 // pred_region
          %4557 = vst [vmem:[%s396] sm:$0x3] 0.0
        $region72: #{inception_aux_forward.1} parent=43 // pred_fallthru
          _
        %v4558 = vld [vmem:[%s396] sm:$0x3]
        %v4559 = vadd.f32 %v4558, %v4549
        %4560 = vst [vmem:[%s396] sm:$0x3] %v4559
        %p4561 = scmp.lt.s32.totalorder %s23, 1
        %s4562 = scalar_select %p4561, %s23, 1
        %s4563 = smul.addr %s4562, 2
        %s4564 = scalar_lea.vmem %s6, %s4563
        // Predicated region
        $region73: #{inception_aux_forward.1} parent=43 // pred_check
          %p4565 = pneg %p202
        $region74: #{inception_aux_forward.1} parent=43 // pred_check_branch
          %4567 = sbr.rel (%p4565) target = $region76
        $region75: #{inception_aux_forward.1} parent=43 // pred_region
          _
        $region76: #{inception_aux_forward.1} parent=43 // pred_fallthru
          _
      $region44: #{inception_aux_forward.1} parent=5 // pred_fallthru
        _
      %p4568 = scmp.le.s32.totalorder 2, %s14
      // Predicated region
      $region77: #{inception_aux_forward.1} parent=5 // pred_check
        %p4569 = pneg %p4568
      $region78: #{inception_aux_forward.1} parent=5 // pred_check_branch
        %4571 = sbr.rel (%p4569) target = $region80
      $region79: #{inception_aux_forward.1} parent=5 // pred_region
        %s4572 = ssub.s32 %s14, 2
        // Predicated region
        $region81: #{inception_aux_forward.1} parent=79 // pred_check
          %p4573 = pneg %p208
        $region82: #{inception_aux_forward.1} parent=79 // pred_check_branch
          %4575 = sbr.rel (%p4573) target = $region84
        $region83: #{inception_aux_forward.1} parent=79 // pred_region
          %p4576 = scmp.lt.s32.totalorder %s25, 1
          %s4577 = scalar_select %p4576, %s25, 1
          %s4578 = smul.addr %s4577, 2
          %s4579 = scalar_lea.vmem %s6, %s4578
        $region84: #{inception_aux_forward.1} parent=79 // pred_fallthru
          _
      $region80: #{inception_aux_forward.1} parent=5 // pred_fallthru
        _
    $region6: #{inception_aux_forward.1} parent=1 // loop_footer
      %s18 = sadd.s32 1, %s14
    $region7: #{inception_aux_forward.1} parent=1 // loop_footer_branch
      %13 = sbr.rel target = $region3
    $region8: #{inception_aux_forward.1} parent=1 // loop_exit
      _
    %4580 = vsyncpa [#allocation6], 1
    %s4581 = scalar_lea.sflag [#allocation6], 1
    %4582 = vsyncpa %s4581, 1
    %4583 = vsyncpa [#allocation8], 1

</llo_original>
